<compile_context>
chip_gen: v7x
topology: tpu7x:2x2x1
jax: 0.10.0
libtpu: 0.0.40
codegen_flags: <defaults>
</compile_context>

<pallas_src>
import functools

import jax
import jax.numpy as jnp
from jax.experimental import pallas as pl
from jax.experimental.pallas import tpu as pltpu


def _layernorm(v, g, b, eps=1e-5):
    mu = jnp.mean(v, axis=-1, keepdims=True)
    var = jnp.mean((v - mu) ** 2, axis=-1, keepdims=True)
    return (v - mu) * jax.lax.rsqrt(var + eps) * g + b


def _erf(x):
    # Abramowitz & Stegun 7.1.26, max abs error 1.5e-7 — numerically indistinguishable
    # from exact erf at bf16-operand matmul precision; avoids relying on an erf
    # primitive lowering inside Mosaic.
    a1, a2, a3, a4, a5 = 0.254829592, -0.284496736, 1.421413741, -1.453152027, 1.061405429
    p = 0.3275911
    ax = jnp.abs(x)
    t = 1.0 / (1.0 + p * ax)
    poly = ((((a5 * t + a4) * t + a3) * t + a2) * t + a1) * t
    y = 1.0 - poly * jnp.exp(-ax * ax)
    return jnp.where(x >= 0.0, y, -y)


def _gelu_exact(x):
    # nn.GELU() default (exact erf form): 0.5 * x * (1 + erf(x / sqrt(2)))
    return 0.5 * x * (1.0 + _erf(x * 0.7071067811865476))


def block_kernel(num_heads, head_dim,
                 x_ref, g1_ref, b1_ref,
                 wqkv_ref, bqkv_ref, wp_ref, bp_ref,
                 g2_ref, b2_ref, wu_ref, bu_ref, wd_ref, bd_ref,
                 o_ref):
    bblk, T, H = x_ref.shape
    M = bblk * T
    hd = head_dim

    # ---- fuse batch rows into the matmul M dimension ----
    x = x_ref[...].reshape(M, H)                               # (M, H) f32
    xn = _layernorm(x, g1_ref[...], b1_ref[...])
    xn_b = xn.astype(jnp.bfloat16)                             # MXU operand

    scale = jnp.float32(1.0 / (head_dim ** 0.5))

    # ---- ONE fused QKV matmul: (M, H) @ (H, 3H), bf16 operands, f32 accumulation.
    # Scale is folded into q; the mask fill constant is scaled identically below,
    # matching PyTorch's masked_fill(-1e10) followed by /sqrt(head_dim).
    qkv = jnp.dot(xn_b, wqkv_ref[...],
                  preferred_element_type=jnp.float32) + bqkv_ref[...]     # (M, 3H) f32
    # single bf16 cast per tensor (no separate f32 q/k/v copies kept alive)
    q3 = (qkv[:, 0 * H:1 * H] * scale).astype(jnp.bfloat16).reshape(bblk, T, H)
    k3 = qkv[:, 1 * H:2 * H].astype(jnp.bfloat16).reshape(bblk, T, H)
    v3 = qkv[:, 2 * H:3 * H].astype(jnp.bfloat16).reshape(bblk, T, H)

    # causal mask == torch.tril(ones(T, T)), hoisted out of the head loop
    row = jax.lax.broadcasted_iota(jnp.int32, (T, T), 0)
    col = jax.lax.broadcasted_iota(jnp.int32, (T, T), 1)
    causal = row >= col
    fill = jnp.float32(-1e10) * scale

    # ---- attention: per-head scores/softmax/context (3-D einsums batched over the
    # fused batch elements); bf16 contexts are reassembled into one (M, H) slab so
    # the output projection is a single K=H MXU contraction.
    ctx_heads = []
    for h in range(num_heads):
        sl = slice(h * hd, (h + 1) * hd)
        qh, kh, vh = q3[:, :, sl], k3[:, :, sl], v3[:, :, sl]            # (bblk,T,hd) bf16
        s = jnp.einsum('bqd,bkd->bqk', qh, kh,
                       preferred_element_type=jnp.float32)               # (bblk,T,T) f32
        s = jnp.where(causal, s, fill)
        # manual softmax in f32; divide goes to the EUP via approx reciprocal
        m = jnp.max(s, axis=-1, keepdims=True)
        e = jnp.exp(s - m)
        p = e * pl.reciprocal(jnp.sum(e, axis=-1, keepdims=True), approx=True)
        # attention dropout: identity (eval mode)
        ctx_heads.append(
            jnp.einsum('bqk,bkd->bqd', p.astype(jnp.bfloat16), vh,
                       preferred_element_type=jnp.float32).astype(jnp.bfloat16))
    ctx = jnp.concatenate(ctx_heads, axis=-1).reshape(M, H)              # (M, H) bf16

    attn = jnp.dot(ctx, wp_ref[...], preferred_element_type=jnp.float32) + bp_ref[...]
    x1 = x + attn                                              # residual 1 (dropout = identity)

    # ---- LayerNorm2 + FFN (f32 elementwise, bf16 MXU operands) ----
    xn2 = _layernorm(x1, g2_ref[...], b2_ref[...])
    h_up = jnp.dot(xn2.astype(jnp.bfloat16), wu_ref[...],
                   preferred_element_type=jnp.float32) + bu_ref[...]
    h_act = _gelu_exact(h_up)                                  # exact-erf GELU (poly erf)
    ffn = jnp.dot(h_act.astype(jnp.bfloat16), wd_ref[...],
                  preferred_element_type=jnp.float32) + bd_ref[...]

    o_ref[...] = (x1 + ffn).reshape(bblk, T, H).astype(o_ref.dtype)      # residual 2


def _pick_batch_block(B, T, row_cap=256, min_steps=4):
    """Largest divisor of B whose fused row count (d*T) fits the VMEM-derived cap,
    preferring >= min_steps grid steps (v7x: 2 TensorCores x double buffering)."""
    divisors = [d for d in range(1, B + 1) if B % d == 0]
    fit = [d for d in divisors if d * T <= row_cap] or [1]
    pref = [d for d in fit if B // d >= min_steps]
    return max(pref) if pref else max(fit)


def gpt_block(x, params, num_heads, head_dim, batch_block=None):
    B, T, H = x.shape
    assert num_heads * head_dim == H

    if batch_block is None:
        batch_block = _pick_batch_block(B, T)
    assert B % batch_block == 0
    grid = (B // batch_block,)

    # Pack Q/K/V weights/biases once: (H, 3H) / (1, 3H) for a single fused matmul.
    wqkv = jnp.concatenate([params["wq"], params["wk"], params["wv"]], axis=1)
    bqkv = jnp.concatenate([params["bq"], params["bk"], params["bv"]], axis=1)

    weight_args = [
        params["g1"], params["b1"],
        wqkv, bqkv, params["wp"], params["bp"],
        params["g2"], params["b2"],
        params["wu"], params["bu"], params["wd"], params["bd"],
    ]

    def const_spec(shape):
        # Grid-invariant weights/biases: constant index map, so Pallas does not
        # re-DMA them between grid steps.
        nd = len(shape)
        return pl.BlockSpec(shape, lambda i, _nd=nd: (0,) * _nd)

    in_specs = [pl.BlockSpec((batch_block, T, H), lambda i: (i, 0, 0))]
    in_specs += [const_spec(a.shape) for a in weight_args]

    kern = functools.partial(block_kernel, num_heads, head_dim)

    return pl.pallas_call(
        kern,
        out_shape=jax.ShapeDtypeStruct((B, T, H), x.dtype),
        grid=grid,
        in_specs=in_specs,
        out_specs=pl.BlockSpec((batch_block, T, H), lambda i: (i, 0, 0)),
        compiler_params=pltpu.CompilerParams(
            dimension_semantics=("parallel",),
            # 64 MiB: within v7x physical VMEM, generous headroom on v5e/v6e (128 MiB).
            vmem_limit_bytes=64 * 1024 * 1024,
        ),
    )(x, *weight_args)


def reference_block(x, p, num_heads, head_dim):
    """Pure-JAX reference mirroring the PyTorch forward (eval-mode dropout) with the
    same bf16-operand / f32-accumulate matmul numerics as the kernel."""
    bf16 = jnp.bfloat16

    def ln(v, g, b):
        mu = v.mean(-1, keepdims=True)
        var = ((v - mu) ** 2).mean(-1, keepdims=True)
        return (v - mu) / jnp.sqrt(var + 1e-5) * g + b

    B, T, H = x.shape
    scale = 1.0 / (head_dim ** 0.5)
    xn = ln(x, p["g1"], p["b1"]).astype(bf16)
    q = ((jnp.einsum('bth,hk->btk', xn, p["wq"], preferred_element_type=jnp.float32)
          + p["bq"]) * scale).astype(bf16)
    k = (jnp.einsum('bth,hk->btk', xn, p["wk"], preferred_element_type=jnp.float32)
         + p["bk"]).astype(bf16)
    v = (jnp.einsum('bth,hk->btk', xn, p["wv"], preferred_element_type=jnp.float32)
         + p["bv"]).astype(bf16)
    mask = jnp.tril(jnp.ones((T, T), dtype=bool))
    outs = []
    for h in range(num_heads):
        sl = slice(h * head_dim, (h + 1) * head_dim)
        s = jnp.einsum('bqd,bkd->bqk', q[..., sl], k[..., sl],
                       preferred_element_type=jnp.float32)
        # PyTorch order is masked_fill(-1e10) then /sqrt(hd); the scale is folded
        # into q above, so the fill constant is scaled identically.
        s = jnp.where(mask, s, jnp.float32(-1e10) * scale)
        patt = jax.nn.softmax(s, axis=-1).astype(bf16)
        outs.append(jnp.einsum('bqk,bkd->bqd', patt, v[..., sl],
                               preferred_element_type=jnp.float32))
    concat = jnp.concatenate(outs, axis=-1).astype(bf16)
    attn = jnp.einsum('btd,dk->btk', concat, p["wp"],
                      preferred_element_type=jnp.float32) + p["bp"]
    x1 = x + attn
    xn2 = ln(x1, p["g2"], p["b2"]).astype(bf16)
    h_up = jnp.einsum('bth,hf->btf', xn2, p["wu"],
                      preferred_element_type=jnp.float32) + p["bu"]
    h_act = jax.nn.gelu(h_up, approximate=False).astype(bf16)   # nn.GELU() default = exact erf
    ffn = jnp.einsum('btf,fh->bth', h_act, p["wd"],
                     preferred_element_type=jnp.float32) + p["bd"]
    return x1 + ffn


def make_params(key, H, F):
    ks = jax.random.split(key, 8)
    w = lambda k, shape: (0.02 * jax.random.normal(k, shape)).astype(jnp.bfloat16)  # MXU operands
    bias = lambda k, shape: (0.02 * jax.random.normal(k, shape)).astype(jnp.float32)
    return {
        "g1": jnp.ones((1, H), jnp.float32),  "b1": jnp.zeros((1, H), jnp.float32),
        "wq": w(ks[0], (H, H)), "bq": bias(ks[1], (1, H)),
        "wk": w(ks[2], (H, H)), "bk": bias(ks[3], (1, H)),
        "wv": w(ks[4], (H, H)), "bv": bias(ks[5], (1, H)),
        "wp": w(ks[6], (H, H)), "bp": jnp.zeros((1, H), jnp.float32),
        "g2": jnp.ones((1, H), jnp.float32),  "b2": jnp.zeros((1, H), jnp.float32),
        "wu": w(ks[7], (H, F)), "bu": jnp.zeros((1, F), jnp.float32),
        "wd": w(jax.random.fold_in(key, 99), (F, H)), "bd": jnp.zeros((1, H), jnp.float32),
    }


if __name__ == "__main__":
    # small config: batch=16, seq=16, hidden=128, heads=4 -> head_dim=32, ffn=512
    # -> batch_block=4, grid=(4,) (>=2 steps per v7x TensorCore), fused M=64 rows/step.
    B, T, H, HEADS = 16, 16, 128, 4
    HEAD_DIM = H // HEADS
    FFN_DIM = 4 * H

    key = jax.random.PRNGKey(0)
    kx, kp = jax.random.split(key)
    x = jax.random.normal(kx, (B, T, H), dtype=jnp.float32)
    params = make_params(kp, H, FFN_DIM)

    out = gpt_block(x, params, HEADS, HEAD_DIM)
    out = jax.block_until_ready(out)

    ref = reference_block(x, params, HEADS, HEAD_DIM)
    assert out.shape == (B, T, H)
    max_err = jnp.max(jnp.abs(out - ref))
    assert jnp.allclose(out, ref, atol=2e-3, rtol=2e-3), f"mismatch vs reference (max |err|={max_err})"
    print("KERNEL_OK")
</pallas_src>

<mosaic_0001>
module attributes {stable_mosaic.version = 11 : i64} {
  func.func @block_kernel(%arg0: i32, %arg1: memref<4x16x128xf32, #tpu.memory_space<vmem>>, %arg2: memref<1x128xf32, #tpu.memory_space<vmem>>, %arg3: memref<1x128xf32, #tpu.memory_space<vmem>>, %arg4: memref<128x384xbf16, #tpu.memory_space<vmem>>, %arg5: memref<1x384xf32, #tpu.memory_space<vmem>>, %arg6: memref<128x128xbf16, #tpu.memory_space<vmem>>, %arg7: memref<1x128xf32, #tpu.memory_space<vmem>>, %arg8: memref<1x128xf32, #tpu.memory_space<vmem>>, %arg9: memref<1x128xf32, #tpu.memory_space<vmem>>, %arg10: memref<128x512xbf16, #tpu.memory_space<vmem>>, %arg11: memref<1x512xf32, #tpu.memory_space<vmem>>, %arg12: memref<512x128xbf16, #tpu.memory_space<vmem>>, %arg13: memref<1x128xf32, #tpu.memory_space<vmem>>, %arg14: memref<4x16x128xf32, #tpu.memory_space<vmem>>) attributes {dimension_semantics = [#tpu.dimension_semantics<parallel>], iteration_bounds = array<i64: 4>, scalar_prefetch = 0 : i64, scratch_operands = 0 : i64, tpu.core_type = #tpu.core_type<tc>, window_params = [{transform_indices = @transform_0, window_bounds = array<i64: 4, 16, 128>}, {pipeline_mode = #tpu.pipeline_mode<synchronous>, transform_indices = @transform_1, window_bounds = array<i64: 1, 128>}, {pipeline_mode = #tpu.pipeline_mode<synchronous>, transform_indices = @transform_2, window_bounds = array<i64: 1, 128>}, {pipeline_mode = #tpu.pipeline_mode<synchronous>, transform_indices = @transform_3, window_bounds = array<i64: 128, 384>}, {pipeline_mode = #tpu.pipeline_mode<synchronous>, transform_indices = @transform_4, window_bounds = array<i64: 1, 384>}, {pipeline_mode = #tpu.pipeline_mode<synchronous>, transform_indices = @transform_5, window_bounds = array<i64: 128, 128>}, {pipeline_mode = #tpu.pipeline_mode<synchronous>, transform_indices = @transform_6, window_bounds = array<i64: 1, 128>}, {pipeline_mode = #tpu.pipeline_mode<synchronous>, transform_indices = @transform_7, window_bounds = array<i64: 1, 128>}, {pipeline_mode = #tpu.pipeline_mode<synchronous>, transform_indices = @transform_8, window_bounds = array<i64: 1, 128>}, {pipeline_mode = #tpu.pipeline_mode<synchronous>, transform_indices = @transform_9, window_bounds = array<i64: 128, 512>}, {pipeline_mode = #tpu.pipeline_mode<synchronous>, transform_indices = @transform_10, window_bounds = array<i64: 1, 512>}, {pipeline_mode = #tpu.pipeline_mode<synchronous>, transform_indices = @transform_11, window_bounds = array<i64: 512, 128>}, {pipeline_mode = #tpu.pipeline_mode<synchronous>, transform_indices = @transform_12, window_bounds = array<i64: 1, 128>}, {transform_indices = @transform_13, window_bounds = array<i64: 4, 16, 128>}]} {
    %c0 = arith.constant 0 : index
    %c0_0 = arith.constant 0 : index
    %c0_1 = arith.constant 0 : index
    %0 = vector.load %arg1[%c0, %c0_0, %c0_1] : memref<4x16x128xf32, #tpu.memory_space<vmem>>, vector<4x16x128xf32>
    %1 = vector.shape_cast %0 : vector<4x16x128xf32> to vector<64x128xf32>
    %c0_2 = arith.constant 0 : index
    %c0_3 = arith.constant 0 : index
    %2 = vector.load %arg2[%c0_2, %c0_3] : memref<1x128xf32, #tpu.memory_space<vmem>>, vector<1x128xf32>
    %c0_4 = arith.constant 0 : index
    %c0_5 = arith.constant 0 : index
    %3 = vector.load %arg3[%c0_4, %c0_5] : memref<1x128xf32, #tpu.memory_space<vmem>>, vector<1x128xf32>
    %cst = arith.constant dense<0.000000e+00> : vector<64xf32>
    %4 = vector.multi_reduction <add>, %1, %cst [1] : vector<64x128xf32> to vector<64xf32>
    %5 = vector.shape_cast %4 : vector<64xf32> to vector<64x1xf32>
    %cst_6 = arith.constant 1.280000e+02 : f32
    %6 = vector.broadcast %cst_6 : f32 to vector<64x1xf32>
    %7 = arith.divf %5, %6 : vector<64x1xf32>
    %8 = vector.broadcast %7 : vector<64x1xf32> to vector<64x128xf32>
    %9 = arith.subf %1, %8 : vector<64x128xf32>
    %10 = arith.mulf %9, %9 : vector<64x128xf32>
    %cst_7 = arith.constant dense<0.000000e+00> : vector<64xf32>
    %11 = vector.multi_reduction <add>, %10, %cst_7 [1] : vector<64x128xf32> to vector<64xf32>
    %12 = vector.shape_cast %11 : vector<64xf32> to vector<64x1xf32>
    %cst_8 = arith.constant 1.280000e+02 : f32
    %13 = vector.broadcast %cst_8 : f32 to vector<64x1xf32>
    %14 = arith.divf %12, %13 : vector<64x1xf32>
    %15 = vector.broadcast %7 : vector<64x1xf32> to vector<64x128xf32>
    %16 = arith.subf %1, %15 : vector<64x128xf32>
    %cst_9 = arith.constant 9.99999974E-6 : f32
    %17 = vector.broadcast %cst_9 : f32 to vector<64x1xf32>
    %18 = arith.addf %14, %17 : vector<64x1xf32>
    %19 = math.rsqrt %18 : vector<64x1xf32>
    %20 = vector.broadcast %19 : vector<64x1xf32> to vector<64x128xf32>
    %21 = arith.mulf %16, %20 : vector<64x128xf32>
    %22 = vector.broadcast %2 : vector<1x128xf32> to vector<64x128xf32>
    %23 = arith.mulf %21, %22 : vector<64x128xf32>
    %24 = vector.broadcast %3 : vector<1x128xf32> to vector<64x128xf32>
    %25 = arith.addf %23, %24 : vector<64x128xf32>
    %26 = arith.truncf %25 : vector<64x128xf32> to vector<64x128xbf16>
    %c0_10 = arith.constant 0 : index
    %c0_11 = arith.constant 0 : index
    %27 = vector.load %arg4[%c0_10, %c0_11] : memref<128x384xbf16, #tpu.memory_space<vmem>>, vector<128x384xbf16>
    %cst_12 = arith.constant dense<0.000000e+00> : vector<64x384xf32>
    %28 = tpu.matmul %26, %27, %cst_12 {dimension_numbers = #tpu.dot_dimension_numbers<[1], [0], [0], [1], [0, 0, 1, 1], [], []>} : vector<64x128xbf16>, vector<128x384xbf16>, vector<64x384xf32> -> vector<64x384xf32>
    %c0_13 = arith.constant 0 : index
    %c0_14 = arith.constant 0 : index
    %29 = vector.load %arg5[%c0_13, %c0_14] : memref<1x384xf32, #tpu.memory_space<vmem>>, vector<1x384xf32>
    %30 = vector.broadcast %29 : vector<1x384xf32> to vector<64x384xf32>
    %31 = arith.addf %28, %30 : vector<64x384xf32>
    %32 = vector.extract_strided_slice %31 {offsets = [0, 0], sizes = [64, 128], strides = [1, 1]} : vector<64x384xf32> to vector<64x128xf32>
    %cst_15 = arith.constant 0.176776692 : f32
    %33 = vector.broadcast %cst_15 : f32 to vector<64x128xf32>
    %34 = arith.mulf %32, %33 : vector<64x128xf32>
    %35 = arith.truncf %34 : vector<64x128xf32> to vector<64x128xbf16>
    %36 = vector.shape_cast %35 : vector<64x128xbf16> to vector<4x16x128xbf16>
    %37 = vector.extract_strided_slice %31 {offsets = [0, 128], sizes = [64, 128], strides = [1, 1]} : vector<64x384xf32> to vector<64x128xf32>
    %38 = arith.truncf %37 : vector<64x128xf32> to vector<64x128xbf16>
    %39 = vector.shape_cast %38 : vector<64x128xbf16> to vector<4x16x128xbf16>
    %40 = vector.extract_strided_slice %31 {offsets = [0, 256], sizes = [64, 128], strides = [1, 1]} : vector<64x384xf32> to vector<64x128xf32>
    %41 = arith.truncf %40 : vector<64x128xf32> to vector<64x128xbf16>
    %42 = vector.shape_cast %41 : vector<64x128xbf16> to vector<4x16x128xbf16>
    %43 = tpu.iota {dimensions = array<i32: 0>} : vector<16x16xi32>
    %44 = tpu.iota {dimensions = array<i32: 1>} : vector<16x16xi32>
    %45 = arith.cmpi sge, %43, %44 : vector<16x16xi32>
    %cst_16 = arith.constant -1.000000e+10 : f32
    %cst_17 = arith.constant 0.176776692 : f32
    %46 = arith.mulf %cst_16, %cst_17 : f32
    %47 = vector.extract_strided_slice %36 {offsets = [0, 0, 0], sizes = [4, 16, 32], strides = [1, 1, 1]} : vector<4x16x128xbf16> to vector<4x16x32xbf16>
    %48 = vector.extract_strided_slice %39 {offsets = [0, 0, 0], sizes = [4, 16, 32], strides = [1, 1, 1]} : vector<4x16x128xbf16> to vector<4x16x32xbf16>
    %49 = vector.extract_strided_slice %42 {offsets = [0, 0, 0], sizes = [4, 16, 32], strides = [1, 1, 1]} : vector<4x16x128xbf16> to vector<4x16x32xbf16>
    "tpu.trace_start"() <{level = 10 : i32, message = "bqd,bkd->bqk"}> : () -> ()
    %cst_18 = arith.constant dense<0.000000e+00> : vector<4x16x16xf32>
    %50 = tpu.matmul %47, %48, %cst_18 {dimension_numbers = #tpu.dot_dimension_numbers<[2], [2], [1], [1], [0, 0, 0, 1, 1, 1], [0], [0]>} : vector<4x16x32xbf16>, vector<4x16x32xbf16>, vector<4x16x16xf32> -> vector<4x16x16xf32>
    "tpu.trace_stop"() : () -> ()
    %51 = vector.shape_cast %45 : vector<16x16xi1> to vector<1x16x16xi1>
    %52 = vector.broadcast %51 : vector<1x16x16xi1> to vector<4x16x16xi1>
    %53 = vector.broadcast %46 : f32 to vector<4x16x16xf32>
    %54 = arith.select %52, %50, %53 : vector<4x16x16xi1>, vector<4x16x16xf32>
    %cst_19 = arith.constant dense<0xFF800000> : vector<4x16xf32>
    %55 = vector.multi_reduction <maximumf>, %54, %cst_19 [2] : vector<4x16x16xf32> to vector<4x16xf32>
    %56 = vector.shape_cast %55 : vector<4x16xf32> to vector<4x16x1xf32>
    %57 = vector.broadcast %56 : vector<4x16x1xf32> to vector<4x16x16xf32>
    %58 = arith.subf %54, %57 : vector<4x16x16xf32>
    %59 = math.exp %58 : vector<4x16x16xf32>
    %cst_20 = arith.constant dense<0.000000e+00> : vector<4x16xf32>
    %60 = vector.multi_reduction <add>, %59, %cst_20 [2] : vector<4x16x16xf32> to vector<4x16xf32>
    %61 = vector.shape_cast %60 : vector<4x16xf32> to vector<4x16x1xf32>
    %62 = tpu.reciprocal %61 {approx = true} : vector<4x16x1xf32> -> vector<4x16x1xf32>
    %63 = vector.broadcast %62 : vector<4x16x1xf32> to vector<4x16x16xf32>
    %64 = arith.mulf %59, %63 : vector<4x16x16xf32>
    %65 = arith.truncf %64 : vector<4x16x16xf32> to vector<4x16x16xbf16>
    "tpu.trace_start"() <{level = 10 : i32, message = "bqk,bkd->bqd"}> : () -> ()
    %cst_21 = arith.constant dense<0.000000e+00> : vector<4x16x32xf32>
    %66 = tpu.matmul %65, %49, %cst_21 {dimension_numbers = #tpu.dot_dimension_numbers<[2], [1], [1], [2], [0, 0, 0, 1, 1, 2], [0], [0]>} : vector<4x16x16xbf16>, vector<4x16x32xbf16>, vector<4x16x32xf32> -> vector<4x16x32xf32>
    "tpu.trace_stop"() : () -> ()
    %67 = arith.truncf %66 : vector<4x16x32xf32> to vector<4x16x32xbf16>
    %68 = vector.extract_strided_slice %36 {offsets = [0, 0, 32], sizes = [4, 16, 32], strides = [1, 1, 1]} : vector<4x16x128xbf16> to vector<4x16x32xbf16>
    %69 = vector.extract_strided_slice %39 {offsets = [0, 0, 32], sizes = [4, 16, 32], strides = [1, 1, 1]} : vector<4x16x128xbf16> to vector<4x16x32xbf16>
    %70 = vector.extract_strided_slice %42 {offsets = [0, 0, 32], sizes = [4, 16, 32], strides = [1, 1, 1]} : vector<4x16x128xbf16> to vector<4x16x32xbf16>
    "tpu.trace_start"() <{level = 10 : i32, message = "bqd,bkd->bqk"}> : () -> ()
    %cst_22 = arith.constant dense<0.000000e+00> : vector<4x16x16xf32>
    %71 = tpu.matmul %68, %69, %cst_22 {dimension_numbers = #tpu.dot_dimension_numbers<[2], [2], [1], [1], [0, 0, 0, 1, 1, 1], [0], [0]>} : vector<4x16x32xbf16>, vector<4x16x32xbf16>, vector<4x16x16xf32> -> vector<4x16x16xf32>
    "tpu.trace_stop"() : () -> ()
    %72 = vector.shape_cast %45 : vector<16x16xi1> to vector<1x16x16xi1>
    %73 = vector.broadcast %72 : vector<1x16x16xi1> to vector<4x16x16xi1>
    %74 = vector.broadcast %46 : f32 to vector<4x16x16xf32>
    %75 = arith.select %73, %71, %74 : vector<4x16x16xi1>, vector<4x16x16xf32>
    %cst_23 = arith.constant dense<0xFF800000> : vector<4x16xf32>
    %76 = vector.multi_reduction <maximumf>, %75, %cst_23 [2] : vector<4x16x16xf32> to vector<4x16xf32>
    %77 = vector.shape_cast %76 : vector<4x16xf32> to vector<4x16x1xf32>
    %78 = vector.broadcast %77 : vector<4x16x1xf32> to vector<4x16x16xf32>
    %79 = arith.subf %75, %78 : vector<4x16x16xf32>
    %80 = math.exp %79 : vector<4x16x16xf32>
    %cst_24 = arith.constant dense<0.000000e+00> : vector<4x16xf32>
    %81 = vector.multi_reduction <add>, %80, %cst_24 [2] : vector<4x16x16xf32> to vector<4x16xf32>
    %82 = vector.shape_cast %81 : vector<4x16xf32> to vector<4x16x1xf32>
    %83 = tpu.reciprocal %82 {approx = true} : vector<4x16x1xf32> -> vector<4x16x1xf32>
    %84 = vector.broadcast %83 : vector<4x16x1xf32> to vector<4x16x16xf32>
    %85 = arith.mulf %80, %84 : vector<4x16x16xf32>
    %86 = arith.truncf %85 : vector<4x16x16xf32> to vector<4x16x16xbf16>
    "tpu.trace_start"() <{level = 10 : i32, message = "bqk,bkd->bqd"}> : () -> ()
    %cst_25 = arith.constant dense<0.000000e+00> : vector<4x16x32xf32>
    %87 = tpu.matmul %86, %70, %cst_25 {dimension_numbers = #tpu.dot_dimension_numbers<[2], [1], [1], [2], [0, 0, 0, 1, 1, 2], [0], [0]>} : vector<4x16x16xbf16>, vector<4x16x32xbf16>, vector<4x16x32xf32> -> vector<4x16x32xf32>
    "tpu.trace_stop"() : () -> ()
    %88 = arith.truncf %87 : vector<4x16x32xf32> to vector<4x16x32xbf16>
    %89 = vector.extract_strided_slice %36 {offsets = [0, 0, 64], sizes = [4, 16, 32], strides = [1, 1, 1]} : vector<4x16x128xbf16> to vector<4x16x32xbf16>
    %90 = vector.extract_strided_slice %39 {offsets = [0, 0, 64], sizes = [4, 16, 32], strides = [1, 1, 1]} : vector<4x16x128xbf16> to vector<4x16x32xbf16>
    %91 = vector.extract_strided_slice %42 {offsets = [0, 0, 64], sizes = [4, 16, 32], strides = [1, 1, 1]} : vector<4x16x128xbf16> to vector<4x16x32xbf16>
    "tpu.trace_start"() <{level = 10 : i32, message = "bqd,bkd->bqk"}> : () -> ()
    %cst_26 = arith.constant dense<0.000000e+00> : vector<4x16x16xf32>
    %92 = tpu.matmul %89, %90, %cst_26 {dimension_numbers = #tpu.dot_dimension_numbers<[2], [2], [1], [1], [0, 0, 0, 1, 1, 1], [0], [0]>} : vector<4x16x32xbf16>, vector<4x16x32xbf16>, vector<4x16x16xf32> -> vector<4x16x16xf32>
    "tpu.trace_stop"() : () -> ()
    %93 = vector.shape_cast %45 : vector<16x16xi1> to vector<1x16x16xi1>
    %94 = vector.broadcast %93 : vector<1x16x16xi1> to vector<4x16x16xi1>
    %95 = vector.broadcast %46 : f32 to vector<4x16x16xf32>
    %96 = arith.select %94, %92, %95 : vector<4x16x16xi1>, vector<4x16x16xf32>
    %cst_27 = arith.constant dense<0xFF800000> : vector<4x16xf32>
    %97 = vector.multi_reduction <maximumf>, %96, %cst_27 [2] : vector<4x16x16xf32> to vector<4x16xf32>
    %98 = vector.shape_cast %97 : vector<4x16xf32> to vector<4x16x1xf32>
    %99 = vector.broadcast %98 : vector<4x16x1xf32> to vector<4x16x16xf32>
    %100 = arith.subf %96, %99 : vector<4x16x16xf32>
    %101 = math.exp %100 : vector<4x16x16xf32>
    %cst_28 = arith.constant dense<0.000000e+00> : vector<4x16xf32>
    %102 = vector.multi_reduction <add>, %101, %cst_28 [2] : vector<4x16x16xf32> to vector<4x16xf32>
    %103 = vector.shape_cast %102 : vector<4x16xf32> to vector<4x16x1xf32>
    %104 = tpu.reciprocal %103 {approx = true} : vector<4x16x1xf32> -> vector<4x16x1xf32>
    %105 = vector.broadcast %104 : vector<4x16x1xf32> to vector<4x16x16xf32>
    %106 = arith.mulf %101, %105 : vector<4x16x16xf32>
    %107 = arith.truncf %106 : vector<4x16x16xf32> to vector<4x16x16xbf16>
    "tpu.trace_start"() <{level = 10 : i32, message = "bqk,bkd->bqd"}> : () -> ()
    %cst_29 = arith.constant dense<0.000000e+00> : vector<4x16x32xf32>
    %108 = tpu.matmul %107, %91, %cst_29 {dimension_numbers = #tpu.dot_dimension_numbers<[2], [1], [1], [2], [0, 0, 0, 1, 1, 2], [0], [0]>} : vector<4x16x16xbf16>, vector<4x16x32xbf16>, vector<4x16x32xf32> -> vector<4x16x32xf32>
    "tpu.trace_stop"() : () -> ()
    %109 = arith.truncf %108 : vector<4x16x32xf32> to vector<4x16x32xbf16>
    %110 = vector.extract_strided_slice %36 {offsets = [0, 0, 96], sizes = [4, 16, 32], strides = [1, 1, 1]} : vector<4x16x128xbf16> to vector<4x16x32xbf16>
    %111 = vector.extract_strided_slice %39 {offsets = [0, 0, 96], sizes = [4, 16, 32], strides = [1, 1, 1]} : vector<4x16x128xbf16> to vector<4x16x32xbf16>
    %112 = vector.extract_strided_slice %42 {offsets = [0, 0, 96], sizes = [4, 16, 32], strides = [1, 1, 1]} : vector<4x16x128xbf16> to vector<4x16x32xbf16>
    "tpu.trace_start"() <{level = 10 : i32, message = "bqd,bkd->bqk"}> : () -> ()
    %cst_30 = arith.constant dense<0.000000e+00> : vector<4x16x16xf32>
    %113 = tpu.matmul %110, %111, %cst_30 {dimension_numbers = #tpu.dot_dimension_numbers<[2], [2], [1], [1], [0, 0, 0, 1, 1, 1], [0], [0]>} : vector<4x16x32xbf16>, vector<4x16x32xbf16>, vector<4x16x16xf32> -> vector<4x16x16xf32>
    "tpu.trace_stop"() : () -> ()
    %114 = vector.shape_cast %45 : vector<16x16xi1> to vector<1x16x16xi1>
    %115 = vector.broadcast %114 : vector<1x16x16xi1> to vector<4x16x16xi1>
    %116 = vector.broadcast %46 : f32 to vector<4x16x16xf32>
    %117 = arith.select %115, %113, %116 : vector<4x16x16xi1>, vector<4x16x16xf32>
    %cst_31 = arith.constant dense<0xFF800000> : vector<4x16xf32>
    %118 = vector.multi_reduction <maximumf>, %117, %cst_31 [2] : vector<4x16x16xf32> to vector<4x16xf32>
    %119 = vector.shape_cast %118 : vector<4x16xf32> to vector<4x16x1xf32>
    %120 = vector.broadcast %119 : vector<4x16x1xf32> to vector<4x16x16xf32>
    %121 = arith.subf %117, %120 : vector<4x16x16xf32>
    %122 = math.exp %121 : vector<4x16x16xf32>
    %cst_32 = arith.constant dense<0.000000e+00> : vector<4x16xf32>
    %123 = vector.multi_reduction <add>, %122, %cst_32 [2] : vector<4x16x16xf32> to vector<4x16xf32>
    %124 = vector.shape_cast %123 : vector<4x16xf32> to vector<4x16x1xf32>
    %125 = tpu.reciprocal %124 {approx = true} : vector<4x16x1xf32> -> vector<4x16x1xf32>
    %126 = vector.broadcast %125 : vector<4x16x1xf32> to vector<4x16x16xf32>
    %127 = arith.mulf %122, %126 : vector<4x16x16xf32>
    %128 = arith.truncf %127 : vector<4x16x16xf32> to vector<4x16x16xbf16>
    "tpu.trace_start"() <{level = 10 : i32, message = "bqk,bkd->bqd"}> : () -> ()
    %cst_33 = arith.constant dense<0.000000e+00> : vector<4x16x32xf32>
    %129 = tpu.matmul %128, %112, %cst_33 {dimension_numbers = #tpu.dot_dimension_numbers<[2], [1], [1], [2], [0, 0, 0, 1, 1, 2], [0], [0]>} : vector<4x16x16xbf16>, vector<4x16x32xbf16>, vector<4x16x32xf32> -> vector<4x16x32xf32>
    "tpu.trace_stop"() : () -> ()
    %130 = arith.truncf %129 : vector<4x16x32xf32> to vector<4x16x32xbf16>
    %131 = tpu.concatenate %67, %88, %109, %130 in 2 : vector<4x16x32xbf16>, vector<4x16x32xbf16>, vector<4x16x32xbf16>, vector<4x16x32xbf16> -> vector<4x16x128xbf16>
    %132 = vector.shape_cast %131 : vector<4x16x128xbf16> to vector<64x128xbf16>
    %c0_34 = arith.constant 0 : index
    %c0_35 = arith.constant 0 : index
    %133 = vector.load %arg6[%c0_34, %c0_35] : memref<128x128xbf16, #tpu.memory_space<vmem>>, vector<128x128xbf16>
    %cst_36 = arith.constant dense<0.000000e+00> : vector<64x128xf32>
    %134 = tpu.matmul %132, %133, %cst_36 {dimension_numbers = #tpu.dot_dimension_numbers<[1], [0], [0], [1], [0, 0, 1, 1], [], []>} : vector<64x128xbf16>, vector<128x128xbf16>, vector<64x128xf32> -> vector<64x128xf32>
    %c0_37 = arith.constant 0 : index
    %c0_38 = arith.constant 0 : index
    %135 = vector.load %arg7[%c0_37, %c0_38] : memref<1x128xf32, #tpu.memory_space<vmem>>, vector<1x128xf32>
    %136 = vector.broadcast %135 : vector<1x128xf32> to vector<64x128xf32>
    %137 = arith.addf %134, %136 : vector<64x128xf32>
    %138 = arith.addf %1, %137 : vector<64x128xf32>
    %c0_39 = arith.constant 0 : index
    %c0_40 = arith.constant 0 : index
    %139 = vector.load %arg8[%c0_39, %c0_40] : memref<1x128xf32, #tpu.memory_space<vmem>>, vector<1x128xf32>
    %c0_41 = arith.constant 0 : index
    %c0_42 = arith.constant 0 : index
    %140 = vector.load %arg9[%c0_41, %c0_42] : memref<1x128xf32, #tpu.memory_space<vmem>>, vector<1x128xf32>
    %cst_43 = arith.constant dense<0.000000e+00> : vector<64xf32>
    %141 = vector.multi_reduction <add>, %138, %cst_43 [1] : vector<64x128xf32> to vector<64xf32>
    %142 = vector.shape_cast %141 : vector<64xf32> to vector<64x1xf32>
    %cst_44 = arith.constant 1.280000e+02 : f32
    %143 = vector.broadcast %cst_44 : f32 to vector<64x1xf32>
    %144 = arith.divf %142, %143 : vector<64x1xf32>
    %145 = vector.broadcast %144 : vector<64x1xf32> to vector<64x128xf32>
    %146 = arith.subf %138, %145 : vector<64x128xf32>
    %147 = arith.mulf %146, %146 : vector<64x128xf32>
    %cst_45 = arith.constant dense<0.000000e+00> : vector<64xf32>
    %148 = vector.multi_reduction <add>, %147, %cst_45 [1] : vector<64x128xf32> to vector<64xf32>
    %149 = vector.shape_cast %148 : vector<64xf32> to vector<64x1xf32>
    %cst_46 = arith.constant 1.280000e+02 : f32
    %150 = vector.broadcast %cst_46 : f32 to vector<64x1xf32>
    %151 = arith.divf %149, %150 : vector<64x1xf32>
    %152 = vector.broadcast %144 : vector<64x1xf32> to vector<64x128xf32>
    %153 = arith.subf %138, %152 : vector<64x128xf32>
    %cst_47 = arith.constant 9.99999974E-6 : f32
    %154 = vector.broadcast %cst_47 : f32 to vector<64x1xf32>
    %155 = arith.addf %151, %154 : vector<64x1xf32>
    %156 = math.rsqrt %155 : vector<64x1xf32>
    %157 = vector.broadcast %156 : vector<64x1xf32> to vector<64x128xf32>
    %158 = arith.mulf %153, %157 : vector<64x128xf32>
    %159 = vector.broadcast %139 : vector<1x128xf32> to vector<64x128xf32>
    %160 = arith.mulf %158, %159 : vector<64x128xf32>
    %161 = vector.broadcast %140 : vector<1x128xf32> to vector<64x128xf32>
    %162 = arith.addf %160, %161 : vector<64x128xf32>
    %163 = arith.truncf %162 : vector<64x128xf32> to vector<64x128xbf16>
    %c0_48 = arith.constant 0 : index
    %c0_49 = arith.constant 0 : index
    %164 = vector.load %arg10[%c0_48, %c0_49] : memref<128x512xbf16, #tpu.memory_space<vmem>>, vector<128x512xbf16>
    %cst_50 = arith.constant dense<0.000000e+00> : vector<64x512xf32>
    %165 = tpu.matmul %163, %164, %cst_50 {dimension_numbers = #tpu.dot_dimension_numbers<[1], [0], [0], [1], [0, 0, 1, 1], [], []>} : vector<64x128xbf16>, vector<128x512xbf16>, vector<64x512xf32> -> vector<64x512xf32>
    %c0_51 = arith.constant 0 : index
    %c0_52 = arith.constant 0 : index
    %166 = vector.load %arg11[%c0_51, %c0_52] : memref<1x512xf32, #tpu.memory_space<vmem>>, vector<1x512xf32>
    %167 = vector.broadcast %166 : vector<1x512xf32> to vector<64x512xf32>
    %168 = arith.addf %165, %167 : vector<64x512xf32>
    %cst_53 = arith.constant 5.000000e-01 : f32
    %169 = vector.broadcast %cst_53 : f32 to vector<64x512xf32>
    %170 = arith.mulf %169, %168 : vector<64x512xf32>
    %cst_54 = arith.constant 0.707106769 : f32
    %171 = vector.broadcast %cst_54 : f32 to vector<64x512xf32>
    %172 = arith.mulf %168, %171 : vector<64x512xf32>
    %173 = math.absf %172 : vector<64x512xf32>
    %cst_55 = arith.constant 0.327591091 : f32
    %174 = vector.broadcast %cst_55 : f32 to vector<64x512xf32>
    %175 = arith.mulf %174, %173 : vector<64x512xf32>
    %cst_56 = arith.constant 1.000000e+00 : f32
    %176 = vector.broadcast %cst_56 : f32 to vector<64x512xf32>
    %177 = arith.addf %176, %175 : vector<64x512xf32>
    %cst_57 = arith.constant 1.000000e+00 : f32
    %178 = vector.broadcast %cst_57 : f32 to vector<64x512xf32>
    %179 = arith.divf %178, %177 : vector<64x512xf32>
    %cst_58 = arith.constant 1.06140542 : f32
    %180 = vector.broadcast %cst_58 : f32 to vector<64x512xf32>
    %181 = arith.mulf %180, %179 : vector<64x512xf32>
    %cst_59 = arith.constant -1.45315206 : f32
    %182 = vector.broadcast %cst_59 : f32 to vector<64x512xf32>
    %183 = arith.addf %181, %182 : vector<64x512xf32>
    %184 = arith.mulf %183, %179 : vector<64x512xf32>
    %cst_60 = arith.constant 1.42141378 : f32
    %185 = vector.broadcast %cst_60 : f32 to vector<64x512xf32>
    %186 = arith.addf %184, %185 : vector<64x512xf32>
    %187 = arith.mulf %186, %179 : vector<64x512xf32>
    %cst_61 = arith.constant -0.284496725 : f32
    %188 = vector.broadcast %cst_61 : f32 to vector<64x512xf32>
    %189 = arith.addf %187, %188 : vector<64x512xf32>
    %190 = arith.mulf %189, %179 : vector<64x512xf32>
    %cst_62 = arith.constant 0.254829586 : f32
    %191 = vector.broadcast %cst_62 : f32 to vector<64x512xf32>
    %192 = arith.addf %190, %191 : vector<64x512xf32>
    %193 = arith.mulf %192, %179 : vector<64x512xf32>
    %cst_63 = arith.constant 0.000000e+00 : f32
    %194 = vector.broadcast %cst_63 : f32 to vector<64x512xf32>
    %195 = arith.subf %194, %173 : vector<64x512xf32>
    %196 = arith.mulf %195, %173 : vector<64x512xf32>
    %197 = math.exp %196 : vector<64x512xf32>
    %198 = arith.mulf %193, %197 : vector<64x512xf32>
    %cst_64 = arith.constant 1.000000e+00 : f32
    %199 = vector.broadcast %cst_64 : f32 to vector<64x512xf32>
    %200 = arith.subf %199, %198 : vector<64x512xf32>
    %cst_65 = arith.constant 0.000000e+00 : f32
    %201 = vector.broadcast %cst_65 : f32 to vector<64x512xf32>
    %202 = arith.cmpf oge, %172, %201 : vector<64x512xf32>
    %cst_66 = arith.constant 0.000000e+00 : f32
    %203 = vector.broadcast %cst_66 : f32 to vector<64x512xf32>
    %204 = arith.subf %203, %200 : vector<64x512xf32>
    %205 = arith.select %202, %200, %204 : vector<64x512xi1>, vector<64x512xf32>
    %cst_67 = arith.constant 1.000000e+00 : f32
    %206 = vector.broadcast %cst_67 : f32 to vector<64x512xf32>
    %207 = arith.addf %206, %205 : vector<64x512xf32>
    %208 = arith.mulf %170, %207 : vector<64x512xf32>
    %209 = arith.truncf %208 : vector<64x512xf32> to vector<64x512xbf16>
    %c0_68 = arith.constant 0 : index
    %c0_69 = arith.constant 0 : index
    %210 = vector.load %arg12[%c0_68, %c0_69] : memref<512x128xbf16, #tpu.memory_space<vmem>>, vector<512x128xbf16>
    %cst_70 = arith.constant dense<0.000000e+00> : vector<64x128xf32>
    %211 = tpu.matmul %209, %210, %cst_70 {dimension_numbers = #tpu.dot_dimension_numbers<[1], [0], [0], [1], [0, 0, 1, 1], [], []>} : vector<64x512xbf16>, vector<512x128xbf16>, vector<64x128xf32> -> vector<64x128xf32>
    %c0_71 = arith.constant 0 : index
    %c0_72 = arith.constant 0 : index
    %212 = vector.load %arg13[%c0_71, %c0_72] : memref<1x128xf32, #tpu.memory_space<vmem>>, vector<1x128xf32>
    %213 = vector.broadcast %212 : vector<1x128xf32> to vector<64x128xf32>
    %214 = arith.addf %211, %213 : vector<64x128xf32>
    %215 = arith.addf %138, %214 : vector<64x128xf32>
    %216 = vector.shape_cast %215 : vector<64x128xf32> to vector<4x16x128xf32>
    %c0_73 = arith.constant 0 : index
    %c0_74 = arith.constant 0 : index
    %c0_75 = arith.constant 0 : index
    %217 = vector.load %arg14[%c0_73, %c0_74, %c0_75] : memref<4x16x128xf32, #tpu.memory_space<vmem>>, vector<4x16x128xf32>
    tpu.vector_store %arg14[%c0_73, %c0_74, %c0_75], %216 {strides = array<i32>} : memref<4x16x128xf32, #tpu.memory_space<vmem>>, vector<4x16x128xf32>,
    return
  }
  func.func @transform_0(%arg0: i32) -> (i32, i32, i32) {
    %c0_i32 = arith.constant 0 : i32
    %c0_i32_0 = arith.constant 0 : i32
    %c0_i32_1 = arith.constant 0 : i32
    return %arg0, %c0_i32, %c0_i32_0 : i32, i32, i32
  }
  func.func @transform_1(%arg0: i32) -> (i32, i32) {
    %c0_i32 = arith.constant 0 : i32
    %c0_i32_0 = arith.constant 0 : i32
    %c0_i32_1 = arith.constant 0 : i32
    return %c0_i32, %c0_i32_0 : i32, i32
  }
  func.func @transform_2(%arg0: i32) -> (i32, i32) {
    %c0_i32 = arith.constant 0 : i32
    %c0_i32_0 = arith.constant 0 : i32
    %c0_i32_1 = arith.constant 0 : i32
    return %c0_i32, %c0_i32_0 : i32, i32
  }
  func.func @transform_3(%arg0: i32) -> (i32, i32) {
    %c0_i32 = arith.constant 0 : i32
    %c0_i32_0 = arith.constant 0 : i32
    %c0_i32_1 = arith.constant 0 : i32
    return %c0_i32, %c0_i32_0 : i32, i32
  }
  func.func @transform_4(%arg0: i32) -> (i32, i32) {
    %c0_i32 = arith.constant 0 : i32
    %c0_i32_0 = arith.constant 0 : i32
    %c0_i32_1 = arith.constant 0 : i32
    return %c0_i32, %c0_i32_0 : i32, i32
  }
  func.func @transform_5(%arg0: i32) -> (i32, i32) {
    %c0_i32 = arith.constant 0 : i32
    %c0_i32_0 = arith.constant 0 : i32
    %c0_i32_1 = arith.constant 0 : i32
    return %c0_i32, %c0_i32_0 : i32, i32
  }
  func.func @transform_6(%arg0: i32) -> (i32, i32) {
    %c0_i32 = arith.constant 0 : i32
    %c0_i32_0 = arith.constant 0 : i32
    %c0_i32_1 = arith.constant 0 : i32
    return %c0_i32, %c0_i32_0 : i32, i32
  }
  func.func @transform_7(%arg0: i32) -> (i32, i32) {
    %c0_i32 = arith.constant 0 : i32
    %c0_i32_0 = arith.constant 0 : i32
    %c0_i32_1 = arith.constant 0 : i32
    return %c0_i32, %c0_i32_0 : i32, i32
  }
  func.func @transform_8(%arg0: i32) -> (i32, i32) {
    %c0_i32 = arith.constant 0 : i32
    %c0_i32_0 = arith.constant 0 : i32
    %c0_i32_1 = arith.constant 0 : i32
    return %c0_i32, %c0_i32_0 : i32, i32
  }
  func.func @transform_9(%arg0: i32) -> (i32, i32) {
    %c0_i32 = arith.constant 0 : i32
    %c0_i32_0 = arith.constant 0 : i32
    %c0_i32_1 = arith.constant 0 : i32
    return %c0_i32, %c0_i32_0 : i32, i32
  }
  func.func @transform_10(%arg0: i32) -> (i32, i32) {
    %c0_i32 = arith.constant 0 : i32
    %c0_i32_0 = arith.constant 0 : i32
    %c0_i32_1 = arith.constant 0 : i32
    return %c0_i32, %c0_i32_0 : i32, i32
  }
  func.func @transform_11(%arg0: i32) -> (i32, i32) {
    %c0_i32 = arith.constant 0 : i32
    %c0_i32_0 = arith.constant 0 : i32
    %c0_i32_1 = arith.constant 0 : i32
    return %c0_i32, %c0_i32_0 : i32, i32
  }
  func.func @transform_12(%arg0: i32) -> (i32, i32) {
    %c0_i32 = arith.constant 0 : i32
    %c0_i32_0 = arith.constant 0 : i32
    %c0_i32_1 = arith.constant 0 : i32
    return %c0_i32, %c0_i32_0 : i32, i32
  }
  func.func @transform_13(%arg0: i32) -> (i32, i32, i32) {
    %c0_i32 = arith.constant 0 : i32
    %c0_i32_0 = arith.constant 0 : i32
    %c0_i32_1 = arith.constant 0 : i32
    return %arg0, %c0_i32, %c0_i32_0 : i32, i32, i32
  }
}

</mosaic_0001>

<llo_original>
// kernel: tpu_custom_call.1
$region0: #{tpu_custom_call.1}
  #allocation0 [shape = 'u32[]', space=smem, size = 0x4, offset = 0x4, fixed_abs, tag = 'smem constant byte address 0x4 - core index']
  #allocation1 [shape = 'u32[144,128]{1,0:T(1,128)}', space=vmem, size = 0x12000, scoped, tag = 'internal scratch']
  %s0 = inlined_call_operand.hbm [shape: f32[16,16,128], index: 0, kind: input, shape index: {}]
  %s1 = inlined_call_operand.hbm [shape: f32[1,128], index: 1, kind: input, shape index: {}]
  %s2 = inlined_call_operand.hbm [shape: f32[1,128], index: 2, kind: input, shape index: {}]
  %s3 = inlined_call_operand.hbm [shape: bf16[128,384], index: 3, kind: input, shape index: {}]
  %s4 = inlined_call_operand.hbm [shape: f32[1,384], index: 4, kind: input, shape index: {}]
  %s5 = inlined_call_operand.hbm [shape: bf16[128,128], index: 5, kind: input, shape index: {}]
  %s6 = inlined_call_operand.hbm [shape: f32[1,128], index: 6, kind: input, shape index: {}]
  %s7 = inlined_call_operand.hbm [shape: f32[1,128], index: 7, kind: input, shape index: {}]
  %s8 = inlined_call_operand.hbm [shape: f32[1,128], index: 8, kind: input, shape index: {}]
  %s9 = inlined_call_operand.hbm [shape: bf16[128,512], index: 9, kind: input, shape index: {}]
  %s10 = inlined_call_operand.hbm [shape: f32[1,512], index: 10, kind: input, shape index: {}]
  %s11 = inlined_call_operand.hbm [shape: bf16[512,128], index: 11, kind: input, shape index: {}]
  %s12 = inlined_call_operand.hbm [shape: f32[1,128], index: 12, kind: input, shape index: {}]
  %s13 = inlined_call_operand.hbm [shape: f32[16,16,128], index: 13, kind: output, shape index: {}]
  %s14 = sld [smem:[#allocation0]]
  $region137: #{tpu_custom_call.1} parent=0
    _
  %s16 = ssub.s32 1, %s14
  %s17 = scalar_select 0, %s16, %s14
  $region1: #{tpu_custom_call.1} parent=0
    #allocation2 [shape = 'u8[65536]{0}', space=vmem, size = 0x10000, scoped, tag = 'input window, operand 0']
    #allocation3 [shape = 's32[2]{0}', space=sflag, size = 0x8, scoped, tag = 'scoped memory for tpu_custom_call.1']
    #allocation4 [shape = 's32[2]{0}', space=sflag, size = 0x8, scoped, tag = 'scoped memory for tpu_custom_call.1']
    #allocation5 [shape = 'u8[512]{0}', space=vmem, size = 0x400, scoped, tag = 'input window, operand 1, single buffered']
    #allocation6 [shape = 's32[1]{0}', space=sflag, size = 0x4, scoped, tag = 'scoped memory for tpu_custom_call.1']
    #allocation7 [shape = 'u8[512]{0}', space=vmem, size = 0x400, scoped, tag = 'input window, operand 2, single buffered']
    #allocation8 [shape = 'u8[98304]{0}', space=vmem, size = 0x18000, scoped, tag = 'input window, operand 3, single buffered']
    #allocation9 [shape = 's32[1]{0}', space=sflag, size = 0x4, scoped, tag = 'scoped memory for tpu_custom_call.1']
    #allocation10 [shape = 'u8[1536]{0}', space=vmem, size = 0x800, scoped, tag = 'input window, operand 4, single buffered']
    #allocation11 [shape = 'u8[32768]{0}', space=vmem, size = 0x8000, scoped, tag = 'input window, operand 5, single buffered']
    #allocation12 [shape = 's32[1]{0}', space=sflag, size = 0x4, scoped, tag = 'scoped memory for tpu_custom_call.1']
    #allocation13 [shape = 'u8[512]{0}', space=vmem, size = 0x400, scoped, tag = 'input window, operand 6, single buffered']
    #allocation14 [shape = 'u8[512]{0}', space=vmem, size = 0x400, scoped, tag = 'input window, operand 7, single buffered']
    #allocation15 [shape = 's32[1]{0}', space=sflag, size = 0x4, scoped, tag = 'scoped memory for tpu_custom_call.1']
    #allocation16 [shape = 'u8[512]{0}', space=vmem, size = 0x400, scoped, tag = 'input window, operand 8, single buffered']
    #allocation17 [shape = 'u8[131072]{0}', space=vmem, size = 0x20000, scoped, tag = 'input window, operand 9, single buffered']
    #allocation18 [shape = 's32[1]{0}', space=sflag, size = 0x4, scoped, tag = 'scoped memory for tpu_custom_call.1']
    #allocation19 [shape = 'u8[2048]{0}', space=vmem, size = 0x800, scoped, tag = 'input window, operand 10, single buffered']
    #allocation20 [shape = 'u8[131072]{0}', space=vmem, size = 0x20000, scoped, tag = 'input window, operand 11, single buffered']
    #allocation21 [shape = 's32[1]{0}', space=sflag, size = 0x4, scoped, tag = 'scoped memory for tpu_custom_call.1']
    #allocation22 [shape = 'u8[512]{0}', space=vmem, size = 0x400, scoped, tag = 'input window, operand 12, single buffered']
    #allocation23 [shape = 'u8[65536]{0}', space=vmem, size = 0x10000, scoped, tag = 'output window, operand 0']
    %18 = vsyncpa [#allocation3], 0
    %s19 = scalar_lea.sflag [#allocation3], 1
    %20 = vsyncpa %s19, 0
    %21 = vsyncpa [#allocation6], 0
    %22 = vsyncpa [#allocation9], 0
    %23 = vsyncpa [#allocation12], 0
    %24 = vsyncpa [#allocation15], 0
    %25 = vsyncpa [#allocation18], 0
    %26 = vsyncpa [#allocation21], 0
    %27 = vsyncpa [#allocation4], 0
    %s28 = scalar_lea.sflag [#allocation4], 1
    %29 = vsyncpa %s28, 0
    loop: start=0, step=1, limit=6
    $region2: #{tpu_custom_call.1} parent=1 // loop_pre_header
      _
    $region3: #{tpu_custom_call.1} parent=1 // loop_header
      %s31 = sphi 0, %s35
      %p32 = scmp.ge.s32.totalorder %s31, 6
      %s41 = sphi 0, %s43
      %s44 = sphi 0, %s41
      %s45 = sphi 0, %s44
      %s61 = sphi 0, %s45
      %s65 = sphi 0, %s65
      %s67 = sphi 0, %s65
      %s68 = sphi 0, %s67
      %s82 = sphi 0, %s68
      %s86 = sphi 0, %s86
      %s88 = sphi 0, %s86
      %s89 = sphi 0, %s88
      %s103 = sphi 0, %s89
      %s107 = sphi 0, %s107
      %s109 = sphi 0, %s107
      %s110 = sphi 0, %s109
      %s124 = sphi 0, %s110
      %s128 = sphi 0, %s128
      %s130 = sphi 0, %s128
      %s131 = sphi 0, %s130
      %s145 = sphi 0, %s131
      %s149 = sphi 0, %s149
      %s151 = sphi 0, %s149
      %s152 = sphi 0, %s151
      %s166 = sphi 0, %s152
      %s170 = sphi 0, %s170
      %s172 = sphi 0, %s170
      %s173 = sphi 0, %s172
      %s187 = sphi 0, %s173
      %s191 = sphi 0, %s191
      %s193 = sphi 0, %s191
      %s194 = sphi 0, %s193
      %s208 = sphi 0, %s194
      %s212 = sphi 0, %s212
      %s214 = sphi 0, %s212
      %s215 = sphi 0, %s214
      %s229 = sphi 0, %s215
      %s233 = sphi 0, %s233
      %s235 = sphi 0, %s233
      %s236 = sphi 0, %s235
      %s250 = sphi 0, %s236
      %s254 = sphi 0, %s254
      %s256 = sphi 0, %s254
      %s257 = sphi 0, %s256
      %s271 = sphi 0, %s257
      %s275 = sphi 0, %s275
      %s277 = sphi 0, %s275
      %s278 = sphi 0, %s277
      %s292 = sphi 0, %s278
      %s296 = sphi 0, %s296
      %s298 = sphi 0, %s296
      %s299 = sphi 0, %s298
      %s313 = sphi 0, %s299
      %s319 = sphi 0, %s321
      %s322 = sphi 0, %s319
      %s323 = sphi 0, %s322
      %s339 = sphi 0, %s323
    $region4: #{tpu_custom_call.1} parent=1 // loop_header_branch
      %34 = sbr.rel (%p32) target = $region8
    $region5: #{tpu_custom_call.1} parent=1 // loop_body
      %s36 = ssub.s32 %s31, 1
      %s37 = ssub.s32 %s31, 2
      %s38 = sadd.s32 %s31, 1
      %s39 = ssub.s32 %s31, %s38
      %p40 = scmp.eq.s32.totalorder %s39, 0
      %s42 = sadd.s32 %s41, 1
      %s43 = scalar_select %p40, %s41, %s42
      %p46 = pneg %p40
      %p47 = scmp.eq.s32.totalorder %s31, 3
      %p48 = por %p46, %p47
      %p49 = scmp.ne.s32.totalorder %s41, %s44
      %p50 = scmp.eq.s32.totalorder %s31, 0
      %p51 = por %p49, %p50
      %p52 = scmp.ne.s32.totalorder %s41, %s44
      %p53 = scmp.eq.s32.totalorder %s36, 3
      %p54 = por %p52, %p53
      %p55 = scmp.ne.s32.totalorder %s44, %s45
      %p56 = scmp.eq.s32.totalorder %s36, 0
      %p57 = por %p55, %p56
      %p58 = scmp.ne.s32.totalorder %s44, %s45
      %p59 = scmp.eq.s32.totalorder %s37, 3
      %p60 = por %p58, %p59
      %p62 = scmp.ne.s32.totalorder %s45, %s61
      %p63 = scmp.eq.s32.totalorder %s37, 0
      %p64 = por %p62, %p63
      %s66 = sadd.s32 %s65, 1
      %p69 = scmp.eq.s32.totalorder %s31, 3
      %p70 = scmp.ne.s32.totalorder %s65, %s67
      %p71 = scmp.eq.s32.totalorder %s31, 0
      %p72 = por %p70, %p71
      %p73 = scmp.ne.s32.totalorder %s65, %s67
      %p74 = scmp.eq.s32.totalorder %s36, 3
      %p75 = por %p73, %p74
      %p76 = scmp.ne.s32.totalorder %s67, %s68
      %p77 = scmp.eq.s32.totalorder %s36, 0
      %p78 = por %p76, %p77
      %p79 = scmp.ne.s32.totalorder %s67, %s68
      %p80 = scmp.eq.s32.totalorder %s37, 3
      %p81 = por %p79, %p80
      %p83 = scmp.ne.s32.totalorder %s68, %s82
      %p84 = scmp.eq.s32.totalorder %s37, 0
      %p85 = por %p83, %p84
      %s87 = sadd.s32 %s86, 1
      %p90 = scmp.eq.s32.totalorder %s31, 3
      %p91 = scmp.ne.s32.totalorder %s86, %s88
      %p92 = scmp.eq.s32.totalorder %s31, 0
      %p93 = por %p91, %p92
      %p94 = scmp.ne.s32.totalorder %s86, %s88
      %p95 = scmp.eq.s32.totalorder %s36, 3
      %p96 = por %p94, %p95
      %p97 = scmp.ne.s32.totalorder %s88, %s89
      %p98 = scmp.eq.s32.totalorder %s36, 0
      %p99 = por %p97, %p98
      %p100 = scmp.ne.s32.totalorder %s88, %s89
      %p101 = scmp.eq.s32.totalorder %s37, 3
      %p102 = por %p100, %p101
      %p104 = scmp.ne.s32.totalorder %s89, %s103
      %p105 = scmp.eq.s32.totalorder %s37, 0
      %p106 = por %p104, %p105
      %s108 = sadd.s32 %s107, 1
      %p111 = scmp.eq.s32.totalorder %s31, 3
      %p112 = scmp.ne.s32.totalorder %s107, %s109
      %p113 = scmp.eq.s32.totalorder %s31, 0
      %p114 = por %p112, %p113
      %p115 = scmp.ne.s32.totalorder %s107, %s109
      %p116 = scmp.eq.s32.totalorder %s36, 3
      %p117 = por %p115, %p116
      %p118 = scmp.ne.s32.totalorder %s109, %s110
      %p119 = scmp.eq.s32.totalorder %s36, 0
      %p120 = por %p118, %p119
      %p121 = scmp.ne.s32.totalorder %s109, %s110
      %p122 = scmp.eq.s32.totalorder %s37, 3
      %p123 = por %p121, %p122
      %p125 = scmp.ne.s32.totalorder %s110, %s124
      %p126 = scmp.eq.s32.totalorder %s37, 0
      %p127 = por %p125, %p126
      %s129 = sadd.s32 %s128, 1
      %p132 = scmp.eq.s32.totalorder %s31, 3
      %p133 = scmp.ne.s32.totalorder %s128, %s130
      %p134 = scmp.eq.s32.totalorder %s31, 0
      %p135 = por %p133, %p134
      %p136 = scmp.ne.s32.totalorder %s128, %s130
      %p137 = scmp.eq.s32.totalorder %s36, 3
      %p138 = por %p136, %p137
      %p139 = scmp.ne.s32.totalorder %s130, %s131
      %p140 = scmp.eq.s32.totalorder %s36, 0
      %p141 = por %p139, %p140
      %p142 = scmp.ne.s32.totalorder %s130, %s131
      %p143 = scmp.eq.s32.totalorder %s37, 3
      %p144 = por %p142, %p143
      %p146 = scmp.ne.s32.totalorder %s131, %s145
      %p147 = scmp.eq.s32.totalorder %s37, 0
      %p148 = por %p146, %p147
      %s150 = sadd.s32 %s149, 1
      %p153 = scmp.eq.s32.totalorder %s31, 3
      %p154 = scmp.ne.s32.totalorder %s149, %s151
      %p155 = scmp.eq.s32.totalorder %s31, 0
      %p156 = por %p154, %p155
      %p157 = scmp.ne.s32.totalorder %s149, %s151
      %p158 = scmp.eq.s32.totalorder %s36, 3
      %p159 = por %p157, %p158
      %p160 = scmp.ne.s32.totalorder %s151, %s152
      %p161 = scmp.eq.s32.totalorder %s36, 0
      %p162 = por %p160, %p161
      %p163 = scmp.ne.s32.totalorder %s151, %s152
      %p164 = scmp.eq.s32.totalorder %s37, 3
      %p165 = por %p163, %p164
      %p167 = scmp.ne.s32.totalorder %s152, %s166
      %p168 = scmp.eq.s32.totalorder %s37, 0
      %p169 = por %p167, %p168
      %s171 = sadd.s32 %s170, 1
      %p174 = scmp.eq.s32.totalorder %s31, 3
      %p175 = scmp.ne.s32.totalorder %s170, %s172
      %p176 = scmp.eq.s32.totalorder %s31, 0
      %p177 = por %p175, %p176
      %p178 = scmp.ne.s32.totalorder %s170, %s172
      %p179 = scmp.eq.s32.totalorder %s36, 3
      %p180 = por %p178, %p179
      %p181 = scmp.ne.s32.totalorder %s172, %s173
      %p182 = scmp.eq.s32.totalorder %s36, 0
      %p183 = por %p181, %p182
      %p184 = scmp.ne.s32.totalorder %s172, %s173
      %p185 = scmp.eq.s32.totalorder %s37, 3
      %p186 = por %p184, %p185
      %p188 = scmp.ne.s32.totalorder %s173, %s187
      %p189 = scmp.eq.s32.totalorder %s37, 0
      %p190 = por %p188, %p189
      %s192 = sadd.s32 %s191, 1
      %p195 = scmp.eq.s32.totalorder %s31, 3
      %p196 = scmp.ne.s32.totalorder %s191, %s193
      %p197 = scmp.eq.s32.totalorder %s31, 0
      %p198 = por %p196, %p197
      %p199 = scmp.ne.s32.totalorder %s191, %s193
      %p200 = scmp.eq.s32.totalorder %s36, 3
      %p201 = por %p199, %p200
      %p202 = scmp.ne.s32.totalorder %s193, %s194
      %p203 = scmp.eq.s32.totalorder %s36, 0
      %p204 = por %p202, %p203
      %p205 = scmp.ne.s32.totalorder %s193, %s194
      %p206 = scmp.eq.s32.totalorder %s37, 3
      %p207 = por %p205, %p206
      %p209 = scmp.ne.s32.totalorder %s194, %s208
      %p210 = scmp.eq.s32.totalorder %s37, 0
      %p211 = por %p209, %p210
      %s213 = sadd.s32 %s212, 1
      %p216 = scmp.eq.s32.totalorder %s31, 3
      %p217 = scmp.ne.s32.totalorder %s212, %s214
      %p218 = scmp.eq.s32.totalorder %s31, 0
      %p219 = por %p217, %p218
      %p220 = scmp.ne.s32.totalorder %s212, %s214
      %p221 = scmp.eq.s32.totalorder %s36, 3
      %p222 = por %p220, %p221
      %p223 = scmp.ne.s32.totalorder %s214, %s215
      %p224 = scmp.eq.s32.totalorder %s36, 0
      %p225 = por %p223, %p224
      %p226 = scmp.ne.s32.totalorder %s214, %s215
      %p227 = scmp.eq.s32.totalorder %s37, 3
      %p228 = por %p226, %p227
      %p230 = scmp.ne.s32.totalorder %s215, %s229
      %p231 = scmp.eq.s32.totalorder %s37, 0
      %p232 = por %p230, %p231
      %s234 = sadd.s32 %s233, 1
      %p237 = scmp.eq.s32.totalorder %s31, 3
      %p238 = scmp.ne.s32.totalorder %s233, %s235
      %p239 = scmp.eq.s32.totalorder %s31, 0
      %p240 = por %p238, %p239
      %p241 = scmp.ne.s32.totalorder %s233, %s235
      %p242 = scmp.eq.s32.totalorder %s36, 3
      %p243 = por %p241, %p242
      %p244 = scmp.ne.s32.totalorder %s235, %s236
      %p245 = scmp.eq.s32.totalorder %s36, 0
      %p246 = por %p244, %p245
      %p247 = scmp.ne.s32.totalorder %s235, %s236
      %p248 = scmp.eq.s32.totalorder %s37, 3
      %p249 = por %p247, %p248
      %p251 = scmp.ne.s32.totalorder %s236, %s250
      %p252 = scmp.eq.s32.totalorder %s37, 0
      %p253 = por %p251, %p252
      %s255 = sadd.s32 %s254, 1
      %p258 = scmp.eq.s32.totalorder %s31, 3
      %p259 = scmp.ne.s32.totalorder %s254, %s256
      %p260 = scmp.eq.s32.totalorder %s31, 0
      %p261 = por %p259, %p260
      %p262 = scmp.ne.s32.totalorder %s254, %s256
      %p263 = scmp.eq.s32.totalorder %s36, 3
      %p264 = por %p262, %p263
      %p265 = scmp.ne.s32.totalorder %s256, %s257
      %p266 = scmp.eq.s32.totalorder %s36, 0
      %p267 = por %p265, %p266
      %p268 = scmp.ne.s32.totalorder %s256, %s257
      %p269 = scmp.eq.s32.totalorder %s37, 3
      %p270 = por %p268, %p269
      %p272 = scmp.ne.s32.totalorder %s257, %s271
      %p273 = scmp.eq.s32.totalorder %s37, 0
      %p274 = por %p272, %p273
      %s276 = sadd.s32 %s275, 1
      %p279 = scmp.eq.s32.totalorder %s31, 3
      %p280 = scmp.ne.s32.totalorder %s275, %s277
      %p281 = scmp.eq.s32.totalorder %s31, 0
      %p282 = por %p280, %p281
      %p283 = scmp.ne.s32.totalorder %s275, %s277
      %p284 = scmp.eq.s32.totalorder %s36, 3
      %p285 = por %p283, %p284
      %p286 = scmp.ne.s32.totalorder %s277, %s278
      %p287 = scmp.eq.s32.totalorder %s36, 0
      %p288 = por %p286, %p287
      %p289 = scmp.ne.s32.totalorder %s277, %s278
      %p290 = scmp.eq.s32.totalorder %s37, 3
      %p291 = por %p289, %p290
      %p293 = scmp.ne.s32.totalorder %s278, %s292
      %p294 = scmp.eq.s32.totalorder %s37, 0
      %p295 = por %p293, %p294
      %s297 = sadd.s32 %s296, 1
      %p300 = scmp.eq.s32.totalorder %s31, 3
      %p301 = scmp.ne.s32.totalorder %s296, %s298
      %p302 = scmp.eq.s32.totalorder %s31, 0
      %p303 = por %p301, %p302
      %p304 = scmp.ne.s32.totalorder %s296, %s298
      %p305 = scmp.eq.s32.totalorder %s36, 3
      %p306 = por %p304, %p305
      %p307 = scmp.ne.s32.totalorder %s298, %s299
      %p308 = scmp.eq.s32.totalorder %s36, 0
      %p309 = por %p307, %p308
      %p310 = scmp.ne.s32.totalorder %s298, %s299
      %p311 = scmp.eq.s32.totalorder %s37, 3
      %p312 = por %p310, %p311
      %p314 = scmp.ne.s32.totalorder %s299, %s313
      %p315 = scmp.eq.s32.totalorder %s37, 0
      %p316 = por %p314, %p315
      %s317 = ssub.s32 %s31, %s38
      %p318 = scmp.eq.s32.totalorder %s317, 0
      %s320 = sadd.s32 %s319, 1
      %s321 = scalar_select %p318, %s319, %s320
      %p324 = pneg %p318
      %p325 = scmp.eq.s32.totalorder %s31, 3
      %p326 = por %p324, %p325
      %p327 = scmp.ne.s32.totalorder %s319, %s322
      %p328 = scmp.eq.s32.totalorder %s31, 0
      %p329 = por %p327, %p328
      %p330 = scmp.ne.s32.totalorder %s319, %s322
      %p331 = scmp.eq.s32.totalorder %s36, 3
      %p332 = por %p330, %p331
      %p333 = scmp.ne.s32.totalorder %s322, %s323
      %p334 = scmp.eq.s32.totalorder %s36, 0
      %p335 = por %p333, %p334
      %p336 = scmp.ne.s32.totalorder %s322, %s323
      %p337 = scmp.eq.s32.totalorder %s37, 3
      %p338 = por %p336, %p337
      %p340 = scmp.ne.s32.totalorder %s323, %s339
      %p341 = scmp.eq.s32.totalorder %s37, 0
      %p342 = por %p340, %p341
      %p343 = scmp.le.s32.totalorder 1, %s31
      %p344 = scmp.lt.s32.totalorder %s31, 5
      %p345 = pnand %p343, %p344
      %p346 = pneg %p345
      // Predicated region
      $region9: #{tpu_custom_call.1} parent=5 // pred_check
        _
      $region10: #{tpu_custom_call.1} parent=5 // pred_check_branch
        %348 = sbr.rel (%p345) target = $region12
      $region11: #{tpu_custom_call.1} parent=5 // pred_region
        %s349 = ssub.s32 %s31, 1
        // Predicated region
        $region13: #{tpu_custom_call.1} parent=11 // pred_check
          %p350 = pneg %p78
        $region14: #{tpu_custom_call.1} parent=11 // pred_check_branch
          %352 = sbr.rel (%p350) target = $region16
        $region15: #{tpu_custom_call.1} parent=11 // pred_region
          %s354 = ssub.s32 16, 16
          %355 = vsyncadd [#allocation6], %s354
          %s357 = sshll.u32 [#allocation5], 4
          %s358 = int_to_ptr.vmem [resolvable:$true] %s357
          %360 = dma.hbm_to_vmem [thread:$0]  %s1, 16, %s358, [#allocation6]
        $region16: #{tpu_custom_call.1} parent=11 // pred_fallthru
          _
        // Predicated region
        $region17: #{tpu_custom_call.1} parent=11 // pred_check
          %p361 = pneg %p99
        $region18: #{tpu_custom_call.1} parent=11 // pred_check_branch
          %363 = sbr.rel (%p361) target = $region20
        $region19: #{tpu_custom_call.1} parent=11 // pred_region
          %s365 = ssub.s32 16, 16
          %366 = vsyncadd [#allocation6], %s365
          %s368 = sshll.u32 [#allocation7], 4
          %s369 = int_to_ptr.vmem [resolvable:$true] %s368
          %371 = dma.hbm_to_vmem [thread:$0]  %s2, 16, %s369, [#allocation6]
        $region20: #{tpu_custom_call.1} parent=11 // pred_fallthru
          _
        // Predicated region
        $region21: #{tpu_custom_call.1} parent=11 // pred_check
          %p372 = pneg %p120
        $region22: #{tpu_custom_call.1} parent=11 // pred_check_branch
          %374 = sbr.rel (%p372) target = $region24
        $region23: #{tpu_custom_call.1} parent=11 // pred_region
          %s376 = ssub.s32 3072, 3072
          %377 = vsyncadd [#allocation9], %s376
          %s378 = sshll.u32 [#allocation8], 4
          %s379 = int_to_ptr.vmem [resolvable:$true] %s378
          %384 = dma.hbm_to_vmem [thread:$0]  %s3, 3072, %s379, [#allocation9], 192, 192, 12
        $region24: #{tpu_custom_call.1} parent=11 // pred_fallthru
          _
        // Predicated region
        $region25: #{tpu_custom_call.1} parent=11 // pred_check
          %p385 = pneg %p141
        $region26: #{tpu_custom_call.1} parent=11 // pred_check_branch
          %387 = sbr.rel (%p385) target = $region28
        $region27: #{tpu_custom_call.1} parent=11 // pred_region
          %s389 = ssub.s32 48, 48
          %390 = vsyncadd [#allocation9], %s389
          %s392 = sshll.u32 [#allocation10], 4
          %s393 = int_to_ptr.vmem [resolvable:$true] %s392
          %395 = dma.hbm_to_vmem [thread:$0]  %s4, 48, %s393, [#allocation9]
        $region28: #{tpu_custom_call.1} parent=11 // pred_fallthru
          _
        // Predicated region
        $region29: #{tpu_custom_call.1} parent=11 // pred_check
          %p396 = pneg %p162
        $region30: #{tpu_custom_call.1} parent=11 // pred_check_branch
          %398 = sbr.rel (%p396) target = $region32
        $region31: #{tpu_custom_call.1} parent=11 // pred_region
          %s400 = ssub.s32 1024, 1024
          %401 = vsyncadd [#allocation12], %s400
          %s402 = sshll.u32 [#allocation11], 4
          %s403 = int_to_ptr.vmem [resolvable:$true] %s402
          %408 = dma.hbm_to_vmem [thread:$0]  %s5, 1024, %s403, [#allocation12], 64, 64, 4
        $region32: #{tpu_custom_call.1} parent=11 // pred_fallthru
          _
        // Predicated region
        $region33: #{tpu_custom_call.1} parent=11 // pred_check
          %p409 = pneg %p183
        $region34: #{tpu_custom_call.1} parent=11 // pred_check_branch
          %411 = sbr.rel (%p409) target = $region36
        $region35: #{tpu_custom_call.1} parent=11 // pred_region
          %s413 = ssub.s32 16, 16
          %414 = vsyncadd [#allocation12], %s413
          %s416 = sshll.u32 [#allocation13], 4
          %s417 = int_to_ptr.vmem [resolvable:$true] %s416
          %419 = dma.hbm_to_vmem [thread:$0]  %s6, 16, %s417, [#allocation12]
        $region36: #{tpu_custom_call.1} parent=11 // pred_fallthru
          _
        // Predicated region
        $region37: #{tpu_custom_call.1} parent=11 // pred_check
          %p420 = pneg %p204
        $region38: #{tpu_custom_call.1} parent=11 // pred_check_branch
          %422 = sbr.rel (%p420) target = $region40
        $region39: #{tpu_custom_call.1} parent=11 // pred_region
          %s424 = ssub.s32 16, 16
          %425 = vsyncadd [#allocation15], %s424
          %s427 = sshll.u32 [#allocation14], 4
          %s428 = int_to_ptr.vmem [resolvable:$true] %s427
          %430 = dma.hbm_to_vmem [thread:$0]  %s7, 16, %s428, [#allocation15]
        $region40: #{tpu_custom_call.1} parent=11 // pred_fallthru
          _
        // Predicated region
        $region41: #{tpu_custom_call.1} parent=11 // pred_check
          %p431 = pneg %p225
        $region42: #{tpu_custom_call.1} parent=11 // pred_check_branch
          %433 = sbr.rel (%p431) target = $region44
        $region43: #{tpu_custom_call.1} parent=11 // pred_region
          %s435 = ssub.s32 16, 16
          %436 = vsyncadd [#allocation15], %s435
          %s438 = sshll.u32 [#allocation16], 4
          %s439 = int_to_ptr.vmem [resolvable:$true] %s438
          %441 = dma.hbm_to_vmem [thread:$0]  %s8, 16, %s439, [#allocation15]
        $region44: #{tpu_custom_call.1} parent=11 // pred_fallthru
          _
        // Predicated region
        $region45: #{tpu_custom_call.1} parent=11 // pred_check
          %p442 = pneg %p246
        $region46: #{tpu_custom_call.1} parent=11 // pred_check_branch
          %444 = sbr.rel (%p442) target = $region48
        $region47: #{tpu_custom_call.1} parent=11 // pred_region
          %s446 = ssub.s32 4096, 4096
          %447 = vsyncadd [#allocation18], %s446
          %s448 = sshll.u32 [#allocation17], 4
          %s449 = int_to_ptr.vmem [resolvable:$true] %s448
          %454 = dma.hbm_to_vmem [thread:$0]  %s9, 4096, %s449, [#allocation18], 256, 256, 16
        $region48: #{tpu_custom_call.1} parent=11 // pred_fallthru
          _
        // Predicated region
        $region49: #{tpu_custom_call.1} parent=11 // pred_check
          %p455 = pneg %p267
        $region50: #{tpu_custom_call.1} parent=11 // pred_check_branch
          %457 = sbr.rel (%p455) target = $region52
        $region51: #{tpu_custom_call.1} parent=11 // pred_region
          %s459 = ssub.s32 64, 64
          %460 = vsyncadd [#allocation18], %s459
          %s462 = sshll.u32 [#allocation19], 4
          %s463 = int_to_ptr.vmem [resolvable:$true] %s462
          %465 = dma.hbm_to_vmem [thread:$0]  %s10, 64, %s463, [#allocation18]
        $region52: #{tpu_custom_call.1} parent=11 // pred_fallthru
          _
        // Predicated region
        $region53: #{tpu_custom_call.1} parent=11 // pred_check
          %p466 = pneg %p288
        $region54: #{tpu_custom_call.1} parent=11 // pred_check_branch
          %468 = sbr.rel (%p466) target = $region56
        $region55: #{tpu_custom_call.1} parent=11 // pred_region
          %s470 = ssub.s32 4096, 4096
          %471 = vsyncadd [#allocation21], %s470
          %s472 = sshll.u32 [#allocation20], 4
          %s473 = int_to_ptr.vmem [resolvable:$true] %s472
          %478 = dma.hbm_to_vmem [thread:$0]  %s11, 4096, %s473, [#allocation21], 64, 64, 4
        $region56: #{tpu_custom_call.1} parent=11 // pred_fallthru
          _
        // Predicated region
        $region57: #{tpu_custom_call.1} parent=11 // pred_check
          %p479 = pneg %p309
        $region58: #{tpu_custom_call.1} parent=11 // pred_check_branch
          %481 = sbr.rel (%p479) target = $region60
        $region59: #{tpu_custom_call.1} parent=11 // pred_region
          %s483 = ssub.s32 16, 16
          %484 = vsyncadd [#allocation21], %s483
          %s486 = sshll.u32 [#allocation22], 4
          %s487 = int_to_ptr.vmem [resolvable:$true] %s486
          %489 = dma.hbm_to_vmem [thread:$0]  %s12, 16, %s487, [#allocation21]
        $region60: #{tpu_custom_call.1} parent=11 // pred_fallthru
          _
      $region12: #{tpu_custom_call.1} parent=5 // pred_fallthru
        _
      %p490 = scmp.lt.s32.totalorder %s31, 4
      // Predicated region
      $region61: #{tpu_custom_call.1} parent=5 // pred_check
        %p491 = pneg %p490
      $region62: #{tpu_custom_call.1} parent=5 // pred_check_branch
        %493 = sbr.rel (%p491) target = $region64
      $region63: #{tpu_custom_call.1} parent=5 // pred_region
        // Predicated region
        $region65: #{tpu_custom_call.1} parent=63 // pred_check
          %p494 = pneg %p51
        $region66: #{tpu_custom_call.1} parent=63 // pred_check_branch
          %496 = sbr.rel (%p494) target = $region68
        $region67: #{tpu_custom_call.1} parent=63 // pred_region
          %s497 = sand.u32 %s41, 1
          %s498 = scalar_lea.sflag [#allocation3], %s497
          %s499 = sand.u32 %s41, 1
          %s500 = smul.addr %s499, 64
          %s501 = scalar_lea.vmem [#allocation2], %s500
          %s502 = smul.u32 4, %s31
          %s504 = ssub.s32 1024, 1024
          %505 = vsyncadd %s498, %s504
          %s506 = smul.addr %s502, 2
          %s507 = smul.addr %s506, 128
          %s508 = scalar_lea.hbm %s0, %s507
          %s509 = sshll.u32 %s501, 4
          %s510 = int_to_ptr.vmem [resolvable:$true] %s509
          %515 = dma.hbm_to_vmem [thread:$0]  %s508, 1024, %s510, %s498, 128, 128, 8
        $region68: #{tpu_custom_call.1} parent=63 // pred_fallthru
          _
      $region64: #{tpu_custom_call.1} parent=5 // pred_fallthru
        _
      %p516 = scmp.le.s32.totalorder 1, %s31
      %p517 = scmp.lt.s32.totalorder %s31, 5
      %p518 = pnand %p516, %p517
      %p519 = pneg %p518
      // Predicated region
      $region69: #{tpu_custom_call.1} parent=5 // pred_check
        _
      $region70: #{tpu_custom_call.1} parent=5 // pred_check_branch
        %521 = sbr.rel (%p518) target = $region72
      $region71: #{tpu_custom_call.1} parent=5 // pred_region
        %s522 = ssub.s32 %s31, 1
        %s523 = sand.u32 %s44, 1
        %s524 = scalar_lea.sflag [#allocation3], %s523
        %s525 = sand.u32 %s44, 1
        %s526 = smul.addr %s525, 64
        %s527 = scalar_lea.vmem [#allocation2], %s526
        // Predicated region
        $region73: #{tpu_custom_call.1} parent=71 // pred_check
          %p528 = pneg %p57
        $region74: #{tpu_custom_call.1} parent=71 // pred_check_branch
          %530 = sbr.rel (%p528) target = $region76
        $region75: #{tpu_custom_call.1} parent=71 // pred_region
          %531 = dma.done %s524, 1024
        $region76: #{tpu_custom_call.1} parent=71 // pred_fallthru
          _
        // Predicated region
        $region77: #{tpu_custom_call.1} parent=71 // pred_check
          %p532 = pneg %p78
        $region78: #{tpu_custom_call.1} parent=71 // pred_check_branch
          %534 = sbr.rel (%p532) target = $region80
        $region79: #{tpu_custom_call.1} parent=71 // pred_region
          %535 = dma.done [#allocation6], 16
        $region80: #{tpu_custom_call.1} parent=71 // pred_fallthru
          _
        // Predicated region
        $region81: #{tpu_custom_call.1} parent=71 // pred_check
          %p536 = pneg %p99
        $region82: #{tpu_custom_call.1} parent=71 // pred_check_branch
          %538 = sbr.rel (%p536) target = $region84
        $region83: #{tpu_custom_call.1} parent=71 // pred_region
          %539 = dma.done [#allocation6], 16
        $region84: #{tpu_custom_call.1} parent=71 // pred_fallthru
          _
        // Predicated region
        $region85: #{tpu_custom_call.1} parent=71 // pred_check
          %p540 = pneg %p120
        $region86: #{tpu_custom_call.1} parent=71 // pred_check_branch
          %542 = sbr.rel (%p540) target = $region88
        $region87: #{tpu_custom_call.1} parent=71 // pred_region
          %543 = dma.done [#allocation9], 3072
        $region88: #{tpu_custom_call.1} parent=71 // pred_fallthru
          _
        // Predicated region
        $region89: #{tpu_custom_call.1} parent=71 // pred_check
          %p544 = pneg %p141
        $region90: #{tpu_custom_call.1} parent=71 // pred_check_branch
          %546 = sbr.rel (%p544) target = $region92
        $region91: #{tpu_custom_call.1} parent=71 // pred_region
          %547 = dma.done [#allocation9], 48
        $region92: #{tpu_custom_call.1} parent=71 // pred_fallthru
          _
        // Predicated region
        $region93: #{tpu_custom_call.1} parent=71 // pred_check
          %p548 = pneg %p162
        $region94: #{tpu_custom_call.1} parent=71 // pred_check_branch
          %550 = sbr.rel (%p548) target = $region96
        $region95: #{tpu_custom_call.1} parent=71 // pred_region
          %551 = dma.done [#allocation12], 1024
        $region96: #{tpu_custom_call.1} parent=71 // pred_fallthru
          _
        // Predicated region
        $region97: #{tpu_custom_call.1} parent=71 // pred_check
          %p552 = pneg %p183
        $region98: #{tpu_custom_call.1} parent=71 // pred_check_branch
          %554 = sbr.rel (%p552) target = $region100
        $region99: #{tpu_custom_call.1} parent=71 // pred_region
          %555 = dma.done [#allocation12], 16
        $region100: #{tpu_custom_call.1} parent=71 // pred_fallthru
          _
        // Predicated region
        $region101: #{tpu_custom_call.1} parent=71 // pred_check
          %p556 = pneg %p204
        $region102: #{tpu_custom_call.1} parent=71 // pred_check_branch
          %558 = sbr.rel (%p556) target = $region104
        $region103: #{tpu_custom_call.1} parent=71 // pred_region
          %559 = dma.done [#allocation15], 16
        $region104: #{tpu_custom_call.1} parent=71 // pred_fallthru
          _
        // Predicated region
        $region105: #{tpu_custom_call.1} parent=71 // pred_check
          %p560 = pneg %p225
        $region106: #{tpu_custom_call.1} parent=71 // pred_check_branch
          %562 = sbr.rel (%p560) target = $region108
        $region107: #{tpu_custom_call.1} parent=71 // pred_region
          %563 = dma.done [#allocation15], 16
        $region108: #{tpu_custom_call.1} parent=71 // pred_fallthru
          _
        // Predicated region
        $region109: #{tpu_custom_call.1} parent=71 // pred_check
          %p564 = pneg %p246
        $region110: #{tpu_custom_call.1} parent=71 // pred_check_branch
          %566 = sbr.rel (%p564) target = $region112
        $region111: #{tpu_custom_call.1} parent=71 // pred_region
          %567 = dma.done [#allocation18], 4096
        $region112: #{tpu_custom_call.1} parent=71 // pred_fallthru
          _
        // Predicated region
        $region113: #{tpu_custom_call.1} parent=71 // pred_check
          %p568 = pneg %p267
        $region114: #{tpu_custom_call.1} parent=71 // pred_check_branch
          %570 = sbr.rel (%p568) target = $region116
        $region115: #{tpu_custom_call.1} parent=71 // pred_region
          %571 = dma.done [#allocation18], 64
        $region116: #{tpu_custom_call.1} parent=71 // pred_fallthru
          _
        // Predicated region
        $region117: #{tpu_custom_call.1} parent=71 // pred_check
          %p572 = pneg %p288
        $region118: #{tpu_custom_call.1} parent=71 // pred_check_branch
          %574 = sbr.rel (%p572) target = $region120
        $region119: #{tpu_custom_call.1} parent=71 // pred_region
          %575 = dma.done [#allocation21], 4096
        $region120: #{tpu_custom_call.1} parent=71 // pred_fallthru
          _
        // Predicated region
        $region121: #{tpu_custom_call.1} parent=71 // pred_check
          %p576 = pneg %p309
        $region122: #{tpu_custom_call.1} parent=71 // pred_check_branch
          %578 = sbr.rel (%p576) target = $region124
        $region123: #{tpu_custom_call.1} parent=71 // pred_region
          %579 = dma.done [#allocation21], 16
        $region124: #{tpu_custom_call.1} parent=71 // pred_fallthru
          _
        %s580 = sand.u32 %s44, 1
        %s581 = scalar_lea.sflag [#allocation3], %s580
        %s582 = sand.u32 %s44, 1
        %s583 = smul.addr %s582, 64
        %s584 = scalar_lea.vmem [#allocation2], %s583
        %p585 = pneg %p57
        %p586 = pneg %p54
        %p587 = pneg %p78
        %p588 = pneg %p75
        %p589 = pneg %p99
        %p590 = pneg %p96
        %p591 = pneg %p120
        %p592 = pneg %p117
        %p593 = pneg %p141
        %p594 = pneg %p138
        %p595 = pneg %p162
        %p596 = pneg %p159
        %p597 = pneg %p183
        %p598 = pneg %p180
        %p599 = pneg %p204
        %p600 = pneg %p201
        %p601 = pneg %p225
        %p602 = pneg %p222
        %p603 = pneg %p246
        %p604 = pneg %p243
        %p605 = pneg %p267
        %p606 = pneg %p264
        %p607 = pneg %p288
        %p608 = pneg %p285
        %p609 = pneg %p309
        %p610 = pneg %p306
        %p611 = pneg %p335
        %p612 = pneg %p332
        %s613 = sand.u32 %s322, 1
        %s614 = scalar_lea.sflag [#allocation4], %s613
        %s615 = sand.u32 %s322, 1
        %s616 = smul.addr %s615, 64
        %s617 = scalar_lea.vmem [#allocation23], %s616
        %s618 = smul.u32 4, %s36
        %s619 = smul.u32 4, %s36
        %v621 = vld [vmem:[%s527] sm:$0xff]
        %v622 = vld [vmem:[%s527 + $0x8] sm:$0xff]
        %v623 = vld [vmem:[%s527 + $0x10] sm:$0xff]
        %v624 = vld [vmem:[%s527 + $0x18] sm:$0xff]
        %v625 = vld [vmem:[%s527 + $0x20] sm:$0xff]
        %v626 = vld [vmem:[%s527 + $0x28] sm:$0xff]
        %v627 = vld [vmem:[%s527 + $0x30] sm:$0xff]
        %v628 = vld [vmem:[%s527 + $0x38] sm:$0xff]
        %v629 = vld [vmem:[#allocation5] sm:$0x1]
        %v630 = vld [vmem:[#allocation7] sm:$0x1]
        %631 = vadd.xlane.f32.xlu0 %v621
        %v632 = vpop.xlane.xlu0 %631
        %633 = vadd.xlane.f32.xlu0 %v622
        %v634 = vpop.xlane.xlu0 %633
        %635 = vadd.xlane.f32.xlu0 %v623
        %v636 = vpop.xlane.xlu0 %635
        %637 = vadd.xlane.f32.xlu0 %v624
        %v638 = vpop.xlane.xlu0 %637
        %639 = vadd.xlane.f32.xlu0 %v625
        %v640 = vpop.xlane.xlu0 %639
        %641 = vadd.xlane.f32.xlu0 %v626
        %v642 = vpop.xlane.xlu0 %641
        %643 = vadd.xlane.f32.xlu0 %v627
        %v644 = vpop.xlane.xlu0 %643
        %645 = vadd.xlane.f32.xlu0 %v628
        %v646 = vpop.xlane.xlu0 %645
        %v647 = vrcp.pop 128.0
        %v648 = vmul.f32 %v632, %v647
        %v649 = vmul.f32 %v634, %v647
        %v650 = vmul.f32 %v636, %v647
        %v651 = vmul.f32 %v638, %v647
        %v652 = vmul.f32 %v640, %v647
        %v653 = vmul.f32 %v642, %v647
        %v654 = vmul.f32 %v644, %v647
        %v655 = vmul.f32 %v646, %v647
        %v656 = vsub.f32 %v621, %v648
        %v657 = vsub.f32 %v622, %v649
        %v658 = vsub.f32 %v623, %v650
        %v659 = vsub.f32 %v624, %v651
        %v660 = vsub.f32 %v625, %v652
        %v661 = vsub.f32 %v626, %v653
        %v662 = vsub.f32 %v627, %v654
        %v663 = vsub.f32 %v628, %v655
        %v664 = vmul.f32 %v656, %v656
        %v665 = vmul.f32 %v657, %v657
        %v666 = vmul.f32 %v658, %v658
        %v667 = vmul.f32 %v659, %v659
        %v668 = vmul.f32 %v660, %v660
        %v669 = vmul.f32 %v661, %v661
        %v670 = vmul.f32 %v662, %v662
        %v671 = vmul.f32 %v663, %v663
        %672 = vadd.xlane.f32.xlu0 %v664
        %v673 = vpop.xlane.xlu0 %672
        %674 = vadd.xlane.f32.xlu0 %v665
        %v675 = vpop.xlane.xlu0 %674
        %676 = vadd.xlane.f32.xlu0 %v666
        %v677 = vpop.xlane.xlu0 %676
        %678 = vadd.xlane.f32.xlu0 %v667
        %v679 = vpop.xlane.xlu0 %678
        %680 = vadd.xlane.f32.xlu0 %v668
        %v681 = vpop.xlane.xlu0 %680
        %682 = vadd.xlane.f32.xlu0 %v669
        %v683 = vpop.xlane.xlu0 %682
        %684 = vadd.xlane.f32.xlu0 %v670
        %v685 = vpop.xlane.xlu0 %684
        %686 = vadd.xlane.f32.xlu0 %v671
        %v687 = vpop.xlane.xlu0 %686
        %v688 = vmul.f32 %v673, %v647
        %v689 = vmul.f32 %v675, %v647
        %v690 = vmul.f32 %v677, %v647
        %v691 = vmul.f32 %v679, %v647
        %v692 = vmul.f32 %v681, %v647
        %v693 = vmul.f32 %v683, %v647
        %v694 = vmul.f32 %v685, %v647
        %v695 = vmul.f32 %v687, %v647
        %v696 = vadd.f32 %v688, 1e-05
        %v697 = vadd.f32 %v689, 1e-05
        %v698 = vadd.f32 %v690, 1e-05
        %v699 = vadd.f32 %v691, 1e-05
        %v700 = vadd.f32 %v692, 1e-05
        %v701 = vadd.f32 %v693, 1e-05
        %v702 = vadd.f32 %v694, 1e-05
        %v703 = vadd.f32 %v695, 1e-05
        %v704 = vrsqrt.pop %v696
        %v705 = vrsqrt.pop %v697
        %v706 = vrsqrt.pop %v698
        %v707 = vrsqrt.pop %v699
        %v708 = vrsqrt.pop %v700
        %v709 = vrsqrt.pop %v701
        %v710 = vrsqrt.pop %v702
        %v711 = vrsqrt.pop %v703
        %v712 = vmul.f32 %v656, %v704
        %v713 = vmul.f32 %v657, %v705
        %v714 = vmul.f32 %v658, %v706
        %v715 = vmul.f32 %v659, %v707
        %v716 = vmul.f32 %v660, %v708
        %v717 = vmul.f32 %v661, %v709
        %v718 = vmul.f32 %v662, %v710
        %v719 = vmul.f32 %v663, %v711
        %v721 = vlaneseq
        %v722 = vshrl.u32 %v721, 7
        %v723 = vsub.s32 0, %v722
        %v724 = vrot.slane %v629, %v723
        %v726 = vmul.f32 %v712, %v724
        %v727 = vmul.f32 %v713, %v724
        %v728 = vmul.f32 %v714, %v724
        %v729 = vmul.f32 %v715, %v724
        %v730 = vmul.f32 %v716, %v724
        %v731 = vmul.f32 %v717, %v724
        %v732 = vmul.f32 %v718, %v724
        %v733 = vmul.f32 %v719, %v724
        %v735 = vlaneseq
        %v736 = vshrl.u32 %v735, 7
        %v737 = vsub.s32 0, %v736
        %v738 = vrot.slane %v630, %v737
        %v740 = vadd.f32 %v726, %v738
        %v741 = vadd.f32 %v727, %v738
        %v742 = vadd.f32 %v728, %v738
        %v743 = vadd.f32 %v729, %v738
        %v744 = vadd.f32 %v730, %v738
        %v745 = vadd.f32 %v731, %v738
        %v746 = vadd.f32 %v732, %v738
        %v747 = vadd.f32 %v733, %v738
        %v748 = vpack.c.bf16 %v741, %v740
        %v749 = vpack.c.bf16 %v743, %v742
        %v750 = vpack.c.bf16 %v745, %v744
        %v751 = vpack.c.bf16 %v747, %v746
        %v752 = vld [vmem:[#allocation8] sm:$0xff]
        %v753 = vld [vmem:[#allocation8 + $0x8] sm:$0xf]
        %v754 = vld [vmem:[#allocation8 + $0xc] sm:$0xff]
        %v755 = vld [vmem:[#allocation8 + $0x14] sm:$0xf]
        %v756 = vld [vmem:[#allocation8 + $0x18] sm:$0xff]
        %v757 = vld [vmem:[#allocation8 + $0x20] sm:$0xf]
        %v758 = vld [vmem:[#allocation8 + $0x24] sm:$0xff]
        %v759 = vld [vmem:[#allocation8 + $0x2c] sm:$0xf]
        %v760 = vld [vmem:[#allocation8 + $0x30] sm:$0xff]
        %v761 = vld [vmem:[#allocation8 + $0x38] sm:$0xf]
        %v762 = vld [vmem:[#allocation8 + $0x3c] sm:$0xff]
        %v763 = vld [vmem:[#allocation8 + $0x44] sm:$0xf]
        %v764 = vld [vmem:[#allocation8 + $0x48] sm:$0xff]
        %v765 = vld [vmem:[#allocation8 + $0x50] sm:$0xf]
        %v766 = vld [vmem:[#allocation8 + $0x54] sm:$0xff]
        %v767 = vld [vmem:[#allocation8 + $0x5c] sm:$0xf]
        %v768 = vld [vmem:[#allocation8 + $0x60] sm:$0xff]
        %v769 = vld [vmem:[#allocation8 + $0x68] sm:$0xf]
        %v770 = vld [vmem:[#allocation8 + $0x6c] sm:$0xff]
        %v771 = vld [vmem:[#allocation8 + $0x74] sm:$0xf]
        %v772 = vld [vmem:[#allocation8 + $0x78] sm:$0xff]
        %v773 = vld [vmem:[#allocation8 + $0x80] sm:$0xf]
        %v774 = vld [vmem:[#allocation8 + $0x84] sm:$0xff]
        %v775 = vld [vmem:[#allocation8 + $0x8c] sm:$0xf]
        %v776 = vld [vmem:[#allocation8 + $0x90] sm:$0xff]
        %v777 = vld [vmem:[#allocation8 + $0x98] sm:$0xf]
        %v778 = vld [vmem:[#allocation8 + $0x9c] sm:$0xff]
        %v779 = vld [vmem:[#allocation8 + $0xa4] sm:$0xf]
        %v780 = vld [vmem:[#allocation8 + $0xa8] sm:$0xff]
        %v781 = vld [vmem:[#allocation8 + $0xb0] sm:$0xf]
        %v782 = vld [vmem:[#allocation8 + $0xb4] sm:$0xff]
        %v783 = vld [vmem:[#allocation8 + $0xbc] sm:$0xf]
        %v784 = vld [vmem:[#allocation10] sm:$0x7]
        %v786 = vlaneseq
        %v787 = vshrl.u32 %v786, 7
        %v788 = vsub.s32 0, %v787
        %v789 = vrot.slane %v784, %v788
        %v790 = vlaneseq
        %v791 = vshrl.u32 %v790, 7
        %v792 = vsub.s32 1, %v791
        %v793 = vrot.slane %v784, %v792
        %v794 = vlaneseq
        %v795 = vshrl.u32 %v794, 7
        %v796 = vsub.s32 2, %v795
        %v797 = vrot.slane %v784, %v796
        %v833 = vunpack.c.l.b16 %v752
        %v834 = vunpack.c.h.b16 %v752
        %v835 = vunpack.c.l.b16 %v753
        %v836 = vunpack.c.l.b16 %v754
        %v837 = vunpack.c.h.b16 %v754
        %v838 = vunpack.c.l.b16 %v755
        %v839 = vunpack.c.l.b16 %v756
        %v840 = vunpack.c.h.b16 %v756
        %v841 = vunpack.c.l.b16 %v757
        %v842 = vunpack.c.l.b16 %v758
        %v843 = vunpack.c.h.b16 %v758
        %v844 = vunpack.c.l.b16 %v759
        %v845 = vunpack.c.l.b16 %v760
        %v846 = vunpack.c.h.b16 %v760
        %v847 = vunpack.c.l.b16 %v761
        %v848 = vunpack.c.l.b16 %v762
        %v849 = vunpack.c.h.b16 %v762
        %v850 = vunpack.c.l.b16 %v763
        %v851 = vunpack.c.l.b16 %v764
        %v852 = vunpack.c.h.b16 %v764
        %v853 = vunpack.c.l.b16 %v765
        %v854 = vunpack.c.l.b16 %v766
        %v855 = vunpack.c.h.b16 %v766
        %v856 = vunpack.c.l.b16 %v767
        %v857 = vunpack.c.l.b16 %v768
        %v858 = vunpack.c.h.b16 %v768
        %v859 = vunpack.c.l.b16 %v769
        %v860 = vunpack.c.l.b16 %v770
        %v861 = vunpack.c.h.b16 %v770
        %v862 = vunpack.c.l.b16 %v771
        %v863 = vunpack.c.l.b16 %v772
        %v864 = vunpack.c.h.b16 %v772
        %v865 = vunpack.c.l.b16 %v773
        %v866 = vunpack.c.l.b16 %v774
        %v867 = vunpack.c.h.b16 %v774
        %v868 = vunpack.c.l.b16 %v775
        %v869 = vunpack.c.l.b16 %v776
        %v870 = vunpack.c.h.b16 %v776
        %v871 = vunpack.c.l.b16 %v777
        %v872 = vunpack.c.l.b16 %v778
        %v873 = vunpack.c.h.b16 %v778
        %v874 = vunpack.c.l.b16 %v779
        %v875 = vunpack.c.l.b16 %v780
        %v876 = vunpack.c.h.b16 %v780
        %v877 = vunpack.c.l.b16 %v781
        %v878 = vunpack.c.l.b16 %v782
        %v879 = vunpack.c.h.b16 %v782
        %v880 = vunpack.c.l.b16 %v783
        %v881 = vpack.c.b16 %v836, %v833
        %v882 = vpack.c.b16 %v837, %v834
        %v883 = vpack.c.b16 %v838, %v835
        %v884 = vpack.c.b16 %v842, %v839
        %v885 = vpack.c.b16 %v843, %v840
        %v886 = vpack.c.b16 %v844, %v841
        %v887 = vpack.c.b16 %v848, %v845
        %v888 = vpack.c.b16 %v849, %v846
        %v889 = vpack.c.b16 %v850, %v847
        %v890 = vpack.c.b16 %v854, %v851
        %v891 = vpack.c.b16 %v855, %v852
        %v892 = vpack.c.b16 %v856, %v853
        %v893 = vpack.c.b16 %v860, %v857
        %v894 = vpack.c.b16 %v861, %v858
        %v895 = vpack.c.b16 %v862, %v859
        %v896 = vpack.c.b16 %v866, %v863
        %v897 = vpack.c.b16 %v867, %v864
        %v898 = vpack.c.b16 %v868, %v865
        %v899 = vpack.c.b16 %v872, %v869
        %v900 = vpack.c.b16 %v873, %v870
        %v901 = vpack.c.b16 %v874, %v871
        %v902 = vpack.c.b16 %v878, %v875
        %v903 = vpack.c.b16 %v879, %v876
        %v904 = vpack.c.b16 %v880, %v877
        %929 = vmatprep.subr.bf16.mxu0 %v882
        %930 = vmatpush1.bf16.msra.mxu0 %v881
        %931 = vmatprep.subr.bf16.mxu0 %v885
        %932 = vmatpush1.bf16.msra.mxu0 %v884
        %933 = vmatprep.subr.bf16.mxu0 %v888
        %934 = vmatpush1.bf16.msra.mxu0 %v887
        %935 = vmatprep.subr.bf16.mxu0 %v891
        %936 = vmatpush1.bf16.msra.mxu0 %v890
        %937 = vmatprep.subr.bf16.mxu0 %v894
        %938 = vmatpush1.bf16.msra.mxu0 %v893
        %939 = vmatprep.subr.bf16.mxu0 %v897
        %940 = vmatpush1.bf16.msra.mxu0 %v896
        %941 = vmatprep.subr.bf16.mxu0 %v900
        %942 = vmatpush1.bf16.msra.mxu0 %v899
        %943 = vmatprep.subr.bf16.mxu0 %v903
        %944 = vmatpush1.bf16.msra.mxu0 %v902
        %945 = vmatprep.subr.bf16.mxu0 0
        %946 = vmatpush1.bf16.msra.mxu0 0
        %947 = vmatprep.subr.bf16.mxu0 0
        %948 = vmatpush1.bf16.msra.mxu0 0
        %949 = vmatprep.subr.bf16.mxu0 0
        %950 = vmatpush1.bf16.msra.mxu0 0
        %951 = vmatprep.subr.bf16.mxu0 0
        %952 = vmatpush1.bf16.msra.mxu0 0
        %953 = vmatprep.subr.bf16.mxu0 0
        %954 = vmatpush1.bf16.msra.mxu0 0
        %955 = vmatprep.subr.bf16.mxu0 0
        %956 = vmatpush1.bf16.msra.mxu0 0
        %957 = vmatprep.subr.bf16.mxu0 0
        %958 = vmatpush1.bf16.msra.mxu0 0
        %959 = vmatprep.subr.bf16.mxu0 0
        %960 = vmatpush1.bf16.msra.mxu0 0
        %961 = vmatprep.mubr.bf16.mxu0 0
        %962 = vmatmul.mubr.bf16.gmra.mrb[0].mxu0 %v748
        %v963 = vpop.f32.mrb[0].mxu0
        %v964 = vadd.f32 %v789, %v963
        %v965 = vpop.f32.mrb[0].mxu0
        %v966 = vadd.f32 %v793, %v965
        %v967 = vpop.f32.mrb[0].mxu0
        %v968 = vadd.f32 %v789, %v967
        %v969 = vpop.f32.mrb[0].mxu0
        %v970 = vadd.f32 %v793, %v969
        %971 = vmatprep.mubr.bf16.mxu0 0
        %972 = vmatmul.mubr.bf16.gmra.mrb[0].mxu0 %v749
        %v973 = vpop.f32.mrb[0].mxu0
        %v974 = vadd.f32 %v789, %v973
        %v975 = vpop.f32.mrb[0].mxu0
        %v976 = vadd.f32 %v793, %v975
        %v977 = vpop.f32.mrb[0].mxu0
        %v978 = vadd.f32 %v789, %v977
        %v979 = vpop.f32.mrb[0].mxu0
        %v980 = vadd.f32 %v793, %v979
        %981 = vmatprep.mubr.bf16.mxu0 0
        %982 = vmatmul.mubr.bf16.gmra.mrb[0].mxu0 %v750
        %v983 = vpop.f32.mrb[0].mxu0
        %v984 = vadd.f32 %v789, %v983
        %v985 = vpop.f32.mrb[0].mxu0
        %v986 = vadd.f32 %v793, %v985
        %v987 = vpop.f32.mrb[0].mxu0
        %v988 = vadd.f32 %v789, %v987
        %v989 = vpop.f32.mrb[0].mxu0
        %v990 = vadd.f32 %v793, %v989
        %991 = vmatprep.mubr.bf16.mxu0 0
        %992 = vmatmul.mubr.bf16.gmra.mrb[0].mxu0 %v751
        %v993 = vpop.f32.mrb[0].mxu0
        %v994 = vadd.f32 %v789, %v993
        %v995 = vpop.f32.mrb[0].mxu0
        %v996 = vadd.f32 %v793, %v995
        %v997 = vpop.f32.mrb[0].mxu0
        %v998 = vadd.f32 %v789, %v997
        %v999 = vpop.f32.mrb[0].mxu0
        %v1000 = vadd.f32 %v793, %v999
        %1001 = vdwg.mxu0
        %1002 = vmatprep.subr.bf16.mxu0 0
        %1003 = vmatpush1.bf16.msra.mxu0 %v883
        %1004 = vmatprep.subr.bf16.mxu0 0
        %1005 = vmatpush1.bf16.msra.mxu0 %v886
        %1006 = vmatprep.subr.bf16.mxu0 0
        %1007 = vmatpush1.bf16.msra.mxu0 %v889
        %1008 = vmatprep.subr.bf16.mxu0 0
        %1009 = vmatpush1.bf16.msra.mxu0 %v892
        %1010 = vmatprep.subr.bf16.mxu0 0
        %1011 = vmatpush1.bf16.msra.mxu0 %v895
        %1012 = vmatprep.subr.bf16.mxu0 0
        %1013 = vmatpush1.bf16.msra.mxu0 %v898
        %1014 = vmatprep.subr.bf16.mxu0 0
        %1015 = vmatpush1.bf16.msra.mxu0 %v901
        %1016 = vmatprep.subr.bf16.mxu0 0
        %1017 = vmatpush1.bf16.msra.mxu0 %v904
        %1018 = vmatprep.subr.bf16.mxu0 0
        %1019 = vmatpush1.bf16.msra.mxu0 0
        %1020 = vmatprep.subr.bf16.mxu0 0
        %1021 = vmatpush1.bf16.msra.mxu0 0
        %1022 = vmatprep.subr.bf16.mxu0 0
        %1023 = vmatpush1.bf16.msra.mxu0 0
        %1024 = vmatprep.subr.bf16.mxu0 0
        %1025 = vmatpush1.bf16.msra.mxu0 0
        %1026 = vmatprep.subr.bf16.mxu0 0
        %1027 = vmatpush1.bf16.msra.mxu0 0
        %1028 = vmatprep.subr.bf16.mxu0 0
        %1029 = vmatpush1.bf16.msra.mxu0 0
        %1030 = vmatprep.subr.bf16.mxu0 0
        %1031 = vmatpush1.bf16.msra.mxu0 0
        %1032 = vmatprep.subr.bf16.mxu0 0
        %1033 = vmatpush1.bf16.msra.mxu0 0
        %1034 = vmatprep.mubr.bf16.mxu0 0
        %1035 = vmatmul.mubr.bf16.gmra.mrb[0].mxu0 %v748
        %v1036 = vpop.f32.mrb[0].mxu0
        %v1037 = vadd.f32 %v797, %v1036
        %v1038 = vpop.f32.mrb[0].mxu0
        %v1039 = vpop.f32.mrb[0].mxu0
        %v1040 = vadd.f32 %v797, %v1039
        %v1041 = vpop.f32.mrb[0].mxu0
        %1042 = vmatprep.mubr.bf16.mxu0 0
        %1043 = vmatmul.mubr.bf16.gmra.mrb[0].mxu0 %v749
        %v1044 = vpop.f32.mrb[0].mxu0
        %v1045 = vadd.f32 %v797, %v1044
        %v1046 = vpop.f32.mrb[0].mxu0
        %v1047 = vpop.f32.mrb[0].mxu0
        %v1048 = vadd.f32 %v797, %v1047
        %v1049 = vpop.f32.mrb[0].mxu0
        %1050 = vmatprep.mubr.bf16.mxu0 0
        %1051 = vmatmul.mubr.bf16.gmra.mrb[0].mxu0 %v750
        %v1052 = vpop.f32.mrb[0].mxu0
        %v1053 = vadd.f32 %v797, %v1052
        %v1054 = vpop.f32.mrb[0].mxu0
        %v1055 = vpop.f32.mrb[0].mxu0
        %v1056 = vadd.f32 %v797, %v1055
        %v1057 = vpop.f32.mrb[0].mxu0
        %1058 = vmatprep.mubr.bf16.mxu0 0
        %1059 = vmatmul.mubr.bf16.gmra.mrb[0].mxu0 %v751
        %v1060 = vpop.f32.mrb[0].mxu0
        %v1061 = vadd.f32 %v797, %v1060
        %v1062 = vpop.f32.mrb[0].mxu0
        %v1063 = vpop.f32.mrb[0].mxu0
        %v1064 = vadd.f32 %v797, %v1063
        %v1065 = vpop.f32.mrb[0].mxu0
        %1066 = vdwg.mxu0
        %v1067 = vmul.f32 %v964, 0.17677669
        %v1068 = vmul.f32 %v968, 0.17677669
        %v1069 = vmul.f32 %v974, 0.17677669
        %v1070 = vmul.f32 %v978, 0.17677669
        %v1071 = vmul.f32 %v984, 0.17677669
        %v1072 = vmul.f32 %v988, 0.17677669
        %v1073 = vmul.f32 %v994, 0.17677669
        %v1074 = vmul.f32 %v998, 0.17677669
        %v1075 = vpack.c.bf16 %v1068, %v1067
        %v1076 = vpack.c.bf16 %v1070, %v1069
        %v1077 = vpack.c.bf16 %v1072, %v1071
        %v1078 = vpack.c.bf16 %v1074, %v1073
        %v1079 = vpack.c.bf16 %v970, %v966
        %v1080 = vpack.c.bf16 %v980, %v976
        %v1081 = vpack.c.bf16 %v990, %v986
        %v1082 = vpack.c.bf16 %v1000, %v996
        %v1083 = vpack.c.bf16 %v1040, %v1037
        %v1084 = vpack.c.bf16 %v1048, %v1045
        %v1085 = vpack.c.bf16 %v1056, %v1053
        %v1086 = vpack.c.bf16 %v1064, %v1061
        %v1087 = vlaneseq
        %v1088 = vshrl.u32 %v1087, 7
        %v1089 = vadd.s32 %v1088, 8
        %v1090 = vlaneseq
        %v1091 = vand.u32 %v1090, 127
        %vm1092 = vcmp.ge.s32.totalorder %v1088, %v1091
        %vm1093 = vcmp.ge.s32.totalorder %v1089, %v1091
        %vm1094 = vcmask 261120
        %v1096 = vsel %vm1094, %v1075, 0
        %v1099 = vsel %vm1094, %v1079, 0
        %1101 = vmatprep.subr.bf16.mxu0 0
        %1102 = vmatpush1.bf16.xpose.msra.mxu0 %v1099
        %1103 = vmatprep.subr.bf16.mxu0 0
        %1104 = vmatpush1.bf16.xpose.msra.mxu0 0
        %1105 = vmatprep.subr.bf16.mxu0 0
        %1106 = vmatpush1.bf16.xpose.msra.mxu0 0
        %1107 = vmatprep.subr.bf16.mxu0 0
        %1108 = vmatpush1.bf16.xpose.msra.mxu0 0
        %1109 = vmatprep.subr.bf16.mxu0 0
        %1110 = vmatpush1.bf16.xpose.msra.mxu0 0
        %1111 = vmatprep.subr.bf16.mxu0 0
        %1112 = vmatpush1.bf16.xpose.msra.mxu0 0
        %1113 = vmatprep.subr.bf16.mxu0 0
        %1114 = vmatpush1.bf16.xpose.msra.mxu0 0
        %1115 = vmatprep.subr.bf16.mxu0 0
        %1116 = vmatpush1.bf16.xpose.msra.mxu0 0
        %1117 = vmatprep.subr.bf16.mxu0 0
        %1118 = vmatpush1.bf16.xpose.msra.mxu0 0
        %1119 = vmatprep.subr.bf16.mxu0 0
        %1120 = vmatpush1.bf16.xpose.msra.mxu0 0
        %1121 = vmatprep.subr.bf16.mxu0 0
        %1122 = vmatpush1.bf16.xpose.msra.mxu0 0
        %1123 = vmatprep.subr.bf16.mxu0 0
        %1124 = vmatpush1.bf16.xpose.msra.mxu0 0
        %1125 = vmatprep.subr.bf16.mxu0 0
        %1126 = vmatpush1.bf16.xpose.msra.mxu0 0
        %1127 = vmatprep.subr.bf16.mxu0 0
        %1128 = vmatpush1.bf16.xpose.msra.mxu0 0
        %1129 = vmatprep.subr.bf16.mxu0 0
        %1130 = vmatpush1.bf16.xpose.msra.mxu0 0
        %1131 = vmatprep.subr.bf16.mxu0 0
        %1132 = vmatpush1.bf16.xpose.msra.mxu0 0
        %1133 = vmatprep.mubr.bf16.mxu0 0
        %1134 = vmatmul.mubr.bf16.gmra.mrb[0].mxu0 %v1096
        %v1135 = vpop.f32.mrb[0].mxu0
        %v1136 = vadd.f32 0.0, %v1135
        %v1137 = vpop.f32.mrb[0].mxu0
        %v1138 = vpop.f32.mrb[0].mxu0
        %v1139 = vadd.f32 0.0, %v1138
        %v1140 = vpop.f32.mrb[0].mxu0
        %1141 = vdwg.mxu0
        %v1143 = vsel %vm1094, %v1076, 0
        %v1146 = vsel %vm1094, %v1080, 0
        %1148 = vmatprep.subr.bf16.mxu0 0
        %1149 = vmatpush1.bf16.xpose.msra.mxu0 %v1146
        %1150 = vmatprep.subr.bf16.mxu0 0
        %1151 = vmatpush1.bf16.xpose.msra.mxu0 0
        %1152 = vmatprep.subr.bf16.mxu0 0
        %1153 = vmatpush1.bf16.xpose.msra.mxu0 0
        %1154 = vmatprep.subr.bf16.mxu0 0
        %1155 = vmatpush1.bf16.xpose.msra.mxu0 0
        %1156 = vmatprep.subr.bf16.mxu0 0
        %1157 = vmatpush1.bf16.xpose.msra.mxu0 0
        %1158 = vmatprep.subr.bf16.mxu0 0
        %1159 = vmatpush1.bf16.xpose.msra.mxu0 0
        %1160 = vmatprep.subr.bf16.mxu0 0
        %1161 = vmatpush1.bf16.xpose.msra.mxu0 0
        %1162 = vmatprep.subr.bf16.mxu0 0
        %1163 = vmatpush1.bf16.xpose.msra.mxu0 0
        %1164 = vmatprep.subr.bf16.mxu0 0
        %1165 = vmatpush1.bf16.xpose.msra.mxu0 0
        %1166 = vmatprep.subr.bf16.mxu0 0
        %1167 = vmatpush1.bf16.xpose.msra.mxu0 0
        %1168 = vmatprep.subr.bf16.mxu0 0
        %1169 = vmatpush1.bf16.xpose.msra.mxu0 0
        %1170 = vmatprep.subr.bf16.mxu0 0
        %1171 = vmatpush1.bf16.xpose.msra.mxu0 0
        %1172 = vmatprep.subr.bf16.mxu0 0
        %1173 = vmatpush1.bf16.xpose.msra.mxu0 0
        %1174 = vmatprep.subr.bf16.mxu0 0
        %1175 = vmatpush1.bf16.xpose.msra.mxu0 0
        %1176 = vmatprep.subr.bf16.mxu0 0
        %1177 = vmatpush1.bf16.xpose.msra.mxu0 0
        %1178 = vmatprep.subr.bf16.mxu0 0
        %1179 = vmatpush1.bf16.xpose.msra.mxu0 0
        %1180 = vmatprep.mubr.bf16.mxu0 0
        %1181 = vmatmul.mubr.bf16.gmra.mrb[0].mxu0 %v1143
        %v1182 = vpop.f32.mrb[0].mxu0
        %v1183 = vadd.f32 0.0, %v1182
        %v1184 = vpop.f32.mrb[0].mxu0
        %v1185 = vpop.f32.mrb[0].mxu0
        %v1186 = vadd.f32 0.0, %v1185
        %v1187 = vpop.f32.mrb[0].mxu0
        %1188 = vdwg.mxu0
        %v1190 = vsel %vm1094, %v1077, 0
        %v1193 = vsel %vm1094, %v1081, 0
        %1195 = vmatprep.subr.bf16.mxu0 0
        %1196 = vmatpush1.bf16.xpose.msra.mxu0 %v1193
        %1197 = vmatprep.subr.bf16.mxu0 0
        %1198 = vmatpush1.bf16.xpose.msra.mxu0 0
        %1199 = vmatprep.subr.bf16.mxu0 0
        %1200 = vmatpush1.bf16.xpose.msra.mxu0 0
        %1201 = vmatprep.subr.bf16.mxu0 0
        %1202 = vmatpush1.bf16.xpose.msra.mxu0 0
        %1203 = vmatprep.subr.bf16.mxu0 0
        %1204 = vmatpush1.bf16.xpose.msra.mxu0 0
        %1205 = vmatprep.subr.bf16.mxu0 0
        %1206 = vmatpush1.bf16.xpose.msra.mxu0 0
        %1207 = vmatprep.subr.bf16.mxu0 0
        %1208 = vmatpush1.bf16.xpose.msra.mxu0 0
        %1209 = vmatprep.subr.bf16.mxu0 0
        %1210 = vmatpush1.bf16.xpose.msra.mxu0 0
        %1211 = vmatprep.subr.bf16.mxu0 0
        %1212 = vmatpush1.bf16.xpose.msra.mxu0 0
        %1213 = vmatprep.subr.bf16.mxu0 0
        %1214 = vmatpush1.bf16.xpose.msra.mxu0 0
        %1215 = vmatprep.subr.bf16.mxu0 0
        %1216 = vmatpush1.bf16.xpose.msra.mxu0 0
        %1217 = vmatprep.subr.bf16.mxu0 0
        %1218 = vmatpush1.bf16.xpose.msra.mxu0 0
        %1219 = vmatprep.subr.bf16.mxu0 0
        %1220 = vmatpush1.bf16.xpose.msra.mxu0 0
        %1221 = vmatprep.subr.bf16.mxu0 0
        %1222 = vmatpush1.bf16.xpose.msra.mxu0 0
        %1223 = vmatprep.subr.bf16.mxu0 0
        %1224 = vmatpush1.bf16.xpose.msra.mxu0 0
        %1225 = vmatprep.subr.bf16.mxu0 0
        %1226 = vmatpush1.bf16.xpose.msra.mxu0 0
        %1227 = vmatprep.mubr.bf16.mxu0 0
        %1228 = vmatmul.mubr.bf16.gmra.mrb[0].mxu0 %v1190
        %v1229 = vpop.f32.mrb[0].mxu0
        %v1230 = vadd.f32 0.0, %v1229
        %v1231 = vpop.f32.mrb[0].mxu0
        %v1232 = vpop.f32.mrb[0].mxu0
        %v1233 = vadd.f32 0.0, %v1232
        %v1234 = vpop.f32.mrb[0].mxu0
        %1235 = vdwg.mxu0
        %v1237 = vsel %vm1094, %v1078, 0
        %v1240 = vsel %vm1094, %v1082, 0
        %1242 = vmatprep.subr.bf16.mxu0 0
        %1243 = vmatpush1.bf16.xpose.msra.mxu0 %v1240
        %1244 = vmatprep.subr.bf16.mxu0 0
        %1245 = vmatpush1.bf16.xpose.msra.mxu0 0
        %1246 = vmatprep.subr.bf16.mxu0 0
        %1247 = vmatpush1.bf16.xpose.msra.mxu0 0
        %1248 = vmatprep.subr.bf16.mxu0 0
        %1249 = vmatpush1.bf16.xpose.msra.mxu0 0
        %1250 = vmatprep.subr.bf16.mxu0 0
        %1251 = vmatpush1.bf16.xpose.msra.mxu0 0
        %1252 = vmatprep.subr.bf16.mxu0 0
        %1253 = vmatpush1.bf16.xpose.msra.mxu0 0
        %1254 = vmatprep.subr.bf16.mxu0 0
        %1255 = vmatpush1.bf16.xpose.msra.mxu0 0
        %1256 = vmatprep.subr.bf16.mxu0 0
        %1257 = vmatpush1.bf16.xpose.msra.mxu0 0
        %1258 = vmatprep.subr.bf16.mxu0 0
        %1259 = vmatpush1.bf16.xpose.msra.mxu0 0
        %1260 = vmatprep.subr.bf16.mxu0 0
        %1261 = vmatpush1.bf16.xpose.msra.mxu0 0
        %1262 = vmatprep.subr.bf16.mxu0 0
        %1263 = vmatpush1.bf16.xpose.msra.mxu0 0
        %1264 = vmatprep.subr.bf16.mxu0 0
        %1265 = vmatpush1.bf16.xpose.msra.mxu0 0
        %1266 = vmatprep.subr.bf16.mxu0 0
        %1267 = vmatpush1.bf16.xpose.msra.mxu0 0
        %1268 = vmatprep.subr.bf16.mxu0 0
        %1269 = vmatpush1.bf16.xpose.msra.mxu0 0
        %1270 = vmatprep.subr.bf16.mxu0 0
        %1271 = vmatpush1.bf16.xpose.msra.mxu0 0
        %1272 = vmatprep.subr.bf16.mxu0 0
        %1273 = vmatpush1.bf16.xpose.msra.mxu0 0
        %1274 = vmatprep.mubr.bf16.mxu0 0
        %1275 = vmatmul.mubr.bf16.gmra.mrb[0].mxu0 %v1237
        %v1276 = vpop.f32.mrb[0].mxu0
        %v1277 = vadd.f32 0.0, %v1276
        %v1278 = vpop.f32.mrb[0].mxu0
        %v1279 = vpop.f32.mrb[0].mxu0
        %v1280 = vadd.f32 0.0, %v1279
        %v1281 = vpop.f32.mrb[0].mxu0
        %1282 = vdwg.mxu0
        %v1283 = vsel %vm1092, 1, 0
        %v1284 = vsel %vm1093, 1, 0
        %vm1285 = vcmp.eq.s32.totalorder %v1283, 1
        %vm1286 = vcmp.eq.s32.totalorder %v1284, 1
        %v1287 = vsel %vm1285, %v1136, -1.7677669e+09
        %v1288 = vsel %vm1286, %v1139, -1.7677669e+09
        %v1289 = vsel %vm1285, %v1183, -1.7677669e+09
        %v1290 = vsel %vm1286, %v1186, -1.7677669e+09
        %v1291 = vsel %vm1285, %v1230, -1.7677669e+09
        %v1292 = vsel %vm1286, %v1233, -1.7677669e+09
        %v1293 = vsel %vm1285, %v1277, -1.7677669e+09
        %v1294 = vsel %vm1286, %v1280, -1.7677669e+09
        %vm1295 = vcmask 130048
        %v1296 = vsel %vm1295, %v1287, -inf
        %1297 = vmax.xlane.f32.xlu0 %v1296
        %v1298 = vpop.xlane.xlu0 %1297
        %v1299 = vsel %vm1295, %v1288, -inf
        %1300 = vmax.xlane.f32.xlu0 %v1299
        %v1301 = vpop.xlane.xlu0 %1300
        %v1302 = vsel %vm1295, %v1289, -inf
        %1303 = vmax.xlane.f32.xlu0 %v1302
        %v1304 = vpop.xlane.xlu0 %1303
        %v1305 = vsel %vm1295, %v1290, -inf
        %1306 = vmax.xlane.f32.xlu0 %v1305
        %v1307 = vpop.xlane.xlu0 %1306
        %v1308 = vsel %vm1295, %v1291, -inf
        %1309 = vmax.xlane.f32.xlu0 %v1308
        %v1310 = vpop.xlane.xlu0 %1309
        %v1311 = vsel %vm1295, %v1292, -inf
        %1312 = vmax.xlane.f32.xlu0 %v1311
        %v1313 = vpop.xlane.xlu0 %1312
        %v1314 = vsel %vm1295, %v1293, -inf
        %1315 = vmax.xlane.f32.xlu0 %v1314
        %v1316 = vpop.xlane.xlu0 %1315
        %v1317 = vsel %vm1295, %v1294, -inf
        %1318 = vmax.xlane.f32.xlu0 %v1317
        %v1319 = vpop.xlane.xlu0 %1318
        %v1320 = vsub.f32 %v1287, %v1298
        %v1321 = vsub.f32 %v1288, %v1301
        %v1322 = vsub.f32 %v1289, %v1304
        %v1323 = vsub.f32 %v1290, %v1307
        %v1324 = vsub.f32 %v1291, %v1310
        %v1325 = vsub.f32 %v1292, %v1313
        %v1326 = vsub.f32 %v1293, %v1316
        %v1327 = vsub.f32 %v1294, %v1319
        %v1328 = vmul.f32 %v1320, 1.442695
        %v1329 = vpow.pop %v1328
        %v1330 = vmul.f32 %v1321, 1.442695
        %v1331 = vpow.pop %v1330
        %v1332 = vmul.f32 %v1322, 1.442695
        %v1333 = vpow.pop %v1332
        %v1334 = vmul.f32 %v1323, 1.442695
        %v1335 = vpow.pop %v1334
        %v1336 = vmul.f32 %v1324, 1.442695
        %v1337 = vpow.pop %v1336
        %v1338 = vmul.f32 %v1325, 1.442695
        %v1339 = vpow.pop %v1338
        %v1340 = vmul.f32 %v1326, 1.442695
        %v1341 = vpow.pop %v1340
        %v1342 = vmul.f32 %v1327, 1.442695
        %v1343 = vpow.pop %v1342
        %v1344 = vsel %vm1295, %v1329, 0.0
        %1345 = vadd.xlane.f32.xlu0 %v1344
        %v1346 = vpop.xlane.xlu0 %1345
        %v1347 = vsel %vm1295, %v1331, 0.0
        %1348 = vadd.xlane.f32.xlu0 %v1347
        %v1349 = vpop.xlane.xlu0 %1348
        %v1350 = vsel %vm1295, %v1333, 0.0
        %1351 = vadd.xlane.f32.xlu0 %v1350
        %v1352 = vpop.xlane.xlu0 %1351
        %v1353 = vsel %vm1295, %v1335, 0.0
        %1354 = vadd.xlane.f32.xlu0 %v1353
        %v1355 = vpop.xlane.xlu0 %1354
        %v1356 = vsel %vm1295, %v1337, 0.0
        %1357 = vadd.xlane.f32.xlu0 %v1356
        %v1358 = vpop.xlane.xlu0 %1357
        %v1359 = vsel %vm1295, %v1339, 0.0
        %1360 = vadd.xlane.f32.xlu0 %v1359
        %v1361 = vpop.xlane.xlu0 %1360
        %v1362 = vsel %vm1295, %v1341, 0.0
        %1363 = vadd.xlane.f32.xlu0 %v1362
        %v1364 = vpop.xlane.xlu0 %1363
        %v1365 = vsel %vm1295, %v1343, 0.0
        %1366 = vadd.xlane.f32.xlu0 %v1365
        %v1367 = vpop.xlane.xlu0 %1366
        %v1368 = vrcp.pop %v1346
        %v1369 = vrcp.pop %v1349
        %v1370 = vrcp.pop %v1352
        %v1371 = vrcp.pop %v1355
        %v1372 = vrcp.pop %v1358
        %v1373 = vrcp.pop %v1361
        %v1374 = vrcp.pop %v1364
        %v1375 = vrcp.pop %v1367
        %v1376 = vmul.f32 %v1329, %v1368
        %v1377 = vmul.f32 %v1331, %v1369
        %v1378 = vmul.f32 %v1333, %v1370
        %v1379 = vmul.f32 %v1335, %v1371
        %v1380 = vmul.f32 %v1337, %v1372
        %v1381 = vmul.f32 %v1339, %v1373
        %v1382 = vmul.f32 %v1341, %v1374
        %v1383 = vmul.f32 %v1343, %v1375
        %v1384 = vpack.c.bf16 %v1377, %v1376
        %v1385 = vpack.c.bf16 %v1379, %v1378
        %v1386 = vpack.c.bf16 %v1381, %v1380
        %v1387 = vpack.c.bf16 %v1383, %v1382
        %v1389 = vsel %vm1295, %v1384, 0
        %1391 = vmatprep.subr.bf16.mxu0 0
        %1392 = vmatpush1.bf16.msra.mxu0 %v1083
        %1393 = vmatprep.subr.bf16.mxu0 0
        %1394 = vmatpush1.bf16.msra.mxu0 0
        %1395 = vmatprep.subr.bf16.mxu0 0
        %1396 = vmatpush1.bf16.msra.mxu0 0
        %1397 = vmatprep.subr.bf16.mxu0 0
        %1398 = vmatpush1.bf16.msra.mxu0 0
        %1399 = vmatprep.subr.bf16.mxu0 0
        %1400 = vmatpush1.bf16.msra.mxu0 0
        %1401 = vmatprep.subr.bf16.mxu0 0
        %1402 = vmatpush1.bf16.msra.mxu0 0
        %1403 = vmatprep.subr.bf16.mxu0 0
        %1404 = vmatpush1.bf16.msra.mxu0 0
        %1405 = vmatprep.subr.bf16.mxu0 0
        %1406 = vmatpush1.bf16.msra.mxu0 0
        %1407 = vmatprep.subr.bf16.mxu0 0
        %1408 = vmatpush1.bf16.msra.mxu0 0
        %1409 = vmatprep.subr.bf16.mxu0 0
        %1410 = vmatpush1.bf16.msra.mxu0 0
        %1411 = vmatprep.subr.bf16.mxu0 0
        %1412 = vmatpush1.bf16.msra.mxu0 0
        %1413 = vmatprep.subr.bf16.mxu0 0
        %1414 = vmatpush1.bf16.msra.mxu0 0
        %1415 = vmatprep.subr.bf16.mxu0 0
        %1416 = vmatpush1.bf16.msra.mxu0 0
        %1417 = vmatprep.subr.bf16.mxu0 0
        %1418 = vmatpush1.bf16.msra.mxu0 0
        %1419 = vmatprep.subr.bf16.mxu0 0
        %1420 = vmatpush1.bf16.msra.mxu0 0
        %1421 = vmatprep.subr.bf16.mxu0 0
        %1422 = vmatpush1.bf16.msra.mxu0 0
        %1423 = vmatprep.mubr.bf16.mxu0 0
        %1424 = vmatmul.mubr.bf16.gmra.mrb[0].mxu0 %v1389
        %v1425 = vpop.f32.mrb[0].mxu0
        %v1426 = vadd.f32 0.0, %v1425
        %v1427 = vpop.f32.mrb[0].mxu0
        %v1428 = vpop.f32.mrb[0].mxu0
        %v1429 = vadd.f32 0.0, %v1428
        %v1430 = vpop.f32.mrb[0].mxu0
        %1431 = vdwg.mxu0
        %v1433 = vsel %vm1295, %v1385, 0
        %1435 = vmatprep.subr.bf16.mxu0 0
        %1436 = vmatpush1.bf16.msra.mxu0 %v1084
        %1437 = vmatprep.subr.bf16.mxu0 0
        %1438 = vmatpush1.bf16.msra.mxu0 0
        %1439 = vmatprep.subr.bf16.mxu0 0
        %1440 = vmatpush1.bf16.msra.mxu0 0
        %1441 = vmatprep.subr.bf16.mxu0 0
        %1442 = vmatpush1.bf16.msra.mxu0 0
        %1443 = vmatprep.subr.bf16.mxu0 0
        %1444 = vmatpush1.bf16.msra.mxu0 0
        %1445 = vmatprep.subr.bf16.mxu0 0
        %1446 = vmatpush1.bf16.msra.mxu0 0
        %1447 = vmatprep.subr.bf16.mxu0 0
        %1448 = vmatpush1.bf16.msra.mxu0 0
        %1449 = vmatprep.subr.bf16.mxu0 0
        %1450 = vmatpush1.bf16.msra.mxu0 0
        %1451 = vmatprep.subr.bf16.mxu0 0
        %1452 = vmatpush1.bf16.msra.mxu0 0
        %1453 = vmatprep.subr.bf16.mxu0 0
        %1454 = vmatpush1.bf16.msra.mxu0 0
        %1455 = vmatprep.subr.bf16.mxu0 0
        %1456 = vmatpush1.bf16.msra.mxu0 0
        %1457 = vmatprep.subr.bf16.mxu0 0
        %1458 = vmatpush1.bf16.msra.mxu0 0
        %1459 = vmatprep.subr.bf16.mxu0 0
        %1460 = vmatpush1.bf16.msra.mxu0 0
        %1461 = vmatprep.subr.bf16.mxu0 0
        %1462 = vmatpush1.bf16.msra.mxu0 0
        %1463 = vmatprep.subr.bf16.mxu0 0
        %1464 = vmatpush1.bf16.msra.mxu0 0
        %1465 = vmatprep.subr.bf16.mxu0 0
        %1466 = vmatpush1.bf16.msra.mxu0 0
        %1467 = vmatprep.mubr.bf16.mxu0 0
        %1468 = vmatmul.mubr.bf16.gmra.mrb[0].mxu0 %v1433
        %v1469 = vpop.f32.mrb[0].mxu0
        %v1470 = vadd.f32 0.0, %v1469
        %v1471 = vpop.f32.mrb[0].mxu0
        %v1472 = vpop.f32.mrb[0].mxu0
        %v1473 = vadd.f32 0.0, %v1472
        %v1474 = vpop.f32.mrb[0].mxu0
        %1475 = vdwg.mxu0
        %v1477 = vsel %vm1295, %v1386, 0
        %1479 = vmatprep.subr.bf16.mxu0 0
        %1480 = vmatpush1.bf16.msra.mxu0 %v1085
        %1481 = vmatprep.subr.bf16.mxu0 0
        %1482 = vmatpush1.bf16.msra.mxu0 0
        %1483 = vmatprep.subr.bf16.mxu0 0
        %1484 = vmatpush1.bf16.msra.mxu0 0
        %1485 = vmatprep.subr.bf16.mxu0 0
        %1486 = vmatpush1.bf16.msra.mxu0 0
        %1487 = vmatprep.subr.bf16.mxu0 0
        %1488 = vmatpush1.bf16.msra.mxu0 0
        %1489 = vmatprep.subr.bf16.mxu0 0
        %1490 = vmatpush1.bf16.msra.mxu0 0
        %1491 = vmatprep.subr.bf16.mxu0 0
        %1492 = vmatpush1.bf16.msra.mxu0 0
        %1493 = vmatprep.subr.bf16.mxu0 0
        %1494 = vmatpush1.bf16.msra.mxu0 0
        %1495 = vmatprep.subr.bf16.mxu0 0
        %1496 = vmatpush1.bf16.msra.mxu0 0
        %1497 = vmatprep.subr.bf16.mxu0 0
        %1498 = vmatpush1.bf16.msra.mxu0 0
        %1499 = vmatprep.subr.bf16.mxu0 0
        %1500 = vmatpush1.bf16.msra.mxu0 0
        %1501 = vmatprep.subr.bf16.mxu0 0
        %1502 = vmatpush1.bf16.msra.mxu0 0
        %1503 = vmatprep.subr.bf16.mxu0 0
        %1504 = vmatpush1.bf16.msra.mxu0 0
        %1505 = vmatprep.subr.bf16.mxu0 0
        %1506 = vmatpush1.bf16.msra.mxu0 0
        %1507 = vmatprep.subr.bf16.mxu0 0
        %1508 = vmatpush1.bf16.msra.mxu0 0
        %1509 = vmatprep.subr.bf16.mxu0 0
        %1510 = vmatpush1.bf16.msra.mxu0 0
        %1511 = vmatprep.mubr.bf16.mxu0 0
        %1512 = vmatmul.mubr.bf16.gmra.mrb[0].mxu0 %v1477
        %v1513 = vpop.f32.mrb[0].mxu0
        %v1514 = vadd.f32 0.0, %v1513
        %v1515 = vpop.f32.mrb[0].mxu0
        %v1516 = vpop.f32.mrb[0].mxu0
        %v1517 = vadd.f32 0.0, %v1516
        %v1518 = vpop.f32.mrb[0].mxu0
        %1519 = vdwg.mxu0
        %v1521 = vsel %vm1295, %v1387, 0
        %1523 = vmatprep.subr.bf16.mxu0 0
        %1524 = vmatpush1.bf16.msra.mxu0 %v1086
        %1525 = vmatprep.subr.bf16.mxu0 0
        %1526 = vmatpush1.bf16.msra.mxu0 0
        %1527 = vmatprep.subr.bf16.mxu0 0
        %1528 = vmatpush1.bf16.msra.mxu0 0
        %1529 = vmatprep.subr.bf16.mxu0 0
        %1530 = vmatpush1.bf16.msra.mxu0 0
        %1531 = vmatprep.subr.bf16.mxu0 0
        %1532 = vmatpush1.bf16.msra.mxu0 0
        %1533 = vmatprep.subr.bf16.mxu0 0
        %1534 = vmatpush1.bf16.msra.mxu0 0
        %1535 = vmatprep.subr.bf16.mxu0 0
        %1536 = vmatpush1.bf16.msra.mxu0 0
        %1537 = vmatprep.subr.bf16.mxu0 0
        %1538 = vmatpush1.bf16.msra.mxu0 0
        %1539 = vmatprep.subr.bf16.mxu0 0
        %1540 = vmatpush1.bf16.msra.mxu0 0
        %1541 = vmatprep.subr.bf16.mxu0 0
        %1542 = vmatpush1.bf16.msra.mxu0 0
        %1543 = vmatprep.subr.bf16.mxu0 0
        %1544 = vmatpush1.bf16.msra.mxu0 0
        %1545 = vmatprep.subr.bf16.mxu0 0
        %1546 = vmatpush1.bf16.msra.mxu0 0
        %1547 = vmatprep.subr.bf16.mxu0 0
        %1548 = vmatpush1.bf16.msra.mxu0 0
        %1549 = vmatprep.subr.bf16.mxu0 0
        %1550 = vmatpush1.bf16.msra.mxu0 0
        %1551 = vmatprep.subr.bf16.mxu0 0
        %1552 = vmatpush1.bf16.msra.mxu0 0
        %1553 = vmatprep.subr.bf16.mxu0 0
        %1554 = vmatpush1.bf16.msra.mxu0 0
        %1555 = vmatprep.mubr.bf16.mxu0 0
        %1556 = vmatmul.mubr.bf16.gmra.mrb[0].mxu0 %v1521
        %v1557 = vpop.f32.mrb[0].mxu0
        %v1558 = vadd.f32 0.0, %v1557
        %v1559 = vpop.f32.mrb[0].mxu0
        %v1560 = vpop.f32.mrb[0].mxu0
        %v1561 = vadd.f32 0.0, %v1560
        %v1562 = vpop.f32.mrb[0].mxu0
        %1563 = vdwg.mxu0
        %v1564 = vpack.c.bf16 %v1429, %v1426
        %v1565 = vpack.c.bf16 %v1473, %v1470
        %v1566 = vpack.c.bf16 %v1517, %v1514
        %v1567 = vpack.c.bf16 %v1561, %v1558
        %1569 = vrot.lane.b32.xlu0 %v1075, 96
        %v1570 = vpop.permute.xlu0 %1569
        %1572 = vrot.lane.b32.xlu0 %v1079, 96
        %v1573 = vpop.permute.xlu0 %1572
        %v1575 = vsel %vm1094, %v1570, 0
        %v1578 = vsel %vm1094, %v1573, 0
        %1580 = vmatprep.subr.bf16.mxu0 0
        %1581 = vmatpush1.bf16.xpose.msra.mxu0 %v1578
        %1582 = vmatprep.subr.bf16.mxu0 0
        %1583 = vmatpush1.bf16.xpose.msra.mxu0 0
        %1584 = vmatprep.subr.bf16.mxu0 0
        %1585 = vmatpush1.bf16.xpose.msra.mxu0 0
        %1586 = vmatprep.subr.bf16.mxu0 0
        %1587 = vmatpush1.bf16.xpose.msra.mxu0 0
        %1588 = vmatprep.subr.bf16.mxu0 0
        %1589 = vmatpush1.bf16.xpose.msra.mxu0 0
        %1590 = vmatprep.subr.bf16.mxu0 0
        %1591 = vmatpush1.bf16.xpose.msra.mxu0 0
        %1592 = vmatprep.subr.bf16.mxu0 0
        %1593 = vmatpush1.bf16.xpose.msra.mxu0 0
        %1594 = vmatprep.subr.bf16.mxu0 0
        %1595 = vmatpush1.bf16.xpose.msra.mxu0 0
        %1596 = vmatprep.subr.bf16.mxu0 0
        %1597 = vmatpush1.bf16.xpose.msra.mxu0 0
        %1598 = vmatprep.subr.bf16.mxu0 0
        %1599 = vmatpush1.bf16.xpose.msra.mxu0 0
        %1600 = vmatprep.subr.bf16.mxu0 0
        %1601 = vmatpush1.bf16.xpose.msra.mxu0 0
        %1602 = vmatprep.subr.bf16.mxu0 0
        %1603 = vmatpush1.bf16.xpose.msra.mxu0 0
        %1604 = vmatprep.subr.bf16.mxu0 0
        %1605 = vmatpush1.bf16.xpose.msra.mxu0 0
        %1606 = vmatprep.subr.bf16.mxu0 0
        %1607 = vmatpush1.bf16.xpose.msra.mxu0 0
        %1608 = vmatprep.subr.bf16.mxu0 0
        %1609 = vmatpush1.bf16.xpose.msra.mxu0 0
        %1610 = vmatprep.subr.bf16.mxu0 0
        %1611 = vmatpush1.bf16.xpose.msra.mxu0 0
        %1612 = vmatprep.mubr.bf16.mxu0 0
        %1613 = vmatmul.mubr.bf16.gmra.mrb[0].mxu0 %v1575
        %v1614 = vpop.f32.mrb[0].mxu0
        %v1615 = vadd.f32 0.0, %v1614
        %v1616 = vpop.f32.mrb[0].mxu0
        %v1617 = vpop.f32.mrb[0].mxu0
        %v1618 = vadd.f32 0.0, %v1617
        %v1619 = vpop.f32.mrb[0].mxu0
        %1620 = vdwg.mxu0
        %1622 = vrot.lane.b32.xlu0 %v1076, 96
        %v1623 = vpop.permute.xlu0 %1622
        %1625 = vrot.lane.b32.xlu0 %v1080, 96
        %v1626 = vpop.permute.xlu0 %1625
        %v1628 = vsel %vm1094, %v1623, 0
        %v1631 = vsel %vm1094, %v1626, 0
        %1633 = vmatprep.subr.bf16.mxu0 0
        %1634 = vmatpush1.bf16.xpose.msra.mxu0 %v1631
        %1635 = vmatprep.subr.bf16.mxu0 0
        %1636 = vmatpush1.bf16.xpose.msra.mxu0 0
        %1637 = vmatprep.subr.bf16.mxu0 0
        %1638 = vmatpush1.bf16.xpose.msra.mxu0 0
        %1639 = vmatprep.subr.bf16.mxu0 0
        %1640 = vmatpush1.bf16.xpose.msra.mxu0 0
        %1641 = vmatprep.subr.bf16.mxu0 0
        %1642 = vmatpush1.bf16.xpose.msra.mxu0 0
        %1643 = vmatprep.subr.bf16.mxu0 0
        %1644 = vmatpush1.bf16.xpose.msra.mxu0 0
        %1645 = vmatprep.subr.bf16.mxu0 0
        %1646 = vmatpush1.bf16.xpose.msra.mxu0 0
        %1647 = vmatprep.subr.bf16.mxu0 0
        %1648 = vmatpush1.bf16.xpose.msra.mxu0 0
        %1649 = vmatprep.subr.bf16.mxu0 0
        %1650 = vmatpush1.bf16.xpose.msra.mxu0 0
        %1651 = vmatprep.subr.bf16.mxu0 0
        %1652 = vmatpush1.bf16.xpose.msra.mxu0 0
        %1653 = vmatprep.subr.bf16.mxu0 0
        %1654 = vmatpush1.bf16.xpose.msra.mxu0 0
        %1655 = vmatprep.subr.bf16.mxu0 0
        %1656 = vmatpush1.bf16.xpose.msra.mxu0 0
        %1657 = vmatprep.subr.bf16.mxu0 0
        %1658 = vmatpush1.bf16.xpose.msra.mxu0 0
        %1659 = vmatprep.subr.bf16.mxu0 0
        %1660 = vmatpush1.bf16.xpose.msra.mxu0 0
        %1661 = vmatprep.subr.bf16.mxu0 0
        %1662 = vmatpush1.bf16.xpose.msra.mxu0 0
        %1663 = vmatprep.subr.bf16.mxu0 0
        %1664 = vmatpush1.bf16.xpose.msra.mxu0 0
        %1665 = vmatprep.mubr.bf16.mxu0 0
        %1666 = vmatmul.mubr.bf16.gmra.mrb[0].mxu0 %v1628
        %v1667 = vpop.f32.mrb[0].mxu0
        %v1668 = vadd.f32 0.0, %v1667
        %v1669 = vpop.f32.mrb[0].mxu0
        %v1670 = vpop.f32.mrb[0].mxu0
        %v1671 = vadd.f32 0.0, %v1670
        %v1672 = vpop.f32.mrb[0].mxu0
        %1673 = vdwg.mxu0
        %1675 = vrot.lane.b32.xlu0 %v1077, 96
        %v1676 = vpop.permute.xlu0 %1675
        %1678 = vrot.lane.b32.xlu0 %v1081, 96
        %v1679 = vpop.permute.xlu0 %1678
        %v1681 = vsel %vm1094, %v1676, 0
        %v1684 = vsel %vm1094, %v1679, 0
        %1686 = vmatprep.subr.bf16.mxu0 0
        %1687 = vmatpush1.bf16.xpose.msra.mxu0 %v1684
        %1688 = vmatprep.subr.bf16.mxu0 0
        %1689 = vmatpush1.bf16.xpose.msra.mxu0 0
        %1690 = vmatprep.subr.bf16.mxu0 0
        %1691 = vmatpush1.bf16.xpose.msra.mxu0 0
        %1692 = vmatprep.subr.bf16.mxu0 0
        %1693 = vmatpush1.bf16.xpose.msra.mxu0 0
        %1694 = vmatprep.subr.bf16.mxu0 0
        %1695 = vmatpush1.bf16.xpose.msra.mxu0 0
        %1696 = vmatprep.subr.bf16.mxu0 0
        %1697 = vmatpush1.bf16.xpose.msra.mxu0 0
        %1698 = vmatprep.subr.bf16.mxu0 0
        %1699 = vmatpush1.bf16.xpose.msra.mxu0 0
        %1700 = vmatprep.subr.bf16.mxu0 0
        %1701 = vmatpush1.bf16.xpose.msra.mxu0 0
        %1702 = vmatprep.subr.bf16.mxu0 0
        %1703 = vmatpush1.bf16.xpose.msra.mxu0 0
        %1704 = vmatprep.subr.bf16.mxu0 0
        %1705 = vmatpush1.bf16.xpose.msra.mxu0 0
        %1706 = vmatprep.subr.bf16.mxu0 0
        %1707 = vmatpush1.bf16.xpose.msra.mxu0 0
        %1708 = vmatprep.subr.bf16.mxu0 0
        %1709 = vmatpush1.bf16.xpose.msra.mxu0 0
        %1710 = vmatprep.subr.bf16.mxu0 0
        %1711 = vmatpush1.bf16.xpose.msra.mxu0 0
        %1712 = vmatprep.subr.bf16.mxu0 0
        %1713 = vmatpush1.bf16.xpose.msra.mxu0 0
        %1714 = vmatprep.subr.bf16.mxu0 0
        %1715 = vmatpush1.bf16.xpose.msra.mxu0 0
        %1716 = vmatprep.subr.bf16.mxu0 0
        %1717 = vmatpush1.bf16.xpose.msra.mxu0 0
        %1718 = vmatprep.mubr.bf16.mxu0 0
        %1719 = vmatmul.mubr.bf16.gmra.mrb[0].mxu0 %v1681
        %v1720 = vpop.f32.mrb[0].mxu0
        %v1721 = vadd.f32 0.0, %v1720
        %v1722 = vpop.f32.mrb[0].mxu0
        %v1723 = vpop.f32.mrb[0].mxu0
        %v1724 = vadd.f32 0.0, %v1723
        %v1725 = vpop.f32.mrb[0].mxu0
        %1726 = vdwg.mxu0
        %1728 = vrot.lane.b32.xlu0 %v1078, 96
        %v1729 = vpop.permute.xlu0 %1728
        %1731 = vrot.lane.b32.xlu0 %v1082, 96
        %v1732 = vpop.permute.xlu0 %1731
        %v1734 = vsel %vm1094, %v1729, 0
        %v1737 = vsel %vm1094, %v1732, 0
        %1739 = vmatprep.subr.bf16.mxu0 0
        %1740 = vmatpush1.bf16.xpose.msra.mxu0 %v1737
        %1741 = vmatprep.subr.bf16.mxu0 0
        %1742 = vmatpush1.bf16.xpose.msra.mxu0 0
        %1743 = vmatprep.subr.bf16.mxu0 0
        %1744 = vmatpush1.bf16.xpose.msra.mxu0 0
        %1745 = vmatprep.subr.bf16.mxu0 0
        %1746 = vmatpush1.bf16.xpose.msra.mxu0 0
        %1747 = vmatprep.subr.bf16.mxu0 0
        %1748 = vmatpush1.bf16.xpose.msra.mxu0 0
        %1749 = vmatprep.subr.bf16.mxu0 0
        %1750 = vmatpush1.bf16.xpose.msra.mxu0 0
        %1751 = vmatprep.subr.bf16.mxu0 0
        %1752 = vmatpush1.bf16.xpose.msra.mxu0 0
        %1753 = vmatprep.subr.bf16.mxu0 0
        %1754 = vmatpush1.bf16.xpose.msra.mxu0 0
        %1755 = vmatprep.subr.bf16.mxu0 0
        %1756 = vmatpush1.bf16.xpose.msra.mxu0 0
        %1757 = vmatprep.subr.bf16.mxu0 0
        %1758 = vmatpush1.bf16.xpose.msra.mxu0 0
        %1759 = vmatprep.subr.bf16.mxu0 0
        %1760 = vmatpush1.bf16.xpose.msra.mxu0 0
        %1761 = vmatprep.subr.bf16.mxu0 0
        %1762 = vmatpush1.bf16.xpose.msra.mxu0 0
        %1763 = vmatprep.subr.bf16.mxu0 0
        %1764 = vmatpush1.bf16.xpose.msra.mxu0 0
        %1765 = vmatprep.subr.bf16.mxu0 0
        %1766 = vmatpush1.bf16.xpose.msra.mxu0 0
        %1767 = vmatprep.subr.bf16.mxu0 0
        %1768 = vmatpush1.bf16.xpose.msra.mxu0 0
        %1769 = vmatprep.subr.bf16.mxu0 0
        %1770 = vmatpush1.bf16.xpose.msra.mxu0 0
        %1771 = vmatprep.mubr.bf16.mxu0 0
        %1772 = vmatmul.mubr.bf16.gmra.mrb[0].mxu0 %v1734
        %v1773 = vpop.f32.mrb[0].mxu0
        %v1774 = vadd.f32 0.0, %v1773
        %v1775 = vpop.f32.mrb[0].mxu0
        %v1776 = vpop.f32.mrb[0].mxu0
        %v1777 = vadd.f32 0.0, %v1776
        %v1778 = vpop.f32.mrb[0].mxu0
        %1779 = vdwg.mxu0
        %v1780 = vsel %vm1285, %v1615, -1.7677669e+09
        %v1781 = vsel %vm1286, %v1618, -1.7677669e+09
        %v1782 = vsel %vm1285, %v1668, -1.7677669e+09
        %v1783 = vsel %vm1286, %v1671, -1.7677669e+09
        %v1784 = vsel %vm1285, %v1721, -1.7677669e+09
        %v1785 = vsel %vm1286, %v1724, -1.7677669e+09
        %v1786 = vsel %vm1285, %v1774, -1.7677669e+09
        %v1787 = vsel %vm1286, %v1777, -1.7677669e+09
        %v1788 = vsel %vm1295, %v1780, -inf
        %1789 = vmax.xlane.f32.xlu0 %v1788
        %v1790 = vpop.xlane.xlu0 %1789
        %v1791 = vsel %vm1295, %v1781, -inf
        %1792 = vmax.xlane.f32.xlu0 %v1791
        %v1793 = vpop.xlane.xlu0 %1792
        %v1794 = vsel %vm1295, %v1782, -inf
        %1795 = vmax.xlane.f32.xlu0 %v1794
        %v1796 = vpop.xlane.xlu0 %1795
        %v1797 = vsel %vm1295, %v1783, -inf
        %1798 = vmax.xlane.f32.xlu0 %v1797
        %v1799 = vpop.xlane.xlu0 %1798
        %v1800 = vsel %vm1295, %v1784, -inf
        %1801 = vmax.xlane.f32.xlu0 %v1800
        %v1802 = vpop.xlane.xlu0 %1801
        %v1803 = vsel %vm1295, %v1785, -inf
        %1804 = vmax.xlane.f32.xlu0 %v1803
        %v1805 = vpop.xlane.xlu0 %1804
        %v1806 = vsel %vm1295, %v1786, -inf
        %1807 = vmax.xlane.f32.xlu0 %v1806
        %v1808 = vpop.xlane.xlu0 %1807
        %v1809 = vsel %vm1295, %v1787, -inf
        %1810 = vmax.xlane.f32.xlu0 %v1809
        %v1811 = vpop.xlane.xlu0 %1810
        %v1812 = vsub.f32 %v1780, %v1790
        %v1813 = vsub.f32 %v1781, %v1793
        %v1814 = vsub.f32 %v1782, %v1796
        %v1815 = vsub.f32 %v1783, %v1799
        %v1816 = vsub.f32 %v1784, %v1802
        %v1817 = vsub.f32 %v1785, %v1805
        %v1818 = vsub.f32 %v1786, %v1808
        %v1819 = vsub.f32 %v1787, %v1811
        %v1820 = vmul.f32 %v1812, 1.442695
        %v1821 = vpow.pop %v1820
        %v1822 = vmul.f32 %v1813, 1.442695
        %v1823 = vpow.pop %v1822
        %v1824 = vmul.f32 %v1814, 1.442695
        %v1825 = vpow.pop %v1824
        %v1826 = vmul.f32 %v1815, 1.442695
        %v1827 = vpow.pop %v1826
        %v1828 = vmul.f32 %v1816, 1.442695
        %v1829 = vpow.pop %v1828
        %v1830 = vmul.f32 %v1817, 1.442695
        %v1831 = vpow.pop %v1830
        %v1832 = vmul.f32 %v1818, 1.442695
        %v1833 = vpow.pop %v1832
        %v1834 = vmul.f32 %v1819, 1.442695
        %v1835 = vpow.pop %v1834
        %v1836 = vsel %vm1295, %v1821, 0.0
        %1837 = vadd.xlane.f32.xlu0 %v1836
        %v1838 = vpop.xlane.xlu0 %1837
        %v1839 = vsel %vm1295, %v1823, 0.0
        %1840 = vadd.xlane.f32.xlu0 %v1839
        %v1841 = vpop.xlane.xlu0 %1840
        %v1842 = vsel %vm1295, %v1825, 0.0
        %1843 = vadd.xlane.f32.xlu0 %v1842
        %v1844 = vpop.xlane.xlu0 %1843
        %v1845 = vsel %vm1295, %v1827, 0.0
        %1846 = vadd.xlane.f32.xlu0 %v1845
        %v1847 = vpop.xlane.xlu0 %1846
        %v1848 = vsel %vm1295, %v1829, 0.0
        %1849 = vadd.xlane.f32.xlu0 %v1848
        %v1850 = vpop.xlane.xlu0 %1849
        %v1851 = vsel %vm1295, %v1831, 0.0
        %1852 = vadd.xlane.f32.xlu0 %v1851
        %v1853 = vpop.xlane.xlu0 %1852
        %v1854 = vsel %vm1295, %v1833, 0.0
        %1855 = vadd.xlane.f32.xlu0 %v1854
        %v1856 = vpop.xlane.xlu0 %1855
        %v1857 = vsel %vm1295, %v1835, 0.0
        %1858 = vadd.xlane.f32.xlu0 %v1857
        %v1859 = vpop.xlane.xlu0 %1858
        %v1860 = vrcp.pop %v1838
        %v1861 = vrcp.pop %v1841
        %v1862 = vrcp.pop %v1844
        %v1863 = vrcp.pop %v1847
        %v1864 = vrcp.pop %v1850
        %v1865 = vrcp.pop %v1853
        %v1866 = vrcp.pop %v1856
        %v1867 = vrcp.pop %v1859
        %v1868 = vmul.f32 %v1821, %v1860
        %v1869 = vmul.f32 %v1823, %v1861
        %v1870 = vmul.f32 %v1825, %v1862
        %v1871 = vmul.f32 %v1827, %v1863
        %v1872 = vmul.f32 %v1829, %v1864
        %v1873 = vmul.f32 %v1831, %v1865
        %v1874 = vmul.f32 %v1833, %v1866
        %v1875 = vmul.f32 %v1835, %v1867
        %v1876 = vpack.c.bf16 %v1869, %v1868
        %v1877 = vpack.c.bf16 %v1871, %v1870
        %v1878 = vpack.c.bf16 %v1873, %v1872
        %v1879 = vpack.c.bf16 %v1875, %v1874
        %1881 = vrot.lane.b32.xlu0 %v1083, 96
        %v1882 = vpop.permute.xlu0 %1881
        %v1885 = vsel %vm1295, %v1876, 0
        %1887 = vmatprep.subr.bf16.mxu0 0
        %1888 = vmatpush1.bf16.msra.mxu0 %v1882
        %1889 = vmatprep.subr.bf16.mxu0 0
        %1890 = vmatpush1.bf16.msra.mxu0 0
        %1891 = vmatprep.subr.bf16.mxu0 0
        %1892 = vmatpush1.bf16.msra.mxu0 0
        %1893 = vmatprep.subr.bf16.mxu0 0
        %1894 = vmatpush1.bf16.msra.mxu0 0
        %1895 = vmatprep.subr.bf16.mxu0 0
        %1896 = vmatpush1.bf16.msra.mxu0 0
        %1897 = vmatprep.subr.bf16.mxu0 0
        %1898 = vmatpush1.bf16.msra.mxu0 0
        %1899 = vmatprep.subr.bf16.mxu0 0
        %1900 = vmatpush1.bf16.msra.mxu0 0
        %1901 = vmatprep.subr.bf16.mxu0 0
        %1902 = vmatpush1.bf16.msra.mxu0 0
        %1903 = vmatprep.subr.bf16.mxu0 0
        %1904 = vmatpush1.bf16.msra.mxu0 0
        %1905 = vmatprep.subr.bf16.mxu0 0
        %1906 = vmatpush1.bf16.msra.mxu0 0
        %1907 = vmatprep.subr.bf16.mxu0 0
        %1908 = vmatpush1.bf16.msra.mxu0 0
        %1909 = vmatprep.subr.bf16.mxu0 0
        %1910 = vmatpush1.bf16.msra.mxu0 0
        %1911 = vmatprep.subr.bf16.mxu0 0
        %1912 = vmatpush1.bf16.msra.mxu0 0
        %1913 = vmatprep.subr.bf16.mxu0 0
        %1914 = vmatpush1.bf16.msra.mxu0 0
        %1915 = vmatprep.subr.bf16.mxu0 0
        %1916 = vmatpush1.bf16.msra.mxu0 0
        %1917 = vmatprep.subr.bf16.mxu0 0
        %1918 = vmatpush1.bf16.msra.mxu0 0
        %1919 = vmatprep.mubr.bf16.mxu0 0
        %1920 = vmatmul.mubr.bf16.gmra.mrb[0].mxu0 %v1885
        %v1921 = vpop.f32.mrb[0].mxu0
        %v1922 = vadd.f32 0.0, %v1921
        %v1923 = vpop.f32.mrb[0].mxu0
        %v1924 = vpop.f32.mrb[0].mxu0
        %v1925 = vadd.f32 0.0, %v1924
        %v1926 = vpop.f32.mrb[0].mxu0
        %1927 = vdwg.mxu0
        %1929 = vrot.lane.b32.xlu0 %v1084, 96
        %v1930 = vpop.permute.xlu0 %1929
        %v1933 = vsel %vm1295, %v1877, 0
        %1935 = vmatprep.subr.bf16.mxu0 0
        %1936 = vmatpush1.bf16.msra.mxu0 %v1930
        %1937 = vmatprep.subr.bf16.mxu0 0
        %1938 = vmatpush1.bf16.msra.mxu0 0
        %1939 = vmatprep.subr.bf16.mxu0 0
        %1940 = vmatpush1.bf16.msra.mxu0 0
        %1941 = vmatprep.subr.bf16.mxu0 0
        %1942 = vmatpush1.bf16.msra.mxu0 0
        %1943 = vmatprep.subr.bf16.mxu0 0
        %1944 = vmatpush1.bf16.msra.mxu0 0
        %1945 = vmatprep.subr.bf16.mxu0 0
        %1946 = vmatpush1.bf16.msra.mxu0 0
        %1947 = vmatprep.subr.bf16.mxu0 0
        %1948 = vmatpush1.bf16.msra.mxu0 0
        %1949 = vmatprep.subr.bf16.mxu0 0
        %1950 = vmatpush1.bf16.msra.mxu0 0
        %1951 = vmatprep.subr.bf16.mxu0 0
        %1952 = vmatpush1.bf16.msra.mxu0 0
        %1953 = vmatprep.subr.bf16.mxu0 0
        %1954 = vmatpush1.bf16.msra.mxu0 0
        %1955 = vmatprep.subr.bf16.mxu0 0
        %1956 = vmatpush1.bf16.msra.mxu0 0
        %1957 = vmatprep.subr.bf16.mxu0 0
        %1958 = vmatpush1.bf16.msra.mxu0 0
        %1959 = vmatprep.subr.bf16.mxu0 0
        %1960 = vmatpush1.bf16.msra.mxu0 0
        %1961 = vmatprep.subr.bf16.mxu0 0
        %1962 = vmatpush1.bf16.msra.mxu0 0
        %1963 = vmatprep.subr.bf16.mxu0 0
        %1964 = vmatpush1.bf16.msra.mxu0 0
        %1965 = vmatprep.subr.bf16.mxu0 0
        %1966 = vmatpush1.bf16.msra.mxu0 0
        %1967 = vmatprep.mubr.bf16.mxu0 0
        %1968 = vmatmul.mubr.bf16.gmra.mrb[0].mxu0 %v1933
        %v1969 = vpop.f32.mrb[0].mxu0
        %v1970 = vadd.f32 0.0, %v1969
        %v1971 = vpop.f32.mrb[0].mxu0
        %v1972 = vpop.f32.mrb[0].mxu0
        %v1973 = vadd.f32 0.0, %v1972
        %v1974 = vpop.f32.mrb[0].mxu0
        %1975 = vdwg.mxu0
        %1977 = vrot.lane.b32.xlu0 %v1085, 96
        %v1978 = vpop.permute.xlu0 %1977
        %v1981 = vsel %vm1295, %v1878, 0
        %1983 = vmatprep.subr.bf16.mxu0 0
        %1984 = vmatpush1.bf16.msra.mxu0 %v1978
        %1985 = vmatprep.subr.bf16.mxu0 0
        %1986 = vmatpush1.bf16.msra.mxu0 0
        %1987 = vmatprep.subr.bf16.mxu0 0
        %1988 = vmatpush1.bf16.msra.mxu0 0
        %1989 = vmatprep.subr.bf16.mxu0 0
        %1990 = vmatpush1.bf16.msra.mxu0 0
        %1991 = vmatprep.subr.bf16.mxu0 0
        %1992 = vmatpush1.bf16.msra.mxu0 0
        %1993 = vmatprep.subr.bf16.mxu0 0
        %1994 = vmatpush1.bf16.msra.mxu0 0
        %1995 = vmatprep.subr.bf16.mxu0 0
        %1996 = vmatpush1.bf16.msra.mxu0 0
        %1997 = vmatprep.subr.bf16.mxu0 0
        %1998 = vmatpush1.bf16.msra.mxu0 0
        %1999 = vmatprep.subr.bf16.mxu0 0
        %2000 = vmatpush1.bf16.msra.mxu0 0
        %2001 = vmatprep.subr.bf16.mxu0 0
        %2002 = vmatpush1.bf16.msra.mxu0 0
        %2003 = vmatprep.subr.bf16.mxu0 0
        %2004 = vmatpush1.bf16.msra.mxu0 0
        %2005 = vmatprep.subr.bf16.mxu0 0
        %2006 = vmatpush1.bf16.msra.mxu0 0
        %2007 = vmatprep.subr.bf16.mxu0 0
        %2008 = vmatpush1.bf16.msra.mxu0 0
        %2009 = vmatprep.subr.bf16.mxu0 0
        %2010 = vmatpush1.bf16.msra.mxu0 0
        %2011 = vmatprep.subr.bf16.mxu0 0
        %2012 = vmatpush1.bf16.msra.mxu0 0
        %2013 = vmatprep.subr.bf16.mxu0 0
        %2014 = vmatpush1.bf16.msra.mxu0 0
        %2015 = vmatprep.mubr.bf16.mxu0 0
        %2016 = vmatmul.mubr.bf16.gmra.mrb[0].mxu0 %v1981
        %v2017 = vpop.f32.mrb[0].mxu0
        %v2018 = vadd.f32 0.0, %v2017
        %v2019 = vpop.f32.mrb[0].mxu0
        %v2020 = vpop.f32.mrb[0].mxu0
        %v2021 = vadd.f32 0.0, %v2020
        %v2022 = vpop.f32.mrb[0].mxu0
        %2023 = vdwg.mxu0
        %2025 = vrot.lane.b32.xlu0 %v1086, 96
        %v2026 = vpop.permute.xlu0 %2025
        %v2029 = vsel %vm1295, %v1879, 0
        %2031 = vmatprep.subr.bf16.mxu0 0
        %2032 = vmatpush1.bf16.msra.mxu0 %v2026
        %2033 = vmatprep.subr.bf16.mxu0 0
        %2034 = vmatpush1.bf16.msra.mxu0 0
        %2035 = vmatprep.subr.bf16.mxu0 0
        %2036 = vmatpush1.bf16.msra.mxu0 0
        %2037 = vmatprep.subr.bf16.mxu0 0
        %2038 = vmatpush1.bf16.msra.mxu0 0
        %2039 = vmatprep.subr.bf16.mxu0 0
        %2040 = vmatpush1.bf16.msra.mxu0 0
        %2041 = vmatprep.subr.bf16.mxu0 0
        %2042 = vmatpush1.bf16.msra.mxu0 0
        %2043 = vmatprep.subr.bf16.mxu0 0
        %2044 = vmatpush1.bf16.msra.mxu0 0
        %2045 = vmatprep.subr.bf16.mxu0 0
        %2046 = vmatpush1.bf16.msra.mxu0 0
        %2047 = vmatprep.subr.bf16.mxu0 0
        %2048 = vmatpush1.bf16.msra.mxu0 0
        %2049 = vmatprep.subr.bf16.mxu0 0
        %2050 = vmatpush1.bf16.msra.mxu0 0
        %2051 = vmatprep.subr.bf16.mxu0 0
        %2052 = vmatpush1.bf16.msra.mxu0 0
        %2053 = vmatprep.subr.bf16.mxu0 0
        %2054 = vmatpush1.bf16.msra.mxu0 0
        %2055 = vmatprep.subr.bf16.mxu0 0
        %2056 = vmatpush1.bf16.msra.mxu0 0
        %2057 = vmatprep.subr.bf16.mxu0 0
        %2058 = vmatpush1.bf16.msra.mxu0 0
        %2059 = vmatprep.subr.bf16.mxu0 0
        %2060 = vmatpush1.bf16.msra.mxu0 0
        %2061 = vmatprep.subr.bf16.mxu0 0
        %2062 = vmatpush1.bf16.msra.mxu0 0
        %2063 = vmatprep.mubr.bf16.mxu0 0
        %2064 = vmatmul.mubr.bf16.gmra.mrb[0].mxu0 %v2029
        %v2065 = vpop.f32.mrb[0].mxu0
        %v2066 = vadd.f32 0.0, %v2065
        %v2067 = vpop.f32.mrb[0].mxu0
        %v2068 = vpop.f32.mrb[0].mxu0
        %v2069 = vadd.f32 0.0, %v2068
        %v2070 = vpop.f32.mrb[0].mxu0
        %2071 = vdwg.mxu0
        %v2072 = vpack.c.bf16 %v1925, %v1922
        %v2073 = vpack.c.bf16 %v1973, %v1970
        %v2074 = vpack.c.bf16 %v2021, %v2018
        %v2075 = vpack.c.bf16 %v2069, %v2066
        %2076 = vrot.lane.b32.xlu0 %v1075, 64
        %v2077 = vpop.permute.xlu0 %2076
        %2078 = vrot.lane.b32.xlu0 %v1079, 64
        %v2079 = vpop.permute.xlu0 %2078
        %v2081 = vsel %vm1094, %v2077, 0
        %v2084 = vsel %vm1094, %v2079, 0
        %2086 = vmatprep.subr.bf16.mxu0 0
        %2087 = vmatpush1.bf16.xpose.msra.mxu0 %v2084
        %2088 = vmatprep.subr.bf16.mxu0 0
        %2089 = vmatpush1.bf16.xpose.msra.mxu0 0
        %2090 = vmatprep.subr.bf16.mxu0 0
        %2091 = vmatpush1.bf16.xpose.msra.mxu0 0
        %2092 = vmatprep.subr.bf16.mxu0 0
        %2093 = vmatpush1.bf16.xpose.msra.mxu0 0
        %2094 = vmatprep.subr.bf16.mxu0 0
        %2095 = vmatpush1.bf16.xpose.msra.mxu0 0
        %2096 = vmatprep.subr.bf16.mxu0 0
        %2097 = vmatpush1.bf16.xpose.msra.mxu0 0
        %2098 = vmatprep.subr.bf16.mxu0 0
        %2099 = vmatpush1.bf16.xpose.msra.mxu0 0
        %2100 = vmatprep.subr.bf16.mxu0 0
        %2101 = vmatpush1.bf16.xpose.msra.mxu0 0
        %2102 = vmatprep.subr.bf16.mxu0 0
        %2103 = vmatpush1.bf16.xpose.msra.mxu0 0
        %2104 = vmatprep.subr.bf16.mxu0 0
        %2105 = vmatpush1.bf16.xpose.msra.mxu0 0
        %2106 = vmatprep.subr.bf16.mxu0 0
        %2107 = vmatpush1.bf16.xpose.msra.mxu0 0
        %2108 = vmatprep.subr.bf16.mxu0 0
        %2109 = vmatpush1.bf16.xpose.msra.mxu0 0
        %2110 = vmatprep.subr.bf16.mxu0 0
        %2111 = vmatpush1.bf16.xpose.msra.mxu0 0
        %2112 = vmatprep.subr.bf16.mxu0 0
        %2113 = vmatpush1.bf16.xpose.msra.mxu0 0
        %2114 = vmatprep.subr.bf16.mxu0 0
        %2115 = vmatpush1.bf16.xpose.msra.mxu0 0
        %2116 = vmatprep.subr.bf16.mxu0 0
        %2117 = vmatpush1.bf16.xpose.msra.mxu0 0
        %2118 = vmatprep.mubr.bf16.mxu0 0
        %2119 = vmatmul.mubr.bf16.gmra.mrb[0].mxu0 %v2081
        %v2120 = vpop.f32.mrb[0].mxu0
        %v2121 = vadd.f32 0.0, %v2120
        %v2122 = vpop.f32.mrb[0].mxu0
        %v2123 = vpop.f32.mrb[0].mxu0
        %v2124 = vadd.f32 0.0, %v2123
        %v2125 = vpop.f32.mrb[0].mxu0
        %2126 = vdwg.mxu0
        %2127 = vrot.lane.b32.xlu0 %v1076, 64
        %v2128 = vpop.permute.xlu0 %2127
        %2129 = vrot.lane.b32.xlu0 %v1080, 64
        %v2130 = vpop.permute.xlu0 %2129
        %v2132 = vsel %vm1094, %v2128, 0
        %v2135 = vsel %vm1094, %v2130, 0
        %2137 = vmatprep.subr.bf16.mxu0 0
        %2138 = vmatpush1.bf16.xpose.msra.mxu0 %v2135
        %2139 = vmatprep.subr.bf16.mxu0 0
        %2140 = vmatpush1.bf16.xpose.msra.mxu0 0
        %2141 = vmatprep.subr.bf16.mxu0 0
        %2142 = vmatpush1.bf16.xpose.msra.mxu0 0
        %2143 = vmatprep.subr.bf16.mxu0 0
        %2144 = vmatpush1.bf16.xpose.msra.mxu0 0
        %2145 = vmatprep.subr.bf16.mxu0 0
        %2146 = vmatpush1.bf16.xpose.msra.mxu0 0
        %2147 = vmatprep.subr.bf16.mxu0 0
        %2148 = vmatpush1.bf16.xpose.msra.mxu0 0
        %2149 = vmatprep.subr.bf16.mxu0 0
        %2150 = vmatpush1.bf16.xpose.msra.mxu0 0
        %2151 = vmatprep.subr.bf16.mxu0 0
        %2152 = vmatpush1.bf16.xpose.msra.mxu0 0
        %2153 = vmatprep.subr.bf16.mxu0 0
        %2154 = vmatpush1.bf16.xpose.msra.mxu0 0
        %2155 = vmatprep.subr.bf16.mxu0 0
        %2156 = vmatpush1.bf16.xpose.msra.mxu0 0
        %2157 = vmatprep.subr.bf16.mxu0 0
        %2158 = vmatpush1.bf16.xpose.msra.mxu0 0
        %2159 = vmatprep.subr.bf16.mxu0 0
        %2160 = vmatpush1.bf16.xpose.msra.mxu0 0
        %2161 = vmatprep.subr.bf16.mxu0 0
        %2162 = vmatpush1.bf16.xpose.msra.mxu0 0
        %2163 = vmatprep.subr.bf16.mxu0 0
        %2164 = vmatpush1.bf16.xpose.msra.mxu0 0
        %2165 = vmatprep.subr.bf16.mxu0 0
        %2166 = vmatpush1.bf16.xpose.msra.mxu0 0
        %2167 = vmatprep.subr.bf16.mxu0 0
        %2168 = vmatpush1.bf16.xpose.msra.mxu0 0
        %2169 = vmatprep.mubr.bf16.mxu0 0
        %2170 = vmatmul.mubr.bf16.gmra.mrb[0].mxu0 %v2132
        %v2171 = vpop.f32.mrb[0].mxu0
        %v2172 = vadd.f32 0.0, %v2171
        %v2173 = vpop.f32.mrb[0].mxu0
        %v2174 = vpop.f32.mrb[0].mxu0
        %v2175 = vadd.f32 0.0, %v2174
        %v2176 = vpop.f32.mrb[0].mxu0
        %2177 = vdwg.mxu0
        %2178 = vrot.lane.b32.xlu0 %v1077, 64
        %v2179 = vpop.permute.xlu0 %2178
        %2180 = vrot.lane.b32.xlu0 %v1081, 64
        %v2181 = vpop.permute.xlu0 %2180
        %v2183 = vsel %vm1094, %v2179, 0
        %v2186 = vsel %vm1094, %v2181, 0
        %2188 = vmatprep.subr.bf16.mxu0 0
        %2189 = vmatpush1.bf16.xpose.msra.mxu0 %v2186
        %2190 = vmatprep.subr.bf16.mxu0 0
        %2191 = vmatpush1.bf16.xpose.msra.mxu0 0
        %2192 = vmatprep.subr.bf16.mxu0 0
        %2193 = vmatpush1.bf16.xpose.msra.mxu0 0
        %2194 = vmatprep.subr.bf16.mxu0 0
        %2195 = vmatpush1.bf16.xpose.msra.mxu0 0
        %2196 = vmatprep.subr.bf16.mxu0 0
        %2197 = vmatpush1.bf16.xpose.msra.mxu0 0
        %2198 = vmatprep.subr.bf16.mxu0 0
        %2199 = vmatpush1.bf16.xpose.msra.mxu0 0
        %2200 = vmatprep.subr.bf16.mxu0 0
        %2201 = vmatpush1.bf16.xpose.msra.mxu0 0
        %2202 = vmatprep.subr.bf16.mxu0 0
        %2203 = vmatpush1.bf16.xpose.msra.mxu0 0
        %2204 = vmatprep.subr.bf16.mxu0 0
        %2205 = vmatpush1.bf16.xpose.msra.mxu0 0
        %2206 = vmatprep.subr.bf16.mxu0 0
        %2207 = vmatpush1.bf16.xpose.msra.mxu0 0
        %2208 = vmatprep.subr.bf16.mxu0 0
        %2209 = vmatpush1.bf16.xpose.msra.mxu0 0
        %2210 = vmatprep.subr.bf16.mxu0 0
        %2211 = vmatpush1.bf16.xpose.msra.mxu0 0
        %2212 = vmatprep.subr.bf16.mxu0 0
        %2213 = vmatpush1.bf16.xpose.msra.mxu0 0
        %2214 = vmatprep.subr.bf16.mxu0 0
        %2215 = vmatpush1.bf16.xpose.msra.mxu0 0
        %2216 = vmatprep.subr.bf16.mxu0 0
        %2217 = vmatpush1.bf16.xpose.msra.mxu0 0
        %2218 = vmatprep.subr.bf16.mxu0 0
        %2219 = vmatpush1.bf16.xpose.msra.mxu0 0
        %2220 = vmatprep.mubr.bf16.mxu0 0
        %2221 = vmatmul.mubr.bf16.gmra.mrb[0].mxu0 %v2183
        %v2222 = vpop.f32.mrb[0].mxu0
        %v2223 = vadd.f32 0.0, %v2222
        %v2224 = vpop.f32.mrb[0].mxu0
        %v2225 = vpop.f32.mrb[0].mxu0
        %v2226 = vadd.f32 0.0, %v2225
        %v2227 = vpop.f32.mrb[0].mxu0
        %2228 = vdwg.mxu0
        %2229 = vrot.lane.b32.xlu0 %v1078, 64
        %v2230 = vpop.permute.xlu0 %2229
        %2231 = vrot.lane.b32.xlu0 %v1082, 64
        %v2232 = vpop.permute.xlu0 %2231
        %v2234 = vsel %vm1094, %v2230, 0
        %v2237 = vsel %vm1094, %v2232, 0
        %2239 = vmatprep.subr.bf16.mxu0 0
        %2240 = vmatpush1.bf16.xpose.msra.mxu0 %v2237
        %2241 = vmatprep.subr.bf16.mxu0 0
        %2242 = vmatpush1.bf16.xpose.msra.mxu0 0
        %2243 = vmatprep.subr.bf16.mxu0 0
        %2244 = vmatpush1.bf16.xpose.msra.mxu0 0
        %2245 = vmatprep.subr.bf16.mxu0 0
        %2246 = vmatpush1.bf16.xpose.msra.mxu0 0
        %2247 = vmatprep.subr.bf16.mxu0 0
        %2248 = vmatpush1.bf16.xpose.msra.mxu0 0
        %2249 = vmatprep.subr.bf16.mxu0 0
        %2250 = vmatpush1.bf16.xpose.msra.mxu0 0
        %2251 = vmatprep.subr.bf16.mxu0 0
        %2252 = vmatpush1.bf16.xpose.msra.mxu0 0
        %2253 = vmatprep.subr.bf16.mxu0 0
        %2254 = vmatpush1.bf16.xpose.msra.mxu0 0
        %2255 = vmatprep.subr.bf16.mxu0 0
        %2256 = vmatpush1.bf16.xpose.msra.mxu0 0
        %2257 = vmatprep.subr.bf16.mxu0 0
        %2258 = vmatpush1.bf16.xpose.msra.mxu0 0
        %2259 = vmatprep.subr.bf16.mxu0 0
        %2260 = vmatpush1.bf16.xpose.msra.mxu0 0
        %2261 = vmatprep.subr.bf16.mxu0 0
        %2262 = vmatpush1.bf16.xpose.msra.mxu0 0
        %2263 = vmatprep.subr.bf16.mxu0 0
        %2264 = vmatpush1.bf16.xpose.msra.mxu0 0
        %2265 = vmatprep.subr.bf16.mxu0 0
        %2266 = vmatpush1.bf16.xpose.msra.mxu0 0
        %2267 = vmatprep.subr.bf16.mxu0 0
        %2268 = vmatpush1.bf16.xpose.msra.mxu0 0
        %2269 = vmatprep.subr.bf16.mxu0 0
        %2270 = vmatpush1.bf16.xpose.msra.mxu0 0
        %2271 = vmatprep.mubr.bf16.mxu0 0
        %2272 = vmatmul.mubr.bf16.gmra.mrb[0].mxu0 %v2234
        %v2273 = vpop.f32.mrb[0].mxu0
        %v2274 = vadd.f32 0.0, %v2273
        %v2275 = vpop.f32.mrb[0].mxu0
        %v2276 = vpop.f32.mrb[0].mxu0
        %v2277 = vadd.f32 0.0, %v2276
        %v2278 = vpop.f32.mrb[0].mxu0
        %2279 = vdwg.mxu0
        %v2280 = vsel %vm1285, %v2121, -1.7677669e+09
        %v2281 = vsel %vm1286, %v2124, -1.7677669e+09
        %v2282 = vsel %vm1285, %v2172, -1.7677669e+09
        %v2283 = vsel %vm1286, %v2175, -1.7677669e+09
        %v2284 = vsel %vm1285, %v2223, -1.7677669e+09
        %v2285 = vsel %vm1286, %v2226, -1.7677669e+09
        %v2286 = vsel %vm1285, %v2274, -1.7677669e+09
        %v2287 = vsel %vm1286, %v2277, -1.7677669e+09
        %v2288 = vsel %vm1295, %v2280, -inf
        %2289 = vmax.xlane.f32.xlu0 %v2288
        %v2290 = vpop.xlane.xlu0 %2289
        %v2291 = vsel %vm1295, %v2281, -inf
        %2292 = vmax.xlane.f32.xlu0 %v2291
        %v2293 = vpop.xlane.xlu0 %2292
        %v2294 = vsel %vm1295, %v2282, -inf
        %2295 = vmax.xlane.f32.xlu0 %v2294
        %v2296 = vpop.xlane.xlu0 %2295
        %v2297 = vsel %vm1295, %v2283, -inf
        %2298 = vmax.xlane.f32.xlu0 %v2297
        %v2299 = vpop.xlane.xlu0 %2298
        %v2300 = vsel %vm1295, %v2284, -inf
        %2301 = vmax.xlane.f32.xlu0 %v2300
        %v2302 = vpop.xlane.xlu0 %2301
        %v2303 = vsel %vm1295, %v2285, -inf
        %2304 = vmax.xlane.f32.xlu0 %v2303
        %v2305 = vpop.xlane.xlu0 %2304
        %v2306 = vsel %vm1295, %v2286, -inf
        %2307 = vmax.xlane.f32.xlu0 %v2306
        %v2308 = vpop.xlane.xlu0 %2307
        %v2309 = vsel %vm1295, %v2287, -inf
        %2310 = vmax.xlane.f32.xlu0 %v2309
        %v2311 = vpop.xlane.xlu0 %2310
        %v2312 = vsub.f32 %v2280, %v2290
        %v2313 = vsub.f32 %v2281, %v2293
        %v2314 = vsub.f32 %v2282, %v2296
        %v2315 = vsub.f32 %v2283, %v2299
        %v2316 = vsub.f32 %v2284, %v2302
        %v2317 = vsub.f32 %v2285, %v2305
        %v2318 = vsub.f32 %v2286, %v2308
        %v2319 = vsub.f32 %v2287, %v2311
        %v2320 = vmul.f32 %v2312, 1.442695
        %v2321 = vpow.pop %v2320
        %v2322 = vmul.f32 %v2313, 1.442695
        %v2323 = vpow.pop %v2322
        %v2324 = vmul.f32 %v2314, 1.442695
        %v2325 = vpow.pop %v2324
        %v2326 = vmul.f32 %v2315, 1.442695
        %v2327 = vpow.pop %v2326
        %v2328 = vmul.f32 %v2316, 1.442695
        %v2329 = vpow.pop %v2328
        %v2330 = vmul.f32 %v2317, 1.442695
        %v2331 = vpow.pop %v2330
        %v2332 = vmul.f32 %v2318, 1.442695
        %v2333 = vpow.pop %v2332
        %v2334 = vmul.f32 %v2319, 1.442695
        %v2335 = vpow.pop %v2334
        %v2336 = vsel %vm1295, %v2321, 0.0
        %2337 = vadd.xlane.f32.xlu0 %v2336
        %v2338 = vpop.xlane.xlu0 %2337
        %v2339 = vsel %vm1295, %v2323, 0.0
        %2340 = vadd.xlane.f32.xlu0 %v2339
        %v2341 = vpop.xlane.xlu0 %2340
        %v2342 = vsel %vm1295, %v2325, 0.0
        %2343 = vadd.xlane.f32.xlu0 %v2342
        %v2344 = vpop.xlane.xlu0 %2343
        %v2345 = vsel %vm1295, %v2327, 0.0
        %2346 = vadd.xlane.f32.xlu0 %v2345
        %v2347 = vpop.xlane.xlu0 %2346
        %v2348 = vsel %vm1295, %v2329, 0.0
        %2349 = vadd.xlane.f32.xlu0 %v2348
        %v2350 = vpop.xlane.xlu0 %2349
        %v2351 = vsel %vm1295, %v2331, 0.0
        %2352 = vadd.xlane.f32.xlu0 %v2351
        %v2353 = vpop.xlane.xlu0 %2352
        %v2354 = vsel %vm1295, %v2333, 0.0
        %2355 = vadd.xlane.f32.xlu0 %v2354
        %v2356 = vpop.xlane.xlu0 %2355
        %v2357 = vsel %vm1295, %v2335, 0.0
        %2358 = vadd.xlane.f32.xlu0 %v2357
        %v2359 = vpop.xlane.xlu0 %2358
        %v2360 = vrcp.pop %v2338
        %v2361 = vrcp.pop %v2341
        %v2362 = vrcp.pop %v2344
        %v2363 = vrcp.pop %v2347
        %v2364 = vrcp.pop %v2350
        %v2365 = vrcp.pop %v2353
        %v2366 = vrcp.pop %v2356
        %v2367 = vrcp.pop %v2359
        %v2368 = vmul.f32 %v2321, %v2360
        %v2369 = vmul.f32 %v2323, %v2361
        %v2370 = vmul.f32 %v2325, %v2362
        %v2371 = vmul.f32 %v2327, %v2363
        %v2372 = vmul.f32 %v2329, %v2364
        %v2373 = vmul.f32 %v2331, %v2365
        %v2374 = vmul.f32 %v2333, %v2366
        %v2375 = vmul.f32 %v2335, %v2367
        %v2376 = vpack.c.bf16 %v2369, %v2368
        %v2377 = vpack.c.bf16 %v2371, %v2370
        %v2378 = vpack.c.bf16 %v2373, %v2372
        %v2379 = vpack.c.bf16 %v2375, %v2374
        %2380 = vrot.lane.b32.xlu0 %v1083, 64
        %v2381 = vpop.permute.xlu0 %2380
        %v2384 = vsel %vm1295, %v2376, 0
        %2386 = vmatprep.subr.bf16.mxu0 0
        %2387 = vmatpush1.bf16.msra.mxu0 %v2381
        %2388 = vmatprep.subr.bf16.mxu0 0
        %2389 = vmatpush1.bf16.msra.mxu0 0
        %2390 = vmatprep.subr.bf16.mxu0 0
        %2391 = vmatpush1.bf16.msra.mxu0 0
        %2392 = vmatprep.subr.bf16.mxu0 0
        %2393 = vmatpush1.bf16.msra.mxu0 0
        %2394 = vmatprep.subr.bf16.mxu0 0
        %2395 = vmatpush1.bf16.msra.mxu0 0
        %2396 = vmatprep.subr.bf16.mxu0 0
        %2397 = vmatpush1.bf16.msra.mxu0 0
        %2398 = vmatprep.subr.bf16.mxu0 0
        %2399 = vmatpush1.bf16.msra.mxu0 0
        %2400 = vmatprep.subr.bf16.mxu0 0
        %2401 = vmatpush1.bf16.msra.mxu0 0
        %2402 = vmatprep.subr.bf16.mxu0 0
        %2403 = vmatpush1.bf16.msra.mxu0 0
        %2404 = vmatprep.subr.bf16.mxu0 0
        %2405 = vmatpush1.bf16.msra.mxu0 0
        %2406 = vmatprep.subr.bf16.mxu0 0
        %2407 = vmatpush1.bf16.msra.mxu0 0
        %2408 = vmatprep.subr.bf16.mxu0 0
        %2409 = vmatpush1.bf16.msra.mxu0 0
        %2410 = vmatprep.subr.bf16.mxu0 0
        %2411 = vmatpush1.bf16.msra.mxu0 0
        %2412 = vmatprep.subr.bf16.mxu0 0
        %2413 = vmatpush1.bf16.msra.mxu0 0
        %2414 = vmatprep.subr.bf16.mxu0 0
        %2415 = vmatpush1.bf16.msra.mxu0 0
        %2416 = vmatprep.subr.bf16.mxu0 0
        %2417 = vmatpush1.bf16.msra.mxu0 0
        %2418 = vmatprep.mubr.bf16.mxu0 0
        %2419 = vmatmul.mubr.bf16.gmra.mrb[0].mxu0 %v2384
        %v2420 = vpop.f32.mrb[0].mxu0
        %v2421 = vadd.f32 0.0, %v2420
        %v2422 = vpop.f32.mrb[0].mxu0
        %v2423 = vpop.f32.mrb[0].mxu0
        %v2424 = vadd.f32 0.0, %v2423
        %v2425 = vpop.f32.mrb[0].mxu0
        %2426 = vdwg.mxu0
        %2427 = vrot.lane.b32.xlu0 %v1084, 64
        %v2428 = vpop.permute.xlu0 %2427
        %v2431 = vsel %vm1295, %v2377, 0
        %2433 = vmatprep.subr.bf16.mxu0 0
        %2434 = vmatpush1.bf16.msra.mxu0 %v2428
        %2435 = vmatprep.subr.bf16.mxu0 0
        %2436 = vmatpush1.bf16.msra.mxu0 0
        %2437 = vmatprep.subr.bf16.mxu0 0
        %2438 = vmatpush1.bf16.msra.mxu0 0
        %2439 = vmatprep.subr.bf16.mxu0 0
        %2440 = vmatpush1.bf16.msra.mxu0 0
        %2441 = vmatprep.subr.bf16.mxu0 0
        %2442 = vmatpush1.bf16.msra.mxu0 0
        %2443 = vmatprep.subr.bf16.mxu0 0
        %2444 = vmatpush1.bf16.msra.mxu0 0
        %2445 = vmatprep.subr.bf16.mxu0 0
        %2446 = vmatpush1.bf16.msra.mxu0 0
        %2447 = vmatprep.subr.bf16.mxu0 0
        %2448 = vmatpush1.bf16.msra.mxu0 0
        %2449 = vmatprep.subr.bf16.mxu0 0
        %2450 = vmatpush1.bf16.msra.mxu0 0
        %2451 = vmatprep.subr.bf16.mxu0 0
        %2452 = vmatpush1.bf16.msra.mxu0 0
        %2453 = vmatprep.subr.bf16.mxu0 0
        %2454 = vmatpush1.bf16.msra.mxu0 0
        %2455 = vmatprep.subr.bf16.mxu0 0
        %2456 = vmatpush1.bf16.msra.mxu0 0
        %2457 = vmatprep.subr.bf16.mxu0 0
        %2458 = vmatpush1.bf16.msra.mxu0 0
        %2459 = vmatprep.subr.bf16.mxu0 0
        %2460 = vmatpush1.bf16.msra.mxu0 0
        %2461 = vmatprep.subr.bf16.mxu0 0
        %2462 = vmatpush1.bf16.msra.mxu0 0
        %2463 = vmatprep.subr.bf16.mxu0 0
        %2464 = vmatpush1.bf16.msra.mxu0 0
        %2465 = vmatprep.mubr.bf16.mxu0 0
        %2466 = vmatmul.mubr.bf16.gmra.mrb[0].mxu0 %v2431
        %v2467 = vpop.f32.mrb[0].mxu0
        %v2468 = vadd.f32 0.0, %v2467
        %v2469 = vpop.f32.mrb[0].mxu0
        %v2470 = vpop.f32.mrb[0].mxu0
        %v2471 = vadd.f32 0.0, %v2470
        %v2472 = vpop.f32.mrb[0].mxu0
        %2473 = vdwg.mxu0
        %2474 = vrot.lane.b32.xlu0 %v1085, 64
        %v2475 = vpop.permute.xlu0 %2474
        %v2478 = vsel %vm1295, %v2378, 0
        %2480 = vmatprep.subr.bf16.mxu0 0
        %2481 = vmatpush1.bf16.msra.mxu0 %v2475
        %2482 = vmatprep.subr.bf16.mxu0 0
        %2483 = vmatpush1.bf16.msra.mxu0 0
        %2484 = vmatprep.subr.bf16.mxu0 0
        %2485 = vmatpush1.bf16.msra.mxu0 0
        %2486 = vmatprep.subr.bf16.mxu0 0
        %2487 = vmatpush1.bf16.msra.mxu0 0
        %2488 = vmatprep.subr.bf16.mxu0 0
        %2489 = vmatpush1.bf16.msra.mxu0 0
        %2490 = vmatprep.subr.bf16.mxu0 0
        %2491 = vmatpush1.bf16.msra.mxu0 0
        %2492 = vmatprep.subr.bf16.mxu0 0
        %2493 = vmatpush1.bf16.msra.mxu0 0
        %2494 = vmatprep.subr.bf16.mxu0 0
        %2495 = vmatpush1.bf16.msra.mxu0 0
        %2496 = vmatprep.subr.bf16.mxu0 0
        %2497 = vmatpush1.bf16.msra.mxu0 0
        %2498 = vmatprep.subr.bf16.mxu0 0
        %2499 = vmatpush1.bf16.msra.mxu0 0
        %2500 = vmatprep.subr.bf16.mxu0 0
        %2501 = vmatpush1.bf16.msra.mxu0 0
        %2502 = vmatprep.subr.bf16.mxu0 0
        %2503 = vmatpush1.bf16.msra.mxu0 0
        %2504 = vmatprep.subr.bf16.mxu0 0
        %2505 = vmatpush1.bf16.msra.mxu0 0
        %2506 = vmatprep.subr.bf16.mxu0 0
        %2507 = vmatpush1.bf16.msra.mxu0 0
        %2508 = vmatprep.subr.bf16.mxu0 0
        %2509 = vmatpush1.bf16.msra.mxu0 0
        %2510 = vmatprep.subr.bf16.mxu0 0
        %2511 = vmatpush1.bf16.msra.mxu0 0
        %2512 = vmatprep.mubr.bf16.mxu0 0
        %2513 = vmatmul.mubr.bf16.gmra.mrb[0].mxu0 %v2478
        %v2514 = vpop.f32.mrb[0].mxu0
        %v2515 = vadd.f32 0.0, %v2514
        %v2516 = vpop.f32.mrb[0].mxu0
        %v2517 = vpop.f32.mrb[0].mxu0
        %v2518 = vadd.f32 0.0, %v2517
        %v2519 = vpop.f32.mrb[0].mxu0
        %2520 = vdwg.mxu0
        %2521 = vrot.lane.b32.xlu0 %v1086, 64
        %v2522 = vpop.permute.xlu0 %2521
        %v2525 = vsel %vm1295, %v2379, 0
        %2527 = vmatprep.subr.bf16.mxu0 0
        %2528 = vmatpush1.bf16.msra.mxu0 %v2522
        %2529 = vmatprep.subr.bf16.mxu0 0
        %2530 = vmatpush1.bf16.msra.mxu0 0
        %2531 = vmatprep.subr.bf16.mxu0 0
        %2532 = vmatpush1.bf16.msra.mxu0 0
        %2533 = vmatprep.subr.bf16.mxu0 0
        %2534 = vmatpush1.bf16.msra.mxu0 0
        %2535 = vmatprep.subr.bf16.mxu0 0
        %2536 = vmatpush1.bf16.msra.mxu0 0
        %2537 = vmatprep.subr.bf16.mxu0 0
        %2538 = vmatpush1.bf16.msra.mxu0 0
        %2539 = vmatprep.subr.bf16.mxu0 0
        %2540 = vmatpush1.bf16.msra.mxu0 0
        %2541 = vmatprep.subr.bf16.mxu0 0
        %2542 = vmatpush1.bf16.msra.mxu0 0
        %2543 = vmatprep.subr.bf16.mxu0 0
        %2544 = vmatpush1.bf16.msra.mxu0 0
        %2545 = vmatprep.subr.bf16.mxu0 0
        %2546 = vmatpush1.bf16.msra.mxu0 0
        %2547 = vmatprep.subr.bf16.mxu0 0
        %2548 = vmatpush1.bf16.msra.mxu0 0
        %2549 = vmatprep.subr.bf16.mxu0 0
        %2550 = vmatpush1.bf16.msra.mxu0 0
        %2551 = vmatprep.subr.bf16.mxu0 0
        %2552 = vmatpush1.bf16.msra.mxu0 0
        %2553 = vmatprep.subr.bf16.mxu0 0
        %2554 = vmatpush1.bf16.msra.mxu0 0
        %2555 = vmatprep.subr.bf16.mxu0 0
        %2556 = vmatpush1.bf16.msra.mxu0 0
        %2557 = vmatprep.subr.bf16.mxu0 0
        %2558 = vmatpush1.bf16.msra.mxu0 0
        %2559 = vmatprep.mubr.bf16.mxu0 0
        %2560 = vmatmul.mubr.bf16.gmra.mrb[0].mxu0 %v2525
        %v2561 = vpop.f32.mrb[0].mxu0
        %v2562 = vadd.f32 0.0, %v2561
        %v2563 = vpop.f32.mrb[0].mxu0
        %v2564 = vpop.f32.mrb[0].mxu0
        %v2565 = vadd.f32 0.0, %v2564
        %v2566 = vpop.f32.mrb[0].mxu0
        %2567 = vdwg.mxu0
        %v2568 = vpack.c.bf16 %v2424, %v2421
        %v2569 = vpack.c.bf16 %v2471, %v2468
        %v2570 = vpack.c.bf16 %v2518, %v2515
        %v2571 = vpack.c.bf16 %v2565, %v2562
        %2572 = vrot.lane.b32.xlu0 %v1075, 32
        %v2573 = vpop.permute.xlu0 %2572
        %2574 = vrot.lane.b32.xlu0 %v1079, 32
        %v2575 = vpop.permute.xlu0 %2574
        %v2577 = vsel %vm1094, %v2573, 0
        %v2580 = vsel %vm1094, %v2575, 0
        %2582 = vmatprep.subr.bf16.mxu0 0
        %2583 = vmatpush1.bf16.xpose.msra.mxu0 %v2580
        %2584 = vmatprep.subr.bf16.mxu0 0
        %2585 = vmatpush1.bf16.xpose.msra.mxu0 0
        %2586 = vmatprep.subr.bf16.mxu0 0
        %2587 = vmatpush1.bf16.xpose.msra.mxu0 0
        %2588 = vmatprep.subr.bf16.mxu0 0
        %2589 = vmatpush1.bf16.xpose.msra.mxu0 0
        %2590 = vmatprep.subr.bf16.mxu0 0
        %2591 = vmatpush1.bf16.xpose.msra.mxu0 0
        %2592 = vmatprep.subr.bf16.mxu0 0
        %2593 = vmatpush1.bf16.xpose.msra.mxu0 0
        %2594 = vmatprep.subr.bf16.mxu0 0
        %2595 = vmatpush1.bf16.xpose.msra.mxu0 0
        %2596 = vmatprep.subr.bf16.mxu0 0
        %2597 = vmatpush1.bf16.xpose.msra.mxu0 0
        %2598 = vmatprep.subr.bf16.mxu0 0
        %2599 = vmatpush1.bf16.xpose.msra.mxu0 0
        %2600 = vmatprep.subr.bf16.mxu0 0
        %2601 = vmatpush1.bf16.xpose.msra.mxu0 0
        %2602 = vmatprep.subr.bf16.mxu0 0
        %2603 = vmatpush1.bf16.xpose.msra.mxu0 0
        %2604 = vmatprep.subr.bf16.mxu0 0
        %2605 = vmatpush1.bf16.xpose.msra.mxu0 0
        %2606 = vmatprep.subr.bf16.mxu0 0
        %2607 = vmatpush1.bf16.xpose.msra.mxu0 0
        %2608 = vmatprep.subr.bf16.mxu0 0
        %2609 = vmatpush1.bf16.xpose.msra.mxu0 0
        %2610 = vmatprep.subr.bf16.mxu0 0
        %2611 = vmatpush1.bf16.xpose.msra.mxu0 0
        %2612 = vmatprep.subr.bf16.mxu0 0
        %2613 = vmatpush1.bf16.xpose.msra.mxu0 0
        %2614 = vmatprep.mubr.bf16.mxu0 0
        %2615 = vmatmul.mubr.bf16.gmra.mrb[0].mxu0 %v2577
        %v2616 = vpop.f32.mrb[0].mxu0
        %v2617 = vadd.f32 0.0, %v2616
        %v2618 = vpop.f32.mrb[0].mxu0
        %v2619 = vpop.f32.mrb[0].mxu0
        %v2620 = vadd.f32 0.0, %v2619
        %v2621 = vpop.f32.mrb[0].mxu0
        %2622 = vdwg.mxu0
        %2623 = vrot.lane.b32.xlu0 %v1076, 32
        %v2624 = vpop.permute.xlu0 %2623
        %2625 = vrot.lane.b32.xlu0 %v1080, 32
        %v2626 = vpop.permute.xlu0 %2625
        %v2628 = vsel %vm1094, %v2624, 0
        %v2631 = vsel %vm1094, %v2626, 0
        %2633 = vmatprep.subr.bf16.mxu0 0
        %2634 = vmatpush1.bf16.xpose.msra.mxu0 %v2631
        %2635 = vmatprep.subr.bf16.mxu0 0
        %2636 = vmatpush1.bf16.xpose.msra.mxu0 0
        %2637 = vmatprep.subr.bf16.mxu0 0
        %2638 = vmatpush1.bf16.xpose.msra.mxu0 0
        %2639 = vmatprep.subr.bf16.mxu0 0
        %2640 = vmatpush1.bf16.xpose.msra.mxu0 0
        %2641 = vmatprep.subr.bf16.mxu0 0
        %2642 = vmatpush1.bf16.xpose.msra.mxu0 0
        %2643 = vmatprep.subr.bf16.mxu0 0
        %2644 = vmatpush1.bf16.xpose.msra.mxu0 0
        %2645 = vmatprep.subr.bf16.mxu0 0
        %2646 = vmatpush1.bf16.xpose.msra.mxu0 0
        %2647 = vmatprep.subr.bf16.mxu0 0
        %2648 = vmatpush1.bf16.xpose.msra.mxu0 0
        %2649 = vmatprep.subr.bf16.mxu0 0
        %2650 = vmatpush1.bf16.xpose.msra.mxu0 0
        %2651 = vmatprep.subr.bf16.mxu0 0
        %2652 = vmatpush1.bf16.xpose.msra.mxu0 0
        %2653 = vmatprep.subr.bf16.mxu0 0
        %2654 = vmatpush1.bf16.xpose.msra.mxu0 0
        %2655 = vmatprep.subr.bf16.mxu0 0
        %2656 = vmatpush1.bf16.xpose.msra.mxu0 0
        %2657 = vmatprep.subr.bf16.mxu0 0
        %2658 = vmatpush1.bf16.xpose.msra.mxu0 0
        %2659 = vmatprep.subr.bf16.mxu0 0
        %2660 = vmatpush1.bf16.xpose.msra.mxu0 0
        %2661 = vmatprep.subr.bf16.mxu0 0
        %2662 = vmatpush1.bf16.xpose.msra.mxu0 0
        %2663 = vmatprep.subr.bf16.mxu0 0
        %2664 = vmatpush1.bf16.xpose.msra.mxu0 0
        %2665 = vmatprep.mubr.bf16.mxu0 0
        %2666 = vmatmul.mubr.bf16.gmra.mrb[0].mxu0 %v2628
        %v2667 = vpop.f32.mrb[0].mxu0
        %v2668 = vadd.f32 0.0, %v2667
        %v2669 = vpop.f32.mrb[0].mxu0
        %v2670 = vpop.f32.mrb[0].mxu0
        %v2671 = vadd.f32 0.0, %v2670
        %v2672 = vpop.f32.mrb[0].mxu0
        %2673 = vdwg.mxu0
        %2674 = vrot.lane.b32.xlu0 %v1077, 32
        %v2675 = vpop.permute.xlu0 %2674
        %2676 = vrot.lane.b32.xlu0 %v1081, 32
        %v2677 = vpop.permute.xlu0 %2676
        %v2679 = vsel %vm1094, %v2675, 0
        %v2682 = vsel %vm1094, %v2677, 0
        %2684 = vmatprep.subr.bf16.mxu0 0
        %2685 = vmatpush1.bf16.xpose.msra.mxu0 %v2682
        %2686 = vmatprep.subr.bf16.mxu0 0
        %2687 = vmatpush1.bf16.xpose.msra.mxu0 0
        %2688 = vmatprep.subr.bf16.mxu0 0
        %2689 = vmatpush1.bf16.xpose.msra.mxu0 0
        %2690 = vmatprep.subr.bf16.mxu0 0
        %2691 = vmatpush1.bf16.xpose.msra.mxu0 0
        %2692 = vmatprep.subr.bf16.mxu0 0
        %2693 = vmatpush1.bf16.xpose.msra.mxu0 0
        %2694 = vmatprep.subr.bf16.mxu0 0
        %2695 = vmatpush1.bf16.xpose.msra.mxu0 0
        %2696 = vmatprep.subr.bf16.mxu0 0
        %2697 = vmatpush1.bf16.xpose.msra.mxu0 0
        %2698 = vmatprep.subr.bf16.mxu0 0
        %2699 = vmatpush1.bf16.xpose.msra.mxu0 0
        %2700 = vmatprep.subr.bf16.mxu0 0
        %2701 = vmatpush1.bf16.xpose.msra.mxu0 0
        %2702 = vmatprep.subr.bf16.mxu0 0
        %2703 = vmatpush1.bf16.xpose.msra.mxu0 0
        %2704 = vmatprep.subr.bf16.mxu0 0
        %2705 = vmatpush1.bf16.xpose.msra.mxu0 0
        %2706 = vmatprep.subr.bf16.mxu0 0
        %2707 = vmatpush1.bf16.xpose.msra.mxu0 0
        %2708 = vmatprep.subr.bf16.mxu0 0
        %2709 = vmatpush1.bf16.xpose.msra.mxu0 0
        %2710 = vmatprep.subr.bf16.mxu0 0
        %2711 = vmatpush1.bf16.xpose.msra.mxu0 0
        %2712 = vmatprep.subr.bf16.mxu0 0
        %2713 = vmatpush1.bf16.xpose.msra.mxu0 0
        %2714 = vmatprep.subr.bf16.mxu0 0
        %2715 = vmatpush1.bf16.xpose.msra.mxu0 0
        %2716 = vmatprep.mubr.bf16.mxu0 0
        %2717 = vmatmul.mubr.bf16.gmra.mrb[0].mxu0 %v2679
        %v2718 = vpop.f32.mrb[0].mxu0
        %v2719 = vadd.f32 0.0, %v2718
        %v2720 = vpop.f32.mrb[0].mxu0
        %v2721 = vpop.f32.mrb[0].mxu0
        %v2722 = vadd.f32 0.0, %v2721
        %v2723 = vpop.f32.mrb[0].mxu0
        %2724 = vdwg.mxu0
        %2725 = vrot.lane.b32.xlu0 %v1078, 32
        %v2726 = vpop.permute.xlu0 %2725
        %2727 = vrot.lane.b32.xlu0 %v1082, 32
        %v2728 = vpop.permute.xlu0 %2727
        %v2730 = vsel %vm1094, %v2726, 0
        %v2733 = vsel %vm1094, %v2728, 0
        %2735 = vmatprep.subr.bf16.mxu0 0
        %2736 = vmatpush1.bf16.xpose.msra.mxu0 %v2733
        %2737 = vmatprep.subr.bf16.mxu0 0
        %2738 = vmatpush1.bf16.xpose.msra.mxu0 0
        %2739 = vmatprep.subr.bf16.mxu0 0
        %2740 = vmatpush1.bf16.xpose.msra.mxu0 0
        %2741 = vmatprep.subr.bf16.mxu0 0
        %2742 = vmatpush1.bf16.xpose.msra.mxu0 0
        %2743 = vmatprep.subr.bf16.mxu0 0
        %2744 = vmatpush1.bf16.xpose.msra.mxu0 0
        %2745 = vmatprep.subr.bf16.mxu0 0
        %2746 = vmatpush1.bf16.xpose.msra.mxu0 0
        %2747 = vmatprep.subr.bf16.mxu0 0
        %2748 = vmatpush1.bf16.xpose.msra.mxu0 0
        %2749 = vmatprep.subr.bf16.mxu0 0
        %2750 = vmatpush1.bf16.xpose.msra.mxu0 0
        %2751 = vmatprep.subr.bf16.mxu0 0
        %2752 = vmatpush1.bf16.xpose.msra.mxu0 0
        %2753 = vmatprep.subr.bf16.mxu0 0
        %2754 = vmatpush1.bf16.xpose.msra.mxu0 0
        %2755 = vmatprep.subr.bf16.mxu0 0
        %2756 = vmatpush1.bf16.xpose.msra.mxu0 0
        %2757 = vmatprep.subr.bf16.mxu0 0
        %2758 = vmatpush1.bf16.xpose.msra.mxu0 0
        %2759 = vmatprep.subr.bf16.mxu0 0
        %2760 = vmatpush1.bf16.xpose.msra.mxu0 0
        %2761 = vmatprep.subr.bf16.mxu0 0
        %2762 = vmatpush1.bf16.xpose.msra.mxu0 0
        %2763 = vmatprep.subr.bf16.mxu0 0
        %2764 = vmatpush1.bf16.xpose.msra.mxu0 0
        %2765 = vmatprep.subr.bf16.mxu0 0
        %2766 = vmatpush1.bf16.xpose.msra.mxu0 0
        %2767 = vmatprep.mubr.bf16.mxu0 0
        %2768 = vmatmul.mubr.bf16.gmra.mrb[0].mxu0 %v2730
        %v2769 = vpop.f32.mrb[0].mxu0
        %v2770 = vadd.f32 0.0, %v2769
        %v2771 = vpop.f32.mrb[0].mxu0
        %v2772 = vpop.f32.mrb[0].mxu0
        %v2773 = vadd.f32 0.0, %v2772
        %v2774 = vpop.f32.mrb[0].mxu0
        %2775 = vdwg.mxu0
        %v2776 = vsel %vm1285, %v2617, -1.7677669e+09
        %v2777 = vsel %vm1286, %v2620, -1.7677669e+09
        %v2778 = vsel %vm1285, %v2668, -1.7677669e+09
        %v2779 = vsel %vm1286, %v2671, -1.7677669e+09
        %v2780 = vsel %vm1285, %v2719, -1.7677669e+09
        %v2781 = vsel %vm1286, %v2722, -1.7677669e+09
        %v2782 = vsel %vm1285, %v2770, -1.7677669e+09
        %v2783 = vsel %vm1286, %v2773, -1.7677669e+09
        %v2784 = vsel %vm1295, %v2776, -inf
        %2785 = vmax.xlane.f32.xlu0 %v2784
        %v2786 = vpop.xlane.xlu0 %2785
        %v2787 = vsel %vm1295, %v2777, -inf
        %2788 = vmax.xlane.f32.xlu0 %v2787
        %v2789 = vpop.xlane.xlu0 %2788
        %v2790 = vsel %vm1295, %v2778, -inf
        %2791 = vmax.xlane.f32.xlu0 %v2790
        %v2792 = vpop.xlane.xlu0 %2791
        %v2793 = vsel %vm1295, %v2779, -inf
        %2794 = vmax.xlane.f32.xlu0 %v2793
        %v2795 = vpop.xlane.xlu0 %2794
        %v2796 = vsel %vm1295, %v2780, -inf
        %2797 = vmax.xlane.f32.xlu0 %v2796
        %v2798 = vpop.xlane.xlu0 %2797
        %v2799 = vsel %vm1295, %v2781, -inf
        %2800 = vmax.xlane.f32.xlu0 %v2799
        %v2801 = vpop.xlane.xlu0 %2800
        %v2802 = vsel %vm1295, %v2782, -inf
        %2803 = vmax.xlane.f32.xlu0 %v2802
        %v2804 = vpop.xlane.xlu0 %2803
        %v2805 = vsel %vm1295, %v2783, -inf
        %2806 = vmax.xlane.f32.xlu0 %v2805
        %v2807 = vpop.xlane.xlu0 %2806
        %v2808 = vsub.f32 %v2776, %v2786
        %v2809 = vsub.f32 %v2777, %v2789
        %v2810 = vsub.f32 %v2778, %v2792
        %v2811 = vsub.f32 %v2779, %v2795
        %v2812 = vsub.f32 %v2780, %v2798
        %v2813 = vsub.f32 %v2781, %v2801
        %v2814 = vsub.f32 %v2782, %v2804
        %v2815 = vsub.f32 %v2783, %v2807
        %v2816 = vmul.f32 %v2808, 1.442695
        %v2817 = vpow.pop %v2816
        %v2818 = vmul.f32 %v2809, 1.442695
        %v2819 = vpow.pop %v2818
        %v2820 = vmul.f32 %v2810, 1.442695
        %v2821 = vpow.pop %v2820
        %v2822 = vmul.f32 %v2811, 1.442695
        %v2823 = vpow.pop %v2822
        %v2824 = vmul.f32 %v2812, 1.442695
        %v2825 = vpow.pop %v2824
        %v2826 = vmul.f32 %v2813, 1.442695
        %v2827 = vpow.pop %v2826
        %v2828 = vmul.f32 %v2814, 1.442695
        %v2829 = vpow.pop %v2828
        %v2830 = vmul.f32 %v2815, 1.442695
        %v2831 = vpow.pop %v2830
        %v2832 = vsel %vm1295, %v2817, 0.0
        %2833 = vadd.xlane.f32.xlu0 %v2832
        %v2834 = vpop.xlane.xlu0 %2833
        %v2835 = vsel %vm1295, %v2819, 0.0
        %2836 = vadd.xlane.f32.xlu0 %v2835
        %v2837 = vpop.xlane.xlu0 %2836
        %v2838 = vsel %vm1295, %v2821, 0.0
        %2839 = vadd.xlane.f32.xlu0 %v2838
        %v2840 = vpop.xlane.xlu0 %2839
        %v2841 = vsel %vm1295, %v2823, 0.0
        %2842 = vadd.xlane.f32.xlu0 %v2841
        %v2843 = vpop.xlane.xlu0 %2842
        %v2844 = vsel %vm1295, %v2825, 0.0
        %2845 = vadd.xlane.f32.xlu0 %v2844
        %v2846 = vpop.xlane.xlu0 %2845
        %v2847 = vsel %vm1295, %v2827, 0.0
        %2848 = vadd.xlane.f32.xlu0 %v2847
        %v2849 = vpop.xlane.xlu0 %2848
        %v2850 = vsel %vm1295, %v2829, 0.0
        %2851 = vadd.xlane.f32.xlu0 %v2850
        %v2852 = vpop.xlane.xlu0 %2851
        %v2853 = vsel %vm1295, %v2831, 0.0
        %2854 = vadd.xlane.f32.xlu0 %v2853
        %v2855 = vpop.xlane.xlu0 %2854
        %v2856 = vrcp.pop %v2834
        %v2857 = vrcp.pop %v2837
        %v2858 = vrcp.pop %v2840
        %v2859 = vrcp.pop %v2843
        %v2860 = vrcp.pop %v2846
        %v2861 = vrcp.pop %v2849
        %v2862 = vrcp.pop %v2852
        %v2863 = vrcp.pop %v2855
        %v2864 = vmul.f32 %v2817, %v2856
        %v2865 = vmul.f32 %v2819, %v2857
        %v2866 = vmul.f32 %v2821, %v2858
        %v2867 = vmul.f32 %v2823, %v2859
        %v2868 = vmul.f32 %v2825, %v2860
        %v2869 = vmul.f32 %v2827, %v2861
        %v2870 = vmul.f32 %v2829, %v2862
        %v2871 = vmul.f32 %v2831, %v2863
        %v2872 = vpack.c.bf16 %v2865, %v2864
        %v2873 = vpack.c.bf16 %v2867, %v2866
        %v2874 = vpack.c.bf16 %v2869, %v2868
        %v2875 = vpack.c.bf16 %v2871, %v2870
        %2876 = vrot.lane.b32.xlu0 %v1083, 32
        %v2877 = vpop.permute.xlu0 %2876
        %v2880 = vsel %vm1295, %v2872, 0
        %2882 = vmatprep.subr.bf16.mxu0 0
        %2883 = vmatpush1.bf16.msra.mxu0 %v2877
        %2884 = vmatprep.subr.bf16.mxu0 0
        %2885 = vmatpush1.bf16.msra.mxu0 0
        %2886 = vmatprep.subr.bf16.mxu0 0
        %2887 = vmatpush1.bf16.msra.mxu0 0
        %2888 = vmatprep.subr.bf16.mxu0 0
        %2889 = vmatpush1.bf16.msra.mxu0 0
        %2890 = vmatprep.subr.bf16.mxu0 0
        %2891 = vmatpush1.bf16.msra.mxu0 0
        %2892 = vmatprep.subr.bf16.mxu0 0
        %2893 = vmatpush1.bf16.msra.mxu0 0
        %2894 = vmatprep.subr.bf16.mxu0 0
        %2895 = vmatpush1.bf16.msra.mxu0 0
        %2896 = vmatprep.subr.bf16.mxu0 0
        %2897 = vmatpush1.bf16.msra.mxu0 0
        %2898 = vmatprep.subr.bf16.mxu0 0
        %2899 = vmatpush1.bf16.msra.mxu0 0
        %2900 = vmatprep.subr.bf16.mxu0 0
        %2901 = vmatpush1.bf16.msra.mxu0 0
        %2902 = vmatprep.subr.bf16.mxu0 0
        %2903 = vmatpush1.bf16.msra.mxu0 0
        %2904 = vmatprep.subr.bf16.mxu0 0
        %2905 = vmatpush1.bf16.msra.mxu0 0
        %2906 = vmatprep.subr.bf16.mxu0 0
        %2907 = vmatpush1.bf16.msra.mxu0 0
        %2908 = vmatprep.subr.bf16.mxu0 0
        %2909 = vmatpush1.bf16.msra.mxu0 0
        %2910 = vmatprep.subr.bf16.mxu0 0
        %2911 = vmatpush1.bf16.msra.mxu0 0
        %2912 = vmatprep.subr.bf16.mxu0 0
        %2913 = vmatpush1.bf16.msra.mxu0 0
        %2914 = vmatprep.mubr.bf16.mxu0 0
        %2915 = vmatmul.mubr.bf16.gmra.mrb[0].mxu0 %v2880
        %v2916 = vpop.f32.mrb[0].mxu0
        %v2917 = vadd.f32 0.0, %v2916
        %v2918 = vpop.f32.mrb[0].mxu0
        %v2919 = vpop.f32.mrb[0].mxu0
        %v2920 = vadd.f32 0.0, %v2919
        %v2921 = vpop.f32.mrb[0].mxu0
        %2922 = vdwg.mxu0
        %2923 = vrot.lane.b32.xlu0 %v1084, 32
        %v2924 = vpop.permute.xlu0 %2923
        %v2927 = vsel %vm1295, %v2873, 0
        %2929 = vmatprep.subr.bf16.mxu0 0
        %2930 = vmatpush1.bf16.msra.mxu0 %v2924
        %2931 = vmatprep.subr.bf16.mxu0 0
        %2932 = vmatpush1.bf16.msra.mxu0 0
        %2933 = vmatprep.subr.bf16.mxu0 0
        %2934 = vmatpush1.bf16.msra.mxu0 0
        %2935 = vmatprep.subr.bf16.mxu0 0
        %2936 = vmatpush1.bf16.msra.mxu0 0
        %2937 = vmatprep.subr.bf16.mxu0 0
        %2938 = vmatpush1.bf16.msra.mxu0 0
        %2939 = vmatprep.subr.bf16.mxu0 0
        %2940 = vmatpush1.bf16.msra.mxu0 0
        %2941 = vmatprep.subr.bf16.mxu0 0
        %2942 = vmatpush1.bf16.msra.mxu0 0
        %2943 = vmatprep.subr.bf16.mxu0 0
        %2944 = vmatpush1.bf16.msra.mxu0 0
        %2945 = vmatprep.subr.bf16.mxu0 0
        %2946 = vmatpush1.bf16.msra.mxu0 0
        %2947 = vmatprep.subr.bf16.mxu0 0
        %2948 = vmatpush1.bf16.msra.mxu0 0
        %2949 = vmatprep.subr.bf16.mxu0 0
        %2950 = vmatpush1.bf16.msra.mxu0 0
        %2951 = vmatprep.subr.bf16.mxu0 0
        %2952 = vmatpush1.bf16.msra.mxu0 0
        %2953 = vmatprep.subr.bf16.mxu0 0
        %2954 = vmatpush1.bf16.msra.mxu0 0
        %2955 = vmatprep.subr.bf16.mxu0 0
        %2956 = vmatpush1.bf16.msra.mxu0 0
        %2957 = vmatprep.subr.bf16.mxu0 0
        %2958 = vmatpush1.bf16.msra.mxu0 0
        %2959 = vmatprep.subr.bf16.mxu0 0
        %2960 = vmatpush1.bf16.msra.mxu0 0
        %2961 = vmatprep.mubr.bf16.mxu0 0
        %2962 = vmatmul.mubr.bf16.gmra.mrb[0].mxu0 %v2927
        %v2963 = vpop.f32.mrb[0].mxu0
        %v2964 = vadd.f32 0.0, %v2963
        %v2965 = vpop.f32.mrb[0].mxu0
        %v2966 = vpop.f32.mrb[0].mxu0
        %v2967 = vadd.f32 0.0, %v2966
        %v2968 = vpop.f32.mrb[0].mxu0
        %2969 = vdwg.mxu0
        %2970 = vrot.lane.b32.xlu0 %v1085, 32
        %v2971 = vpop.permute.xlu0 %2970
        %v2974 = vsel %vm1295, %v2874, 0
        %2976 = vmatprep.subr.bf16.mxu0 0
        %2977 = vmatpush1.bf16.msra.mxu0 %v2971
        %2978 = vmatprep.subr.bf16.mxu0 0
        %2979 = vmatpush1.bf16.msra.mxu0 0
        %2980 = vmatprep.subr.bf16.mxu0 0
        %2981 = vmatpush1.bf16.msra.mxu0 0
        %2982 = vmatprep.subr.bf16.mxu0 0
        %2983 = vmatpush1.bf16.msra.mxu0 0
        %2984 = vmatprep.subr.bf16.mxu0 0
        %2985 = vmatpush1.bf16.msra.mxu0 0
        %2986 = vmatprep.subr.bf16.mxu0 0
        %2987 = vmatpush1.bf16.msra.mxu0 0
        %2988 = vmatprep.subr.bf16.mxu0 0
        %2989 = vmatpush1.bf16.msra.mxu0 0
        %2990 = vmatprep.subr.bf16.mxu0 0
        %2991 = vmatpush1.bf16.msra.mxu0 0
        %2992 = vmatprep.subr.bf16.mxu0 0
        %2993 = vmatpush1.bf16.msra.mxu0 0
        %2994 = vmatprep.subr.bf16.mxu0 0
        %2995 = vmatpush1.bf16.msra.mxu0 0
        %2996 = vmatprep.subr.bf16.mxu0 0
        %2997 = vmatpush1.bf16.msra.mxu0 0
        %2998 = vmatprep.subr.bf16.mxu0 0
        %2999 = vmatpush1.bf16.msra.mxu0 0
        %3000 = vmatprep.subr.bf16.mxu0 0
        %3001 = vmatpush1.bf16.msra.mxu0 0
        %3002 = vmatprep.subr.bf16.mxu0 0
        %3003 = vmatpush1.bf16.msra.mxu0 0
        %3004 = vmatprep.subr.bf16.mxu0 0
        %3005 = vmatpush1.bf16.msra.mxu0 0
        %3006 = vmatprep.subr.bf16.mxu0 0
        %3007 = vmatpush1.bf16.msra.mxu0 0
        %3008 = vmatprep.mubr.bf16.mxu0 0
        %3009 = vmatmul.mubr.bf16.gmra.mrb[0].mxu0 %v2974
        %v3010 = vpop.f32.mrb[0].mxu0
        %v3011 = vadd.f32 0.0, %v3010
        %v3012 = vpop.f32.mrb[0].mxu0
        %v3013 = vpop.f32.mrb[0].mxu0
        %v3014 = vadd.f32 0.0, %v3013
        %v3015 = vpop.f32.mrb[0].mxu0
        %3016 = vdwg.mxu0
        %3017 = vrot.lane.b32.xlu0 %v1086, 32
        %v3018 = vpop.permute.xlu0 %3017
        %v3021 = vsel %vm1295, %v2875, 0
        %3023 = vmatprep.subr.bf16.mxu0 0
        %3024 = vmatpush1.bf16.msra.mxu0 %v3018
        %3025 = vmatprep.subr.bf16.mxu0 0
        %3026 = vmatpush1.bf16.msra.mxu0 0
        %3027 = vmatprep.subr.bf16.mxu0 0
        %3028 = vmatpush1.bf16.msra.mxu0 0
        %3029 = vmatprep.subr.bf16.mxu0 0
        %3030 = vmatpush1.bf16.msra.mxu0 0
        %3031 = vmatprep.subr.bf16.mxu0 0
        %3032 = vmatpush1.bf16.msra.mxu0 0
        %3033 = vmatprep.subr.bf16.mxu0 0
        %3034 = vmatpush1.bf16.msra.mxu0 0
        %3035 = vmatprep.subr.bf16.mxu0 0
        %3036 = vmatpush1.bf16.msra.mxu0 0
        %3037 = vmatprep.subr.bf16.mxu0 0
        %3038 = vmatpush1.bf16.msra.mxu0 0
        %3039 = vmatprep.subr.bf16.mxu0 0
        %3040 = vmatpush1.bf16.msra.mxu0 0
        %3041 = vmatprep.subr.bf16.mxu0 0
        %3042 = vmatpush1.bf16.msra.mxu0 0
        %3043 = vmatprep.subr.bf16.mxu0 0
        %3044 = vmatpush1.bf16.msra.mxu0 0
        %3045 = vmatprep.subr.bf16.mxu0 0
        %3046 = vmatpush1.bf16.msra.mxu0 0
        %3047 = vmatprep.subr.bf16.mxu0 0
        %3048 = vmatpush1.bf16.msra.mxu0 0
        %3049 = vmatprep.subr.bf16.mxu0 0
        %3050 = vmatpush1.bf16.msra.mxu0 0
        %3051 = vmatprep.subr.bf16.mxu0 0
        %3052 = vmatpush1.bf16.msra.mxu0 0
        %3053 = vmatprep.subr.bf16.mxu0 0
        %3054 = vmatpush1.bf16.msra.mxu0 0
        %3055 = vmatprep.mubr.bf16.mxu0 0
        %3056 = vmatmul.mubr.bf16.gmra.mrb[0].mxu0 %v3021
        %v3057 = vpop.f32.mrb[0].mxu0
        %v3058 = vadd.f32 0.0, %v3057
        %v3059 = vpop.f32.mrb[0].mxu0
        %v3060 = vpop.f32.mrb[0].mxu0
        %v3061 = vadd.f32 0.0, %v3060
        %v3062 = vpop.f32.mrb[0].mxu0
        %3063 = vdwg.mxu0
        %v3064 = vpack.c.bf16 %v2920, %v2917
        %v3065 = vpack.c.bf16 %v2967, %v2964
        %v3066 = vpack.c.bf16 %v3014, %v3011
        %v3067 = vpack.c.bf16 %v3061, %v3058
        %3072 = vrot.lane.b32.xlu0 %v2072, 32
        %v3073 = vpop.permute.xlu0 %3072
        %3074 = vrot.lane.b32.xlu0 %v2073, 32
        %v3075 = vpop.permute.xlu0 %3074
        %3076 = vrot.lane.b32.xlu0 %v2074, 32
        %v3077 = vpop.permute.xlu0 %3076
        %3078 = vrot.lane.b32.xlu0 %v2075, 32
        %v3079 = vpop.permute.xlu0 %3078
        %3084 = vrot.lane.b32.xlu0 %v2568, 64
        %v3085 = vpop.permute.xlu0 %3084
        %3086 = vrot.lane.b32.xlu0 %v2569, 64
        %v3087 = vpop.permute.xlu0 %3086
        %3088 = vrot.lane.b32.xlu0 %v2570, 64
        %v3089 = vpop.permute.xlu0 %3088
        %3090 = vrot.lane.b32.xlu0 %v2571, 64
        %v3091 = vpop.permute.xlu0 %3090
        %3096 = vrot.lane.b32.xlu0 %v3064, 96
        %v3097 = vpop.permute.xlu0 %3096
        %3098 = vrot.lane.b32.xlu0 %v3065, 96
        %v3099 = vpop.permute.xlu0 %3098
        %3100 = vrot.lane.b32.xlu0 %v3066, 96
        %v3101 = vpop.permute.xlu0 %3100
        %3102 = vrot.lane.b32.xlu0 %v3067, 96
        %v3103 = vpop.permute.xlu0 %3102
        %v3106 = vsel %vm1094, %v1564, %v3073
        %v3109 = vsel %vm1094, %v1565, %v3075
        %v3112 = vsel %vm1094, %v1566, %v3077
        %v3115 = vsel %vm1094, %v1567, %v3079
        %vm3116 = vcmask 523264
        %v3118 = vsel %vm3116, %v3106, %v3085
        %v3120 = vsel %vm3116, %v3109, %v3087
        %v3122 = vsel %vm3116, %v3112, %v3089
        %v3124 = vsel %vm3116, %v3115, %v3091
        %vm3125 = vcmask 785408
        %v3127 = vsel %vm3125, %v3118, %v3097
        %v3130 = vsel %vm3125, %v3120, %v3099
        %v3133 = vsel %vm3125, %v3122, %v3101
        %v3136 = vsel %vm3125, %v3124, %v3103
        %v3138 = vld [vmem:[#allocation11] sm:$0xf]
        %v3139 = vld [vmem:[#allocation11 + $0x4] sm:$0xf]
        %v3140 = vld [vmem:[#allocation11 + $0x8] sm:$0xf]
        %v3141 = vld [vmem:[#allocation11 + $0xc] sm:$0xf]
        %v3142 = vld [vmem:[#allocation11 + $0x10] sm:$0xf]
        %v3143 = vld [vmem:[#allocation11 + $0x14] sm:$0xf]
        %v3144 = vld [vmem:[#allocation11 + $0x18] sm:$0xf]
        %v3145 = vld [vmem:[#allocation11 + $0x1c] sm:$0xf]
        %v3146 = vld [vmem:[#allocation11 + $0x20] sm:$0xf]
        %v3147 = vld [vmem:[#allocation11 + $0x24] sm:$0xf]
        %v3148 = vld [vmem:[#allocation11 + $0x28] sm:$0xf]
        %v3149 = vld [vmem:[#allocation11 + $0x2c] sm:$0xf]
        %v3150 = vld [vmem:[#allocation11 + $0x30] sm:$0xf]
        %v3151 = vld [vmem:[#allocation11 + $0x34] sm:$0xf]
        %v3152 = vld [vmem:[#allocation11 + $0x38] sm:$0xf]
        %v3153 = vld [vmem:[#allocation11 + $0x3c] sm:$0xf]
        %v3154 = vld [vmem:[#allocation13] sm:$0x1]
        %v3156 = vlaneseq
        %v3157 = vshrl.u32 %v3156, 7
        %v3158 = vsub.s32 0, %v3157
        %v3159 = vrot.slane %v3154, %v3158
        %v3177 = vunpack.c.l.b16 %v3138
        %v3178 = vunpack.c.l.b16 %v3139
        %v3179 = vunpack.c.l.b16 %v3140
        %v3180 = vunpack.c.l.b16 %v3141
        %v3181 = vunpack.c.l.b16 %v3142
        %v3182 = vunpack.c.l.b16 %v3143
        %v3183 = vunpack.c.l.b16 %v3144
        %v3184 = vunpack.c.l.b16 %v3145
        %v3185 = vunpack.c.l.b16 %v3146
        %v3186 = vunpack.c.l.b16 %v3147
        %v3187 = vunpack.c.l.b16 %v3148
        %v3188 = vunpack.c.l.b16 %v3149
        %v3189 = vunpack.c.l.b16 %v3150
        %v3190 = vunpack.c.l.b16 %v3151
        %v3191 = vunpack.c.l.b16 %v3152
        %v3192 = vunpack.c.l.b16 %v3153
        %v3193 = vpack.c.b16 %v3178, %v3177
        %v3194 = vpack.c.b16 %v3180, %v3179
        %v3195 = vpack.c.b16 %v3182, %v3181
        %v3196 = vpack.c.b16 %v3184, %v3183
        %v3197 = vpack.c.b16 %v3186, %v3185
        %v3198 = vpack.c.b16 %v3188, %v3187
        %v3199 = vpack.c.b16 %v3190, %v3189
        %v3200 = vpack.c.b16 %v3192, %v3191
        %3209 = vmatprep.subr.bf16.mxu0 0
        %3210 = vmatpush1.bf16.msra.mxu0 %v3193
        %3211 = vmatprep.subr.bf16.mxu0 0
        %3212 = vmatpush1.bf16.msra.mxu0 %v3194
        %3213 = vmatprep.subr.bf16.mxu0 0
        %3214 = vmatpush1.bf16.msra.mxu0 %v3195
        %3215 = vmatprep.subr.bf16.mxu0 0
        %3216 = vmatpush1.bf16.msra.mxu0 %v3196
        %3217 = vmatprep.subr.bf16.mxu0 0
        %3218 = vmatpush1.bf16.msra.mxu0 %v3197
        %3219 = vmatprep.subr.bf16.mxu0 0
        %3220 = vmatpush1.bf16.msra.mxu0 %v3198
        %3221 = vmatprep.subr.bf16.mxu0 0
        %3222 = vmatpush1.bf16.msra.mxu0 %v3199
        %3223 = vmatprep.subr.bf16.mxu0 0
        %3224 = vmatpush1.bf16.msra.mxu0 %v3200
        %3225 = vmatprep.subr.bf16.mxu0 0
        %3226 = vmatpush1.bf16.msra.mxu0 0
        %3227 = vmatprep.subr.bf16.mxu0 0
        %3228 = vmatpush1.bf16.msra.mxu0 0
        %3229 = vmatprep.subr.bf16.mxu0 0
        %3230 = vmatpush1.bf16.msra.mxu0 0
        %3231 = vmatprep.subr.bf16.mxu0 0
        %3232 = vmatpush1.bf16.msra.mxu0 0
        %3233 = vmatprep.subr.bf16.mxu0 0
        %3234 = vmatpush1.bf16.msra.mxu0 0
        %3235 = vmatprep.subr.bf16.mxu0 0
        %3236 = vmatpush1.bf16.msra.mxu0 0
        %3237 = vmatprep.subr.bf16.mxu0 0
        %3238 = vmatpush1.bf16.msra.mxu0 0
        %3239 = vmatprep.subr.bf16.mxu0 0
        %3240 = vmatpush1.bf16.msra.mxu0 0
        %3241 = vmatprep.mubr.bf16.mxu0 0
        %3242 = vmatmul.mubr.bf16.gmra.mrb[0].mxu0 %v3127
        %v3243 = vpop.f32.mrb[0].mxu0
        %v3244 = vadd.f32 %v3159, %v3243
        %v3245 = vpop.f32.mrb[0].mxu0
        %v3246 = vpop.f32.mrb[0].mxu0
        %v3247 = vadd.f32 %v3159, %v3246
        %v3248 = vpop.f32.mrb[0].mxu0
        %3249 = vmatprep.mubr.bf16.mxu0 0
        %3250 = vmatmul.mubr.bf16.gmra.mrb[0].mxu0 %v3130
        %v3251 = vpop.f32.mrb[0].mxu0
        %v3252 = vadd.f32 %v3159, %v3251
        %v3253 = vpop.f32.mrb[0].mxu0
        %v3254 = vpop.f32.mrb[0].mxu0
        %v3255 = vadd.f32 %v3159, %v3254
        %v3256 = vpop.f32.mrb[0].mxu0
        %3257 = vmatprep.mubr.bf16.mxu0 0
        %3258 = vmatmul.mubr.bf16.gmra.mrb[0].mxu0 %v3133
        %v3259 = vpop.f32.mrb[0].mxu0
        %v3260 = vadd.f32 %v3159, %v3259
        %v3261 = vpop.f32.mrb[0].mxu0
        %v3262 = vpop.f32.mrb[0].mxu0
        %v3263 = vadd.f32 %v3159, %v3262
        %v3264 = vpop.f32.mrb[0].mxu0
        %3265 = vmatprep.mubr.bf16.mxu0 0
        %3266 = vmatmul.mubr.bf16.gmra.mrb[0].mxu0 %v3136
        %v3267 = vpop.f32.mrb[0].mxu0
        %v3268 = vadd.f32 %v3159, %v3267
        %v3269 = vpop.f32.mrb[0].mxu0
        %v3270 = vpop.f32.mrb[0].mxu0
        %v3271 = vadd.f32 %v3159, %v3270
        %v3272 = vpop.f32.mrb[0].mxu0
        %3273 = vdwg.mxu0
        %v3274 = vadd.f32 %v621, %v3244
        %v3275 = vadd.f32 %v622, %v3247
        %v3276 = vadd.f32 %v623, %v3252
        %v3277 = vadd.f32 %v624, %v3255
        %v3278 = vadd.f32 %v625, %v3260
        %v3279 = vadd.f32 %v626, %v3263
        %v3280 = vadd.f32 %v627, %v3268
        %v3281 = vadd.f32 %v628, %v3271
        %v3282 = vld [vmem:[#allocation14] sm:$0x1]
        %v3283 = vld [vmem:[#allocation16] sm:$0x1]
        %3284 = vadd.xlane.f32.xlu0 %v3274
        %v3285 = vpop.xlane.xlu0 %3284
        %3286 = vadd.xlane.f32.xlu0 %v3275
        %v3287 = vpop.xlane.xlu0 %3286
        %3288 = vadd.xlane.f32.xlu0 %v3276
        %v3289 = vpop.xlane.xlu0 %3288
        %3290 = vadd.xlane.f32.xlu0 %v3277
        %v3291 = vpop.xlane.xlu0 %3290
        %3292 = vadd.xlane.f32.xlu0 %v3278
        %v3293 = vpop.xlane.xlu0 %3292
        %3294 = vadd.xlane.f32.xlu0 %v3279
        %v3295 = vpop.xlane.xlu0 %3294
        %3296 = vadd.xlane.f32.xlu0 %v3280
        %v3297 = vpop.xlane.xlu0 %3296
        %3298 = vadd.xlane.f32.xlu0 %v3281
        %v3299 = vpop.xlane.xlu0 %3298
        %v3300 = vmul.f32 %v3285, %v647
        %v3301 = vmul.f32 %v3287, %v647
        %v3302 = vmul.f32 %v3289, %v647
        %v3303 = vmul.f32 %v3291, %v647
        %v3304 = vmul.f32 %v3293, %v647
        %v3305 = vmul.f32 %v3295, %v647
        %v3306 = vmul.f32 %v3297, %v647
        %v3307 = vmul.f32 %v3299, %v647
        %v3308 = vsub.f32 %v3274, %v3300
        %v3309 = vsub.f32 %v3275, %v3301
        %v3310 = vsub.f32 %v3276, %v3302
        %v3311 = vsub.f32 %v3277, %v3303
        %v3312 = vsub.f32 %v3278, %v3304
        %v3313 = vsub.f32 %v3279, %v3305
        %v3314 = vsub.f32 %v3280, %v3306
        %v3315 = vsub.f32 %v3281, %v3307
        %v3316 = vmul.f32 %v3308, %v3308
        %v3317 = vmul.f32 %v3309, %v3309
        %v3318 = vmul.f32 %v3310, %v3310
        %v3319 = vmul.f32 %v3311, %v3311
        %v3320 = vmul.f32 %v3312, %v3312
        %v3321 = vmul.f32 %v3313, %v3313
        %v3322 = vmul.f32 %v3314, %v3314
        %v3323 = vmul.f32 %v3315, %v3315
        %3324 = vadd.xlane.f32.xlu0 %v3316
        %v3325 = vpop.xlane.xlu0 %3324
        %3326 = vadd.xlane.f32.xlu0 %v3317
        %v3327 = vpop.xlane.xlu0 %3326
        %3328 = vadd.xlane.f32.xlu0 %v3318
        %v3329 = vpop.xlane.xlu0 %3328
        %3330 = vadd.xlane.f32.xlu0 %v3319
        %v3331 = vpop.xlane.xlu0 %3330
        %3332 = vadd.xlane.f32.xlu0 %v3320
        %v3333 = vpop.xlane.xlu0 %3332
        %3334 = vadd.xlane.f32.xlu0 %v3321
        %v3335 = vpop.xlane.xlu0 %3334
        %3336 = vadd.xlane.f32.xlu0 %v3322
        %v3337 = vpop.xlane.xlu0 %3336
        %3338 = vadd.xlane.f32.xlu0 %v3323
        %v3339 = vpop.xlane.xlu0 %3338
        %v3340 = vmul.f32 %v3325, %v647
        %v3341 = vmul.f32 %v3327, %v647
        %v3342 = vmul.f32 %v3329, %v647
        %v3343 = vmul.f32 %v3331, %v647
        %v3344 = vmul.f32 %v3333, %v647
        %v3345 = vmul.f32 %v3335, %v647
        %v3346 = vmul.f32 %v3337, %v647
        %v3347 = vmul.f32 %v3339, %v647
        %v3348 = vadd.f32 %v3340, 1e-05
        %v3349 = vadd.f32 %v3341, 1e-05
        %v3350 = vadd.f32 %v3342, 1e-05
        %v3351 = vadd.f32 %v3343, 1e-05
        %v3352 = vadd.f32 %v3344, 1e-05
        %v3353 = vadd.f32 %v3345, 1e-05
        %v3354 = vadd.f32 %v3346, 1e-05
        %v3355 = vadd.f32 %v3347, 1e-05
        %v3356 = vrsqrt.pop %v3348
        %v3357 = vrsqrt.pop %v3349
        %v3358 = vrsqrt.pop %v3350
        %v3359 = vrsqrt.pop %v3351
        %v3360 = vrsqrt.pop %v3352
        %v3361 = vrsqrt.pop %v3353
        %v3362 = vrsqrt.pop %v3354
        %v3363 = vrsqrt.pop %v3355
        %v3364 = vmul.f32 %v3308, %v3356
        %v3365 = vmul.f32 %v3309, %v3357
        %v3366 = vmul.f32 %v3310, %v3358
        %v3367 = vmul.f32 %v3311, %v3359
        %v3368 = vmul.f32 %v3312, %v3360
        %v3369 = vmul.f32 %v3313, %v3361
        %v3370 = vmul.f32 %v3314, %v3362
        %v3371 = vmul.f32 %v3315, %v3363
        %v3373 = vlaneseq
        %v3374 = vshrl.u32 %v3373, 7
        %v3375 = vsub.s32 0, %v3374
        %v3376 = vrot.slane %v3282, %v3375
        %v3378 = vmul.f32 %v3364, %v3376
        %v3379 = vmul.f32 %v3365, %v3376
        %v3380 = vmul.f32 %v3366, %v3376
        %v3381 = vmul.f32 %v3367, %v3376
        %v3382 = vmul.f32 %v3368, %v3376
        %v3383 = vmul.f32 %v3369, %v3376
        %v3384 = vmul.f32 %v3370, %v3376
        %v3385 = vmul.f32 %v3371, %v3376
        %v3387 = vlaneseq
        %v3388 = vshrl.u32 %v3387, 7
        %v3389 = vsub.s32 0, %v3388
        %v3390 = vrot.slane %v3283, %v3389
        %v3392 = vadd.f32 %v3378, %v3390
        %v3393 = vadd.f32 %v3379, %v3390
        %v3394 = vadd.f32 %v3380, %v3390
        %v3395 = vadd.f32 %v3381, %v3390
        %v3396 = vadd.f32 %v3382, %v3390
        %v3397 = vadd.f32 %v3383, %v3390
        %v3398 = vadd.f32 %v3384, %v3390
        %v3399 = vadd.f32 %v3385, %v3390
        %v3400 = vpack.c.bf16 %v3393, %v3392
        %v3401 = vpack.c.bf16 %v3395, %v3394
        %v3402 = vpack.c.bf16 %v3397, %v3396
        %v3403 = vpack.c.bf16 %v3399, %v3398
        %v3404 = vld [vmem:[#allocation17] sm:$0xff]
        %v3405 = vld [vmem:[#allocation17 + $0x8] sm:$0xff]
        %v3406 = vld [vmem:[#allocation17 + $0x10] sm:$0xff]
        %v3407 = vld [vmem:[#allocation17 + $0x18] sm:$0xff]
        %v3408 = vld [vmem:[#allocation17 + $0x20] sm:$0xff]
        %v3409 = vld [vmem:[#allocation17 + $0x28] sm:$0xff]
        %v3410 = vld [vmem:[#allocation17 + $0x30] sm:$0xff]
        %v3411 = vld [vmem:[#allocation17 + $0x38] sm:$0xff]
        %v3412 = vld [vmem:[#allocation17 + $0x40] sm:$0xff]
        %v3413 = vld [vmem:[#allocation17 + $0x48] sm:$0xff]
        %v3414 = vld [vmem:[#allocation17 + $0x50] sm:$0xff]
        %v3415 = vld [vmem:[#allocation17 + $0x58] sm:$0xff]
        %v3416 = vld [vmem:[#allocation17 + $0x60] sm:$0xff]
        %v3417 = vld [vmem:[#allocation17 + $0x68] sm:$0xff]
        %v3418 = vld [vmem:[#allocation17 + $0x70] sm:$0xff]
        %v3419 = vld [vmem:[#allocation17 + $0x78] sm:$0xff]
        %v3420 = vld [vmem:[#allocation17 + $0x80] sm:$0xff]
        %v3421 = vld [vmem:[#allocation17 + $0x88] sm:$0xff]
        %v3422 = vld [vmem:[#allocation17 + $0x90] sm:$0xff]
        %v3423 = vld [vmem:[#allocation17 + $0x98] sm:$0xff]
        %v3424 = vld [vmem:[#allocation17 + $0xa0] sm:$0xff]
        %v3425 = vld [vmem:[#allocation17 + $0xa8] sm:$0xff]
        %v3426 = vld [vmem:[#allocation17 + $0xb0] sm:$0xff]
        %v3427 = vld [vmem:[#allocation17 + $0xb8] sm:$0xff]
        %v3428 = vld [vmem:[#allocation17 + $0xc0] sm:$0xff]
        %v3429 = vld [vmem:[#allocation17 + $0xc8] sm:$0xff]
        %v3430 = vld [vmem:[#allocation17 + $0xd0] sm:$0xff]
        %v3431 = vld [vmem:[#allocation17 + $0xd8] sm:$0xff]
        %v3432 = vld [vmem:[#allocation17 + $0xe0] sm:$0xff]
        %v3433 = vld [vmem:[#allocation17 + $0xe8] sm:$0xff]
        %v3434 = vld [vmem:[#allocation17 + $0xf0] sm:$0xff]
        %v3435 = vld [vmem:[#allocation17 + $0xf8] sm:$0xff]
        %v3436 = vld [vmem:[#allocation19] sm:$0xf]
        %v3438 = vlaneseq
        %v3439 = vshrl.u32 %v3438, 7
        %v3440 = vsub.s32 0, %v3439
        %v3441 = vrot.slane %v3436, %v3440
        %v3442 = vlaneseq
        %v3443 = vshrl.u32 %v3442, 7
        %v3444 = vsub.s32 1, %v3443
        %v3445 = vrot.slane %v3436, %v3444
        %v3446 = vlaneseq
        %v3447 = vshrl.u32 %v3446, 7
        %v3448 = vsub.s32 2, %v3447
        %v3449 = vrot.slane %v3436, %v3448
        %v3450 = vlaneseq
        %v3451 = vshrl.u32 %v3450, 7
        %v3452 = vsub.s32 3, %v3451
        %v3453 = vrot.slane %v3436, %v3452
        %v3490 = vunpack.c.l.b16 %v3404
        %v3491 = vunpack.c.h.b16 %v3404
        %v3492 = vunpack.c.l.b16 %v3405
        %v3493 = vunpack.c.h.b16 %v3405
        %v3494 = vunpack.c.l.b16 %v3406
        %v3495 = vunpack.c.h.b16 %v3406
        %v3496 = vunpack.c.l.b16 %v3407
        %v3497 = vunpack.c.h.b16 %v3407
        %v3498 = vunpack.c.l.b16 %v3408
        %v3499 = vunpack.c.h.b16 %v3408
        %v3500 = vunpack.c.l.b16 %v3409
        %v3501 = vunpack.c.h.b16 %v3409
        %v3502 = vunpack.c.l.b16 %v3410
        %v3503 = vunpack.c.h.b16 %v3410
        %v3504 = vunpack.c.l.b16 %v3411
        %v3505 = vunpack.c.h.b16 %v3411
        %v3506 = vunpack.c.l.b16 %v3412
        %v3507 = vunpack.c.h.b16 %v3412
        %v3508 = vunpack.c.l.b16 %v3413
        %v3509 = vunpack.c.h.b16 %v3413
        %v3510 = vunpack.c.l.b16 %v3414
        %v3511 = vunpack.c.h.b16 %v3414
        %v3512 = vunpack.c.l.b16 %v3415
        %v3513 = vunpack.c.h.b16 %v3415
        %v3514 = vunpack.c.l.b16 %v3416
        %v3515 = vunpack.c.h.b16 %v3416
        %v3516 = vunpack.c.l.b16 %v3417
        %v3517 = vunpack.c.h.b16 %v3417
        %v3518 = vunpack.c.l.b16 %v3418
        %v3519 = vunpack.c.h.b16 %v3418
        %v3520 = vunpack.c.l.b16 %v3419
        %v3521 = vunpack.c.h.b16 %v3419
        %v3522 = vunpack.c.l.b16 %v3420
        %v3523 = vunpack.c.h.b16 %v3420
        %v3524 = vunpack.c.l.b16 %v3421
        %v3525 = vunpack.c.h.b16 %v3421
        %v3526 = vunpack.c.l.b16 %v3422
        %v3527 = vunpack.c.h.b16 %v3422
        %v3528 = vunpack.c.l.b16 %v3423
        %v3529 = vunpack.c.h.b16 %v3423
        %v3530 = vunpack.c.l.b16 %v3424
        %v3531 = vunpack.c.h.b16 %v3424
        %v3532 = vunpack.c.l.b16 %v3425
        %v3533 = vunpack.c.h.b16 %v3425
        %v3534 = vunpack.c.l.b16 %v3426
        %v3535 = vunpack.c.h.b16 %v3426
        %v3536 = vunpack.c.l.b16 %v3427
        %v3537 = vunpack.c.h.b16 %v3427
        %v3538 = vunpack.c.l.b16 %v3428
        %v3539 = vunpack.c.h.b16 %v3428
        %v3540 = vunpack.c.l.b16 %v3429
        %v3541 = vunpack.c.h.b16 %v3429
        %v3542 = vunpack.c.l.b16 %v3430
        %v3543 = vunpack.c.h.b16 %v3430
        %v3544 = vunpack.c.l.b16 %v3431
        %v3545 = vunpack.c.h.b16 %v3431
        %v3546 = vunpack.c.l.b16 %v3432
        %v3547 = vunpack.c.h.b16 %v3432
        %v3548 = vunpack.c.l.b16 %v3433
        %v3549 = vunpack.c.h.b16 %v3433
        %v3550 = vunpack.c.l.b16 %v3434
        %v3551 = vunpack.c.h.b16 %v3434
        %v3552 = vunpack.c.l.b16 %v3435
        %v3553 = vunpack.c.h.b16 %v3435
        %v3554 = vpack.c.b16 %v3494, %v3490
        %v3555 = vpack.c.b16 %v3495, %v3491
        %v3556 = vpack.c.b16 %v3496, %v3492
        %v3557 = vpack.c.b16 %v3497, %v3493
        %v3558 = vpack.c.b16 %v3502, %v3498
        %v3559 = vpack.c.b16 %v3503, %v3499
        %v3560 = vpack.c.b16 %v3504, %v3500
        %v3561 = vpack.c.b16 %v3505, %v3501
        %v3562 = vpack.c.b16 %v3510, %v3506
        %v3563 = vpack.c.b16 %v3511, %v3507
        %v3564 = vpack.c.b16 %v3512, %v3508
        %v3565 = vpack.c.b16 %v3513, %v3509
        %v3566 = vpack.c.b16 %v3518, %v3514
        %v3567 = vpack.c.b16 %v3519, %v3515
        %v3568 = vpack.c.b16 %v3520, %v3516
        %v3569 = vpack.c.b16 %v3521, %v3517
        %v3570 = vpack.c.b16 %v3526, %v3522
        %v3571 = vpack.c.b16 %v3527, %v3523
        %v3572 = vpack.c.b16 %v3528, %v3524
        %v3573 = vpack.c.b16 %v3529, %v3525
        %v3574 = vpack.c.b16 %v3534, %v3530
        %v3575 = vpack.c.b16 %v3535, %v3531
        %v3576 = vpack.c.b16 %v3536, %v3532
        %v3577 = vpack.c.b16 %v3537, %v3533
        %v3578 = vpack.c.b16 %v3542, %v3538
        %v3579 = vpack.c.b16 %v3543, %v3539
        %v3580 = vpack.c.b16 %v3544, %v3540
        %v3581 = vpack.c.b16 %v3545, %v3541
        %v3582 = vpack.c.b16 %v3550, %v3546
        %v3583 = vpack.c.b16 %v3551, %v3547
        %v3584 = vpack.c.b16 %v3552, %v3548
        %v3585 = vpack.c.b16 %v3553, %v3549
        %3618 = vmatprep.subr.bf16.mxu0 %v3555
        %3619 = vmatpush1.bf16.msra.mxu0 %v3554
        %3620 = vmatprep.subr.bf16.mxu0 %v3559
        %3621 = vmatpush1.bf16.msra.mxu0 %v3558
        %3622 = vmatprep.subr.bf16.mxu0 %v3563
        %3623 = vmatpush1.bf16.msra.mxu0 %v3562
        %3624 = vmatprep.subr.bf16.mxu0 %v3567
        %3625 = vmatpush1.bf16.msra.mxu0 %v3566
        %3626 = vmatprep.subr.bf16.mxu0 %v3571
        %3627 = vmatpush1.bf16.msra.mxu0 %v3570
        %3628 = vmatprep.subr.bf16.mxu0 %v3575
        %3629 = vmatpush1.bf16.msra.mxu0 %v3574
        %3630 = vmatprep.subr.bf16.mxu0 %v3579
        %3631 = vmatpush1.bf16.msra.mxu0 %v3578
        %3632 = vmatprep.subr.bf16.mxu0 %v3583
        %3633 = vmatpush1.bf16.msra.mxu0 %v3582
        %3634 = vmatprep.subr.bf16.mxu0 0
        %3635 = vmatpush1.bf16.msra.mxu0 0
        %3636 = vmatprep.subr.bf16.mxu0 0
        %3637 = vmatpush1.bf16.msra.mxu0 0
        %3638 = vmatprep.subr.bf16.mxu0 0
        %3639 = vmatpush1.bf16.msra.mxu0 0
        %3640 = vmatprep.subr.bf16.mxu0 0
        %3641 = vmatpush1.bf16.msra.mxu0 0
        %3642 = vmatprep.subr.bf16.mxu0 0
        %3643 = vmatpush1.bf16.msra.mxu0 0
        %3644 = vmatprep.subr.bf16.mxu0 0
        %3645 = vmatpush1.bf16.msra.mxu0 0
        %3646 = vmatprep.subr.bf16.mxu0 0
        %3647 = vmatpush1.bf16.msra.mxu0 0
        %3648 = vmatprep.subr.bf16.mxu0 0
        %3649 = vmatpush1.bf16.msra.mxu0 0
        %3650 = vmatprep.mubr.bf16.mxu0 0
        %3651 = vmatmul.mubr.bf16.gmra.mrb[0].mxu0 %v3400
        %v3652 = vpop.f32.mrb[0].mxu0
        %v3653 = vadd.f32 %v3441, %v3652
        %v3654 = vpop.f32.mrb[0].mxu0
        %v3655 = vadd.f32 %v3445, %v3654
        %v3656 = vpop.f32.mrb[0].mxu0
        %v3657 = vadd.f32 %v3441, %v3656
        %v3658 = vpop.f32.mrb[0].mxu0
        %v3659 = vadd.f32 %v3445, %v3658
        %3660 = vmatprep.mubr.bf16.mxu0 0
        %3661 = vmatmul.mubr.bf16.gmra.mrb[0].mxu0 %v3401
        %v3662 = vpop.f32.mrb[0].mxu0
        %v3663 = vadd.f32 %v3441, %v3662
        %v3664 = vpop.f32.mrb[0].mxu0
        %v3665 = vadd.f32 %v3445, %v3664
        %v3666 = vpop.f32.mrb[0].mxu0
        %v3667 = vadd.f32 %v3441, %v3666
        %v3668 = vpop.f32.mrb[0].mxu0
        %v3669 = vadd.f32 %v3445, %v3668
        %3670 = vmatprep.mubr.bf16.mxu0 0
        %3671 = vmatmul.mubr.bf16.gmra.mrb[0].mxu0 %v3402
        %v3672 = vpop.f32.mrb[0].mxu0
        %v3673 = vadd.f32 %v3441, %v3672
        %v3674 = vpop.f32.mrb[0].mxu0
        %v3675 = vadd.f32 %v3445, %v3674
        %v3676 = vpop.f32.mrb[0].mxu0
        %v3677 = vadd.f32 %v3441, %v3676
        %v3678 = vpop.f32.mrb[0].mxu0
        %v3679 = vadd.f32 %v3445, %v3678
        %3680 = vmatprep.mubr.bf16.mxu0 0
        %3681 = vmatmul.mubr.bf16.gmra.mrb[0].mxu0 %v3403
        %v3682 = vpop.f32.mrb[0].mxu0
        %v3683 = vadd.f32 %v3441, %v3682
        %v3684 = vpop.f32.mrb[0].mxu0
        %v3685 = vadd.f32 %v3445, %v3684
        %v3686 = vpop.f32.mrb[0].mxu0
        %v3687 = vadd.f32 %v3441, %v3686
        %v3688 = vpop.f32.mrb[0].mxu0
        %v3689 = vadd.f32 %v3445, %v3688
        %3690 = vdwg.mxu0
        %3691 = vmatprep.subr.bf16.mxu0 %v3557
        %3692 = vmatpush1.bf16.msra.mxu0 %v3556
        %3693 = vmatprep.subr.bf16.mxu0 %v3561
        %3694 = vmatpush1.bf16.msra.mxu0 %v3560
        %3695 = vmatprep.subr.bf16.mxu0 %v3565
        %3696 = vmatpush1.bf16.msra.mxu0 %v3564
        %3697 = vmatprep.subr.bf16.mxu0 %v3569
        %3698 = vmatpush1.bf16.msra.mxu0 %v3568
        %3699 = vmatprep.subr.bf16.mxu0 %v3573
        %3700 = vmatpush1.bf16.msra.mxu0 %v3572
        %3701 = vmatprep.subr.bf16.mxu0 %v3577
        %3702 = vmatpush1.bf16.msra.mxu0 %v3576
        %3703 = vmatprep.subr.bf16.mxu0 %v3581
        %3704 = vmatpush1.bf16.msra.mxu0 %v3580
        %3705 = vmatprep.subr.bf16.mxu0 %v3585
        %3706 = vmatpush1.bf16.msra.mxu0 %v3584
        %3707 = vmatprep.subr.bf16.mxu0 0
        %3708 = vmatpush1.bf16.msra.mxu0 0
        %3709 = vmatprep.subr.bf16.mxu0 0
        %3710 = vmatpush1.bf16.msra.mxu0 0
        %3711 = vmatprep.subr.bf16.mxu0 0
        %3712 = vmatpush1.bf16.msra.mxu0 0
        %3713 = vmatprep.subr.bf16.mxu0 0
        %3714 = vmatpush1.bf16.msra.mxu0 0
        %3715 = vmatprep.subr.bf16.mxu0 0
        %3716 = vmatpush1.bf16.msra.mxu0 0
        %3717 = vmatprep.subr.bf16.mxu0 0
        %3718 = vmatpush1.bf16.msra.mxu0 0
        %3719 = vmatprep.subr.bf16.mxu0 0
        %3720 = vmatpush1.bf16.msra.mxu0 0
        %3721 = vmatprep.subr.bf16.mxu0 0
        %3722 = vmatpush1.bf16.msra.mxu0 0
        %3723 = vmatprep.mubr.bf16.mxu0 0
        %3724 = vmatmul.mubr.bf16.gmra.mrb[0].mxu0 %v3400
        %v3725 = vpop.f32.mrb[0].mxu0
        %v3726 = vadd.f32 %v3449, %v3725
        %v3727 = vpop.f32.mrb[0].mxu0
        %v3728 = vadd.f32 %v3453, %v3727
        %v3729 = vpop.f32.mrb[0].mxu0
        %v3730 = vadd.f32 %v3449, %v3729
        %v3731 = vpop.f32.mrb[0].mxu0
        %v3732 = vadd.f32 %v3453, %v3731
        %3733 = vmatprep.mubr.bf16.mxu0 0
        %3734 = vmatmul.mubr.bf16.gmra.mrb[0].mxu0 %v3401
        %v3735 = vpop.f32.mrb[0].mxu0
        %v3736 = vadd.f32 %v3449, %v3735
        %v3737 = vpop.f32.mrb[0].mxu0
        %v3738 = vadd.f32 %v3453, %v3737
        %v3739 = vpop.f32.mrb[0].mxu0
        %v3740 = vadd.f32 %v3449, %v3739
        %v3741 = vpop.f32.mrb[0].mxu0
        %v3742 = vadd.f32 %v3453, %v3741
        %3743 = vmatprep.mubr.bf16.mxu0 0
        %3744 = vmatmul.mubr.bf16.gmra.mrb[0].mxu0 %v3402
        %v3745 = vpop.f32.mrb[0].mxu0
        %v3746 = vadd.f32 %v3449, %v3745
        %v3747 = vpop.f32.mrb[0].mxu0
        %v3748 = vadd.f32 %v3453, %v3747
        %v3749 = vpop.f32.mrb[0].mxu0
        %v3750 = vadd.f32 %v3449, %v3749
        %v3751 = vpop.f32.mrb[0].mxu0
        %v3752 = vadd.f32 %v3453, %v3751
        %3753 = vmatprep.mubr.bf16.mxu0 0
        %3754 = vmatmul.mubr.bf16.gmra.mrb[0].mxu0 %v3403
        %v3755 = vpop.f32.mrb[0].mxu0
        %v3756 = vadd.f32 %v3449, %v3755
        %v3757 = vpop.f32.mrb[0].mxu0
        %v3758 = vadd.f32 %v3453, %v3757
        %v3759 = vpop.f32.mrb[0].mxu0
        %v3760 = vadd.f32 %v3449, %v3759
        %v3761 = vpop.f32.mrb[0].mxu0
        %v3762 = vadd.f32 %v3453, %v3761
        %3763 = vdwg.mxu0
        %v3764 = vmul.f32 %v3653, 0.5
        %v3765 = vmul.f32 %v3655, 0.5
        %v3766 = vmul.f32 %v3726, 0.5
        %v3767 = vmul.f32 %v3728, 0.5
        %v3768 = vmul.f32 %v3657, 0.5
        %v3769 = vmul.f32 %v3659, 0.5
        %v3770 = vmul.f32 %v3730, 0.5
        %v3771 = vmul.f32 %v3732, 0.5
        %v3772 = vmul.f32 %v3663, 0.5
        %v3773 = vmul.f32 %v3665, 0.5
        %v3774 = vmul.f32 %v3736, 0.5
        %v3775 = vmul.f32 %v3738, 0.5
        %v3776 = vmul.f32 %v3667, 0.5
        %v3777 = vmul.f32 %v3669, 0.5
        %v3778 = vmul.f32 %v3740, 0.5
        %v3779 = vmul.f32 %v3742, 0.5
        %v3780 = vmul.f32 %v3673, 0.5
        %v3781 = vmul.f32 %v3675, 0.5
        %v3782 = vmul.f32 %v3746, 0.5
        %v3783 = vmul.f32 %v3748, 0.5
        %v3784 = vmul.f32 %v3677, 0.5
        %v3785 = vmul.f32 %v3679, 0.5
        %v3786 = vmul.f32 %v3750, 0.5
        %v3787 = vmul.f32 %v3752, 0.5
        %v3788 = vmul.f32 %v3683, 0.5
        %v3789 = vmul.f32 %v3685, 0.5
        %v3790 = vmul.f32 %v3756, 0.5
        %v3791 = vmul.f32 %v3758, 0.5
        %v3792 = vmul.f32 %v3687, 0.5
        %v3793 = vmul.f32 %v3689, 0.5
        %v3794 = vmul.f32 %v3760, 0.5
        %v3795 = vmul.f32 %v3762, 0.5
        %v3796 = vmul.f32 %v3653, 0.70710677
        %v3797 = vmul.f32 %v3655, 0.70710677
        %v3798 = vmul.f32 %v3726, 0.70710677
        %v3799 = vmul.f32 %v3728, 0.70710677
        %v3800 = vmul.f32 %v3657, 0.70710677
        %v3801 = vmul.f32 %v3659, 0.70710677
        %v3802 = vmul.f32 %v3730, 0.70710677
        %v3803 = vmul.f32 %v3732, 0.70710677
        %v3804 = vmul.f32 %v3663, 0.70710677
        %v3805 = vmul.f32 %v3665, 0.70710677
        %v3806 = vmul.f32 %v3736, 0.70710677
        %v3807 = vmul.f32 %v3738, 0.70710677
        %v3808 = vmul.f32 %v3667, 0.70710677
        %v3809 = vmul.f32 %v3669, 0.70710677
        %v3810 = vmul.f32 %v3740, 0.70710677
        %v3811 = vmul.f32 %v3742, 0.70710677
        %v3812 = vmul.f32 %v3673, 0.70710677
        %v3813 = vmul.f32 %v3675, 0.70710677
        %v3814 = vmul.f32 %v3746, 0.70710677
        %v3815 = vmul.f32 %v3748, 0.70710677
        %v3816 = vmul.f32 %v3677, 0.70710677
        %v3817 = vmul.f32 %v3679, 0.70710677
        %v3818 = vmul.f32 %v3750, 0.70710677
        %v3819 = vmul.f32 %v3752, 0.70710677
        %v3820 = vmul.f32 %v3683, 0.70710677
        %v3821 = vmul.f32 %v3685, 0.70710677
        %v3822 = vmul.f32 %v3756, 0.70710677
        %v3823 = vmul.f32 %v3758, 0.70710677
        %v3824 = vmul.f32 %v3687, 0.70710677
        %v3825 = vmul.f32 %v3689, 0.70710677
        %v3826 = vmul.f32 %v3760, 0.70710677
        %v3827 = vmul.f32 %v3762, 0.70710677
        %v3828 = vand.u32 2147483647, %v3796
        %v3829 = vand.u32 2147483647, %v3797
        %v3830 = vand.u32 2147483647, %v3798
        %v3831 = vand.u32 2147483647, %v3799
        %v3832 = vand.u32 2147483647, %v3800
        %v3833 = vand.u32 2147483647, %v3801
        %v3834 = vand.u32 2147483647, %v3802
        %v3835 = vand.u32 2147483647, %v3803
        %v3836 = vand.u32 2147483647, %v3804
        %v3837 = vand.u32 2147483647, %v3805
        %v3838 = vand.u32 2147483647, %v3806
        %v3839 = vand.u32 2147483647, %v3807
        %v3840 = vand.u32 2147483647, %v3808
        %v3841 = vand.u32 2147483647, %v3809
        %v3842 = vand.u32 2147483647, %v3810
        %v3843 = vand.u32 2147483647, %v3811
        %v3844 = vand.u32 2147483647, %v3812
        %v3845 = vand.u32 2147483647, %v3813
        %v3846 = vand.u32 2147483647, %v3814
        %v3847 = vand.u32 2147483647, %v3815
        %v3848 = vand.u32 2147483647, %v3816
        %v3849 = vand.u32 2147483647, %v3817
        %v3850 = vand.u32 2147483647, %v3818
        %v3851 = vand.u32 2147483647, %v3819
        %v3852 = vand.u32 2147483647, %v3820
        %v3853 = vand.u32 2147483647, %v3821
        %v3854 = vand.u32 2147483647, %v3822
        %v3855 = vand.u32 2147483647, %v3823
        %v3856 = vand.u32 2147483647, %v3824
        %v3857 = vand.u32 2147483647, %v3825
        %v3858 = vand.u32 2147483647, %v3826
        %v3859 = vand.u32 2147483647, %v3827
        %v3860 = vmul.f32 %v3828, 0.3275911
        %v3861 = vmul.f32 %v3829, 0.3275911
        %v3862 = vmul.f32 %v3830, 0.3275911
        %v3863 = vmul.f32 %v3831, 0.3275911
        %v3864 = vmul.f32 %v3832, 0.3275911
        %v3865 = vmul.f32 %v3833, 0.3275911
        %v3866 = vmul.f32 %v3834, 0.3275911
        %v3867 = vmul.f32 %v3835, 0.3275911
        %v3868 = vmul.f32 %v3836, 0.3275911
        %v3869 = vmul.f32 %v3837, 0.3275911
        %v3870 = vmul.f32 %v3838, 0.3275911
        %v3871 = vmul.f32 %v3839, 0.3275911
        %v3872 = vmul.f32 %v3840, 0.3275911
        %v3873 = vmul.f32 %v3841, 0.3275911
        %v3874 = vmul.f32 %v3842, 0.3275911
        %v3875 = vmul.f32 %v3843, 0.3275911
        %v3876 = vmul.f32 %v3844, 0.3275911
        %v3877 = vmul.f32 %v3845, 0.3275911
        %v3878 = vmul.f32 %v3846, 0.3275911
        %v3879 = vmul.f32 %v3847, 0.3275911
        %v3880 = vmul.f32 %v3848, 0.3275911
        %v3881 = vmul.f32 %v3849, 0.3275911
        %v3882 = vmul.f32 %v3850, 0.3275911
        %v3883 = vmul.f32 %v3851, 0.3275911
        %v3884 = vmul.f32 %v3852, 0.3275911
        %v3885 = vmul.f32 %v3853, 0.3275911
        %v3886 = vmul.f32 %v3854, 0.3275911
        %v3887 = vmul.f32 %v3855, 0.3275911
        %v3888 = vmul.f32 %v3856, 0.3275911
        %v3889 = vmul.f32 %v3857, 0.3275911
        %v3890 = vmul.f32 %v3858, 0.3275911
        %v3891 = vmul.f32 %v3859, 0.3275911
        %v3892 = vadd.f32 %v3860, 1.0
        %v3893 = vadd.f32 %v3861, 1.0
        %v3894 = vadd.f32 %v3862, 1.0
        %v3895 = vadd.f32 %v3863, 1.0
        %v3896 = vadd.f32 %v3864, 1.0
        %v3897 = vadd.f32 %v3865, 1.0
        %v3898 = vadd.f32 %v3866, 1.0
        %v3899 = vadd.f32 %v3867, 1.0
        %v3900 = vadd.f32 %v3868, 1.0
        %v3901 = vadd.f32 %v3869, 1.0
        %v3902 = vadd.f32 %v3870, 1.0
        %v3903 = vadd.f32 %v3871, 1.0
        %v3904 = vadd.f32 %v3872, 1.0
        %v3905 = vadd.f32 %v3873, 1.0
        %v3906 = vadd.f32 %v3874, 1.0
        %v3907 = vadd.f32 %v3875, 1.0
        %v3908 = vadd.f32 %v3876, 1.0
        %v3909 = vadd.f32 %v3877, 1.0
        %v3910 = vadd.f32 %v3878, 1.0
        %v3911 = vadd.f32 %v3879, 1.0
        %v3912 = vadd.f32 %v3880, 1.0
        %v3913 = vadd.f32 %v3881, 1.0
        %v3914 = vadd.f32 %v3882, 1.0
        %v3915 = vadd.f32 %v3883, 1.0
        %v3916 = vadd.f32 %v3884, 1.0
        %v3917 = vadd.f32 %v3885, 1.0
        %v3918 = vadd.f32 %v3886, 1.0
        %v3919 = vadd.f32 %v3887, 1.0
        %v3920 = vadd.f32 %v3888, 1.0
        %v3921 = vadd.f32 %v3889, 1.0
        %v3922 = vadd.f32 %v3890, 1.0
        %v3923 = vadd.f32 %v3891, 1.0
        %v3924 = vrcp.pop %v3892
        %v3925 = vmul.f32 1.0, %v3924
        %v3926 = vrcp.pop %v3893
        %v3927 = vmul.f32 1.0, %v3926
        %v3928 = vrcp.pop %v3894
        %v3929 = vmul.f32 1.0, %v3928
        %v3930 = vrcp.pop %v3895
        %v3931 = vmul.f32 1.0, %v3930
        %v3932 = vrcp.pop %v3896
        %v3933 = vmul.f32 1.0, %v3932
        %v3934 = vrcp.pop %v3897
        %v3935 = vmul.f32 1.0, %v3934
        %v3936 = vrcp.pop %v3898
        %v3937 = vmul.f32 1.0, %v3936
        %v3938 = vrcp.pop %v3899
        %v3939 = vmul.f32 1.0, %v3938
        %v3940 = vrcp.pop %v3900
        %v3941 = vmul.f32 1.0, %v3940
        %v3942 = vrcp.pop %v3901
        %v3943 = vmul.f32 1.0, %v3942
        %v3944 = vrcp.pop %v3902
        %v3945 = vmul.f32 1.0, %v3944
        %v3946 = vrcp.pop %v3903
        %v3947 = vmul.f32 1.0, %v3946
        %v3948 = vrcp.pop %v3904
        %v3949 = vmul.f32 1.0, %v3948
        %v3950 = vrcp.pop %v3905
        %v3951 = vmul.f32 1.0, %v3950
        %v3952 = vrcp.pop %v3906
        %v3953 = vmul.f32 1.0, %v3952
        %v3954 = vrcp.pop %v3907
        %v3955 = vmul.f32 1.0, %v3954
        %v3956 = vrcp.pop %v3908
        %v3957 = vmul.f32 1.0, %v3956
        %v3958 = vrcp.pop %v3909
        %v3959 = vmul.f32 1.0, %v3958
        %v3960 = vrcp.pop %v3910
        %v3961 = vmul.f32 1.0, %v3960
        %v3962 = vrcp.pop %v3911
        %v3963 = vmul.f32 1.0, %v3962
        %v3964 = vrcp.pop %v3912
        %v3965 = vmul.f32 1.0, %v3964
        %v3966 = vrcp.pop %v3913
        %v3967 = vmul.f32 1.0, %v3966
        %v3968 = vrcp.pop %v3914
        %v3969 = vmul.f32 1.0, %v3968
        %v3970 = vrcp.pop %v3915
        %v3971 = vmul.f32 1.0, %v3970
        %v3972 = vrcp.pop %v3916
        %v3973 = vmul.f32 1.0, %v3972
        %v3974 = vrcp.pop %v3917
        %v3975 = vmul.f32 1.0, %v3974
        %v3976 = vrcp.pop %v3918
        %v3977 = vmul.f32 1.0, %v3976
        %v3978 = vrcp.pop %v3919
        %v3979 = vmul.f32 1.0, %v3978
        %v3980 = vrcp.pop %v3920
        %v3981 = vmul.f32 1.0, %v3980
        %v3982 = vrcp.pop %v3921
        %v3983 = vmul.f32 1.0, %v3982
        %v3984 = vrcp.pop %v3922
        %v3985 = vmul.f32 1.0, %v3984
        %v3986 = vrcp.pop %v3923
        %v3987 = vmul.f32 1.0, %v3986
        %v3988 = vmul.f32 %v3925, 1.0614054
        %v3989 = vmul.f32 %v3927, 1.0614054
        %v3990 = vmul.f32 %v3929, 1.0614054
        %v3991 = vmul.f32 %v3931, 1.0614054
        %v3992 = vmul.f32 %v3933, 1.0614054
        %v3993 = vmul.f32 %v3935, 1.0614054
        %v3994 = vmul.f32 %v3937, 1.0614054
        %v3995 = vmul.f32 %v3939, 1.0614054
        %v3996 = vmul.f32 %v3941, 1.0614054
        %v3997 = vmul.f32 %v3943, 1.0614054
        %v3998 = vmul.f32 %v3945, 1.0614054
        %v3999 = vmul.f32 %v3947, 1.0614054
        %v4000 = vmul.f32 %v3949, 1.0614054
        %v4001 = vmul.f32 %v3951, 1.0614054
        %v4002 = vmul.f32 %v3953, 1.0614054
        %v4003 = vmul.f32 %v3955, 1.0614054
        %v4004 = vmul.f32 %v3957, 1.0614054
        %v4005 = vmul.f32 %v3959, 1.0614054
        %v4006 = vmul.f32 %v3961, 1.0614054
        %v4007 = vmul.f32 %v3963, 1.0614054
        %v4008 = vmul.f32 %v3965, 1.0614054
        %v4009 = vmul.f32 %v3967, 1.0614054
        %v4010 = vmul.f32 %v3969, 1.0614054
        %v4011 = vmul.f32 %v3971, 1.0614054
        %v4012 = vmul.f32 %v3973, 1.0614054
        %v4013 = vmul.f32 %v3975, 1.0614054
        %v4014 = vmul.f32 %v3977, 1.0614054
        %v4015 = vmul.f32 %v3979, 1.0614054
        %v4016 = vmul.f32 %v3981, 1.0614054
        %v4017 = vmul.f32 %v3983, 1.0614054
        %v4018 = vmul.f32 %v3985, 1.0614054
        %v4019 = vmul.f32 %v3987, 1.0614054
        %v4020 = vadd.f32 %v3988, -1.4531521
        %v4021 = vadd.f32 %v3989, -1.4531521
        %v4022 = vadd.f32 %v3990, -1.4531521
        %v4023 = vadd.f32 %v3991, -1.4531521
        %v4024 = vadd.f32 %v3992, -1.4531521
        %v4025 = vadd.f32 %v3993, -1.4531521
        %v4026 = vadd.f32 %v3994, -1.4531521
        %v4027 = vadd.f32 %v3995, -1.4531521
        %v4028 = vadd.f32 %v3996, -1.4531521
        %v4029 = vadd.f32 %v3997, -1.4531521
        %v4030 = vadd.f32 %v3998, -1.4531521
        %v4031 = vadd.f32 %v3999, -1.4531521
        %v4032 = vadd.f32 %v4000, -1.4531521
        %v4033 = vadd.f32 %v4001, -1.4531521
        %v4034 = vadd.f32 %v4002, -1.4531521
        %v4035 = vadd.f32 %v4003, -1.4531521
        %v4036 = vadd.f32 %v4004, -1.4531521
        %v4037 = vadd.f32 %v4005, -1.4531521
        %v4038 = vadd.f32 %v4006, -1.4531521
        %v4039 = vadd.f32 %v4007, -1.4531521
        %v4040 = vadd.f32 %v4008, -1.4531521
        %v4041 = vadd.f32 %v4009, -1.4531521
        %v4042 = vadd.f32 %v4010, -1.4531521
        %v4043 = vadd.f32 %v4011, -1.4531521
        %v4044 = vadd.f32 %v4012, -1.4531521
        %v4045 = vadd.f32 %v4013, -1.4531521
        %v4046 = vadd.f32 %v4014, -1.4531521
        %v4047 = vadd.f32 %v4015, -1.4531521
        %v4048 = vadd.f32 %v4016, -1.4531521
        %v4049 = vadd.f32 %v4017, -1.4531521
        %v4050 = vadd.f32 %v4018, -1.4531521
        %v4051 = vadd.f32 %v4019, -1.4531521
        %v4052 = vmul.f32 %v4020, %v3925
        %v4053 = vmul.f32 %v4021, %v3927
        %v4054 = vmul.f32 %v4022, %v3929
        %v4055 = vmul.f32 %v4023, %v3931
        %v4056 = vmul.f32 %v4024, %v3933
        %v4057 = vmul.f32 %v4025, %v3935
        %v4058 = vmul.f32 %v4026, %v3937
        %v4059 = vmul.f32 %v4027, %v3939
        %v4060 = vmul.f32 %v4028, %v3941
        %v4061 = vmul.f32 %v4029, %v3943
        %v4062 = vmul.f32 %v4030, %v3945
        %v4063 = vmul.f32 %v4031, %v3947
        %v4064 = vmul.f32 %v4032, %v3949
        %v4065 = vmul.f32 %v4033, %v3951
        %v4066 = vmul.f32 %v4034, %v3953
        %v4067 = vmul.f32 %v4035, %v3955
        %v4068 = vmul.f32 %v4036, %v3957
        %v4069 = vmul.f32 %v4037, %v3959
        %v4070 = vmul.f32 %v4038, %v3961
        %v4071 = vmul.f32 %v4039, %v3963
        %v4072 = vmul.f32 %v4040, %v3965
        %v4073 = vmul.f32 %v4041, %v3967
        %v4074 = vmul.f32 %v4042, %v3969
        %v4075 = vmul.f32 %v4043, %v3971
        %v4076 = vmul.f32 %v4044, %v3973
        %v4077 = vmul.f32 %v4045, %v3975
        %v4078 = vmul.f32 %v4046, %v3977
        %v4079 = vmul.f32 %v4047, %v3979
        %v4080 = vmul.f32 %v4048, %v3981
        %v4081 = vmul.f32 %v4049, %v3983
        %v4082 = vmul.f32 %v4050, %v3985
        %v4083 = vmul.f32 %v4051, %v3987
        %v4084 = vadd.f32 %v4052, 1.4214138
        %v4085 = vadd.f32 %v4053, 1.4214138
        %v4086 = vadd.f32 %v4054, 1.4214138
        %v4087 = vadd.f32 %v4055, 1.4214138
        %v4088 = vadd.f32 %v4056, 1.4214138
        %v4089 = vadd.f32 %v4057, 1.4214138
        %v4090 = vadd.f32 %v4058, 1.4214138
        %v4091 = vadd.f32 %v4059, 1.4214138
        %v4092 = vadd.f32 %v4060, 1.4214138
        %v4093 = vadd.f32 %v4061, 1.4214138
        %v4094 = vadd.f32 %v4062, 1.4214138
        %v4095 = vadd.f32 %v4063, 1.4214138
        %v4096 = vadd.f32 %v4064, 1.4214138
        %v4097 = vadd.f32 %v4065, 1.4214138
        %v4098 = vadd.f32 %v4066, 1.4214138
        %v4099 = vadd.f32 %v4067, 1.4214138
        %v4100 = vadd.f32 %v4068, 1.4214138
        %v4101 = vadd.f32 %v4069, 1.4214138
        %v4102 = vadd.f32 %v4070, 1.4214138
        %v4103 = vadd.f32 %v4071, 1.4214138
        %v4104 = vadd.f32 %v4072, 1.4214138
        %v4105 = vadd.f32 %v4073, 1.4214138
        %v4106 = vadd.f32 %v4074, 1.4214138
        %v4107 = vadd.f32 %v4075, 1.4214138
        %v4108 = vadd.f32 %v4076, 1.4214138
        %v4109 = vadd.f32 %v4077, 1.4214138
        %v4110 = vadd.f32 %v4078, 1.4214138
        %v4111 = vadd.f32 %v4079, 1.4214138
        %v4112 = vadd.f32 %v4080, 1.4214138
        %v4113 = vadd.f32 %v4081, 1.4214138
        %v4114 = vadd.f32 %v4082, 1.4214138
        %v4115 = vadd.f32 %v4083, 1.4214138
        %v4116 = vmul.f32 %v4084, %v3925
        %v4117 = vmul.f32 %v4085, %v3927
        %v4118 = vmul.f32 %v4086, %v3929
        %v4119 = vmul.f32 %v4087, %v3931
        %v4120 = vmul.f32 %v4088, %v3933
        %v4121 = vmul.f32 %v4089, %v3935
        %v4122 = vmul.f32 %v4090, %v3937
        %v4123 = vmul.f32 %v4091, %v3939
        %v4124 = vmul.f32 %v4092, %v3941
        %v4125 = vmul.f32 %v4093, %v3943
        %v4126 = vmul.f32 %v4094, %v3945
        %v4127 = vmul.f32 %v4095, %v3947
        %v4128 = vmul.f32 %v4096, %v3949
        %v4129 = vmul.f32 %v4097, %v3951
        %v4130 = vmul.f32 %v4098, %v3953
        %v4131 = vmul.f32 %v4099, %v3955
        %v4132 = vmul.f32 %v4100, %v3957
        %v4133 = vmul.f32 %v4101, %v3959
        %v4134 = vmul.f32 %v4102, %v3961
        %v4135 = vmul.f32 %v4103, %v3963
        %v4136 = vmul.f32 %v4104, %v3965
        %v4137 = vmul.f32 %v4105, %v3967
        %v4138 = vmul.f32 %v4106, %v3969
        %v4139 = vmul.f32 %v4107, %v3971
        %v4140 = vmul.f32 %v4108, %v3973
        %v4141 = vmul.f32 %v4109, %v3975
        %v4142 = vmul.f32 %v4110, %v3977
        %v4143 = vmul.f32 %v4111, %v3979
        %v4144 = vmul.f32 %v4112, %v3981
        %v4145 = vmul.f32 %v4113, %v3983
        %v4146 = vmul.f32 %v4114, %v3985
        %v4147 = vmul.f32 %v4115, %v3987
        %v4148 = vadd.f32 %v4116, -0.28449672
        %v4149 = vadd.f32 %v4117, -0.28449672
        %v4150 = vadd.f32 %v4118, -0.28449672
        %v4151 = vadd.f32 %v4119, -0.28449672
        %v4152 = vadd.f32 %v4120, -0.28449672
        %v4153 = vadd.f32 %v4121, -0.28449672
        %v4154 = vadd.f32 %v4122, -0.28449672
        %v4155 = vadd.f32 %v4123, -0.28449672
        %v4156 = vadd.f32 %v4124, -0.28449672
        %v4157 = vadd.f32 %v4125, -0.28449672
        %v4158 = vadd.f32 %v4126, -0.28449672
        %v4159 = vadd.f32 %v4127, -0.28449672
        %v4160 = vadd.f32 %v4128, -0.28449672
        %v4161 = vadd.f32 %v4129, -0.28449672
        %v4162 = vadd.f32 %v4130, -0.28449672
        %v4163 = vadd.f32 %v4131, -0.28449672
        %v4164 = vadd.f32 %v4132, -0.28449672
        %v4165 = vadd.f32 %v4133, -0.28449672
        %v4166 = vadd.f32 %v4134, -0.28449672
        %v4167 = vadd.f32 %v4135, -0.28449672
        %v4168 = vadd.f32 %v4136, -0.28449672
        %v4169 = vadd.f32 %v4137, -0.28449672
        %v4170 = vadd.f32 %v4138, -0.28449672
        %v4171 = vadd.f32 %v4139, -0.28449672
        %v4172 = vadd.f32 %v4140, -0.28449672
        %v4173 = vadd.f32 %v4141, -0.28449672
        %v4174 = vadd.f32 %v4142, -0.28449672
        %v4175 = vadd.f32 %v4143, -0.28449672
        %v4176 = vadd.f32 %v4144, -0.28449672
        %v4177 = vadd.f32 %v4145, -0.28449672
        %v4178 = vadd.f32 %v4146, -0.28449672
        %v4179 = vadd.f32 %v4147, -0.28449672
        %v4180 = vmul.f32 %v4148, %v3925
        %v4181 = vmul.f32 %v4149, %v3927
        %v4182 = vmul.f32 %v4150, %v3929
        %v4183 = vmul.f32 %v4151, %v3931
        %v4184 = vmul.f32 %v4152, %v3933
        %v4185 = vmul.f32 %v4153, %v3935
        %v4186 = vmul.f32 %v4154, %v3937
        %v4187 = vmul.f32 %v4155, %v3939
        %v4188 = vmul.f32 %v4156, %v3941
        %v4189 = vmul.f32 %v4157, %v3943
        %v4190 = vmul.f32 %v4158, %v3945
        %v4191 = vmul.f32 %v4159, %v3947
        %v4192 = vmul.f32 %v4160, %v3949
        %v4193 = vmul.f32 %v4161, %v3951
        %v4194 = vmul.f32 %v4162, %v3953
        %v4195 = vmul.f32 %v4163, %v3955
        %v4196 = vmul.f32 %v4164, %v3957
        %v4197 = vmul.f32 %v4165, %v3959
        %v4198 = vmul.f32 %v4166, %v3961
        %v4199 = vmul.f32 %v4167, %v3963
        %v4200 = vmul.f32 %v4168, %v3965
        %v4201 = vmul.f32 %v4169, %v3967
        %v4202 = vmul.f32 %v4170, %v3969
        %v4203 = vmul.f32 %v4171, %v3971
        %v4204 = vmul.f32 %v4172, %v3973
        %v4205 = vmul.f32 %v4173, %v3975
        %v4206 = vmul.f32 %v4174, %v3977
        %v4207 = vmul.f32 %v4175, %v3979
        %v4208 = vmul.f32 %v4176, %v3981
        %v4209 = vmul.f32 %v4177, %v3983
        %v4210 = vmul.f32 %v4178, %v3985
        %v4211 = vmul.f32 %v4179, %v3987
        %v4212 = vadd.f32 %v4180, 0.2548296
        %v4213 = vadd.f32 %v4181, 0.2548296
        %v4214 = vadd.f32 %v4182, 0.2548296
        %v4215 = vadd.f32 %v4183, 0.2548296
        %v4216 = vadd.f32 %v4184, 0.2548296
        %v4217 = vadd.f32 %v4185, 0.2548296
        %v4218 = vadd.f32 %v4186, 0.2548296
        %v4219 = vadd.f32 %v4187, 0.2548296
        %v4220 = vadd.f32 %v4188, 0.2548296
        %v4221 = vadd.f32 %v4189, 0.2548296
        %v4222 = vadd.f32 %v4190, 0.2548296
        %v4223 = vadd.f32 %v4191, 0.2548296
        %v4224 = vadd.f32 %v4192, 0.2548296
        %v4225 = vadd.f32 %v4193, 0.2548296
        %v4226 = vadd.f32 %v4194, 0.2548296
        %v4227 = vadd.f32 %v4195, 0.2548296
        %v4228 = vadd.f32 %v4196, 0.2548296
        %v4229 = vadd.f32 %v4197, 0.2548296
        %v4230 = vadd.f32 %v4198, 0.2548296
        %v4231 = vadd.f32 %v4199, 0.2548296
        %v4232 = vadd.f32 %v4200, 0.2548296
        %v4233 = vadd.f32 %v4201, 0.2548296
        %v4234 = vadd.f32 %v4202, 0.2548296
        %v4235 = vadd.f32 %v4203, 0.2548296
        %v4236 = vadd.f32 %v4204, 0.2548296
        %v4237 = vadd.f32 %v4205, 0.2548296
        %v4238 = vadd.f32 %v4206, 0.2548296
        %v4239 = vadd.f32 %v4207, 0.2548296
        %v4240 = vadd.f32 %v4208, 0.2548296
        %v4241 = vadd.f32 %v4209, 0.2548296
        %v4242 = vadd.f32 %v4210, 0.2548296
        %v4243 = vadd.f32 %v4211, 0.2548296
        %v4244 = vmul.f32 %v4212, %v3925
        %v4245 = vmul.f32 %v4213, %v3927
        %v4246 = vmul.f32 %v4214, %v3929
        %v4247 = vmul.f32 %v4215, %v3931
        %v4248 = vmul.f32 %v4216, %v3933
        %v4249 = vmul.f32 %v4217, %v3935
        %v4250 = vmul.f32 %v4218, %v3937
        %v4251 = vmul.f32 %v4219, %v3939
        %v4252 = vmul.f32 %v4220, %v3941
        %v4253 = vmul.f32 %v4221, %v3943
        %v4254 = vmul.f32 %v4222, %v3945
        %v4255 = vmul.f32 %v4223, %v3947
        %v4256 = vmul.f32 %v4224, %v3949
        %v4257 = vmul.f32 %v4225, %v3951
        %v4258 = vmul.f32 %v4226, %v3953
        %v4259 = vmul.f32 %v4227, %v3955
        %v4260 = vmul.f32 %v4228, %v3957
        %v4261 = vmul.f32 %v4229, %v3959
        %v4262 = vmul.f32 %v4230, %v3961
        %v4263 = vmul.f32 %v4231, %v3963
        %v4264 = vmul.f32 %v4232, %v3965
        %v4265 = vmul.f32 %v4233, %v3967
        %v4266 = vmul.f32 %v4234, %v3969
        %v4267 = vmul.f32 %v4235, %v3971
        %v4268 = vmul.f32 %v4236, %v3973
        %v4269 = vmul.f32 %v4237, %v3975
        %v4270 = vmul.f32 %v4238, %v3977
        %v4271 = vmul.f32 %v4239, %v3979
        %v4272 = vmul.f32 %v4240, %v3981
        %v4273 = vmul.f32 %v4241, %v3983
        %v4274 = vmul.f32 %v4242, %v3985
        %v4275 = vmul.f32 %v4243, %v3987
        %v4276 = vsub.f32 0.0, %v3828
        %v4277 = vsub.f32 0.0, %v3829
        %v4278 = vsub.f32 0.0, %v3830
        %v4279 = vsub.f32 0.0, %v3831
        %v4280 = vsub.f32 0.0, %v3832
        %v4281 = vsub.f32 0.0, %v3833
        %v4282 = vsub.f32 0.0, %v3834
        %v4283 = vsub.f32 0.0, %v3835
        %v4284 = vsub.f32 0.0, %v3836
        %v4285 = vsub.f32 0.0, %v3837
        %v4286 = vsub.f32 0.0, %v3838
        %v4287 = vsub.f32 0.0, %v3839
        %v4288 = vsub.f32 0.0, %v3840
        %v4289 = vsub.f32 0.0, %v3841
        %v4290 = vsub.f32 0.0, %v3842
        %v4291 = vsub.f32 0.0, %v3843
        %v4292 = vsub.f32 0.0, %v3844
        %v4293 = vsub.f32 0.0, %v3845
        %v4294 = vsub.f32 0.0, %v3846
        %v4295 = vsub.f32 0.0, %v3847
        %v4296 = vsub.f32 0.0, %v3848
        %v4297 = vsub.f32 0.0, %v3849
        %v4298 = vsub.f32 0.0, %v3850
        %v4299 = vsub.f32 0.0, %v3851
        %v4300 = vsub.f32 0.0, %v3852
        %v4301 = vsub.f32 0.0, %v3853
        %v4302 = vsub.f32 0.0, %v3854
        %v4303 = vsub.f32 0.0, %v3855
        %v4304 = vsub.f32 0.0, %v3856
        %v4305 = vsub.f32 0.0, %v3857
        %v4306 = vsub.f32 0.0, %v3858
        %v4307 = vsub.f32 0.0, %v3859
        %v4308 = vmul.f32 %v4276, %v3828
        %v4309 = vmul.f32 %v4277, %v3829
        %v4310 = vmul.f32 %v4278, %v3830
        %v4311 = vmul.f32 %v4279, %v3831
        %v4312 = vmul.f32 %v4280, %v3832
        %v4313 = vmul.f32 %v4281, %v3833
        %v4314 = vmul.f32 %v4282, %v3834
        %v4315 = vmul.f32 %v4283, %v3835
        %v4316 = vmul.f32 %v4284, %v3836
        %v4317 = vmul.f32 %v4285, %v3837
        %v4318 = vmul.f32 %v4286, %v3838
        %v4319 = vmul.f32 %v4287, %v3839
        %v4320 = vmul.f32 %v4288, %v3840
        %v4321 = vmul.f32 %v4289, %v3841
        %v4322 = vmul.f32 %v4290, %v3842
        %v4323 = vmul.f32 %v4291, %v3843
        %v4324 = vmul.f32 %v4292, %v3844
        %v4325 = vmul.f32 %v4293, %v3845
        %v4326 = vmul.f32 %v4294, %v3846
        %v4327 = vmul.f32 %v4295, %v3847
        %v4328 = vmul.f32 %v4296, %v3848
        %v4329 = vmul.f32 %v4297, %v3849
        %v4330 = vmul.f32 %v4298, %v3850
        %v4331 = vmul.f32 %v4299, %v3851
        %v4332 = vmul.f32 %v4300, %v3852
        %v4333 = vmul.f32 %v4301, %v3853
        %v4334 = vmul.f32 %v4302, %v3854
        %v4335 = vmul.f32 %v4303, %v3855
        %v4336 = vmul.f32 %v4304, %v3856
        %v4337 = vmul.f32 %v4305, %v3857
        %v4338 = vmul.f32 %v4306, %v3858
        %v4339 = vmul.f32 %v4307, %v3859
        %v4340 = vmul.f32 %v4308, 1.442695
        %v4341 = vpow.pop %v4340
        %v4342 = vmul.f32 %v4309, 1.442695
        %v4343 = vpow.pop %v4342
        %v4344 = vmul.f32 %v4310, 1.442695
        %v4345 = vpow.pop %v4344
        %v4346 = vmul.f32 %v4311, 1.442695
        %v4347 = vpow.pop %v4346
        %v4348 = vmul.f32 %v4312, 1.442695
        %v4349 = vpow.pop %v4348
        %v4350 = vmul.f32 %v4313, 1.442695
        %v4351 = vpow.pop %v4350
        %v4352 = vmul.f32 %v4314, 1.442695
        %v4353 = vpow.pop %v4352
        %v4354 = vmul.f32 %v4315, 1.442695
        %v4355 = vpow.pop %v4354
        %v4356 = vmul.f32 %v4316, 1.442695
        %v4357 = vpow.pop %v4356
        %v4358 = vmul.f32 %v4317, 1.442695
        %v4359 = vpow.pop %v4358
        %v4360 = vmul.f32 %v4318, 1.442695
        %v4361 = vpow.pop %v4360
        %v4362 = vmul.f32 %v4319, 1.442695
        %v4363 = vpow.pop %v4362
        %v4364 = vmul.f32 %v4320, 1.442695
        %v4365 = vpow.pop %v4364
        %v4366 = vmul.f32 %v4321, 1.442695
        %v4367 = vpow.pop %v4366
        %v4368 = vmul.f32 %v4322, 1.442695
        %v4369 = vpow.pop %v4368
        %v4370 = vmul.f32 %v4323, 1.442695
        %v4371 = vpow.pop %v4370
        %v4372 = vmul.f32 %v4324, 1.442695
        %v4373 = vpow.pop %v4372
        %v4374 = vmul.f32 %v4325, 1.442695
        %v4375 = vpow.pop %v4374
        %v4376 = vmul.f32 %v4326, 1.442695
        %v4377 = vpow.pop %v4376
        %v4378 = vmul.f32 %v4327, 1.442695
        %v4379 = vpow.pop %v4378
        %v4380 = vmul.f32 %v4328, 1.442695
        %v4381 = vpow.pop %v4380
        %v4382 = vmul.f32 %v4329, 1.442695
        %v4383 = vpow.pop %v4382
        %v4384 = vmul.f32 %v4330, 1.442695
        %v4385 = vpow.pop %v4384
        %v4386 = vmul.f32 %v4331, 1.442695
        %v4387 = vpow.pop %v4386
        %v4388 = vmul.f32 %v4332, 1.442695
        %v4389 = vpow.pop %v4388
        %v4390 = vmul.f32 %v4333, 1.442695
        %v4391 = vpow.pop %v4390
        %v4392 = vmul.f32 %v4334, 1.442695
        %v4393 = vpow.pop %v4392
        %v4394 = vmul.f32 %v4335, 1.442695
        %v4395 = vpow.pop %v4394
        %v4396 = vmul.f32 %v4336, 1.442695
        %v4397 = vpow.pop %v4396
        %v4398 = vmul.f32 %v4337, 1.442695
        %v4399 = vpow.pop %v4398
        %v4400 = vmul.f32 %v4338, 1.442695
        %v4401 = vpow.pop %v4400
        %v4402 = vmul.f32 %v4339, 1.442695
        %v4403 = vpow.pop %v4402
        %v4404 = vmul.f32 %v4244, %v4341
        %v4405 = vmul.f32 %v4245, %v4343
        %v4406 = vmul.f32 %v4246, %v4345
        %v4407 = vmul.f32 %v4247, %v4347
        %v4408 = vmul.f32 %v4248, %v4349
        %v4409 = vmul.f32 %v4249, %v4351
        %v4410 = vmul.f32 %v4250, %v4353
        %v4411 = vmul.f32 %v4251, %v4355
        %v4412 = vmul.f32 %v4252, %v4357
        %v4413 = vmul.f32 %v4253, %v4359
        %v4414 = vmul.f32 %v4254, %v4361
        %v4415 = vmul.f32 %v4255, %v4363
        %v4416 = vmul.f32 %v4256, %v4365
        %v4417 = vmul.f32 %v4257, %v4367
        %v4418 = vmul.f32 %v4258, %v4369
        %v4419 = vmul.f32 %v4259, %v4371
        %v4420 = vmul.f32 %v4260, %v4373
        %v4421 = vmul.f32 %v4261, %v4375
        %v4422 = vmul.f32 %v4262, %v4377
        %v4423 = vmul.f32 %v4263, %v4379
        %v4424 = vmul.f32 %v4264, %v4381
        %v4425 = vmul.f32 %v4265, %v4383
        %v4426 = vmul.f32 %v4266, %v4385
        %v4427 = vmul.f32 %v4267, %v4387
        %v4428 = vmul.f32 %v4268, %v4389
        %v4429 = vmul.f32 %v4269, %v4391
        %v4430 = vmul.f32 %v4270, %v4393
        %v4431 = vmul.f32 %v4271, %v4395
        %v4432 = vmul.f32 %v4272, %v4397
        %v4433 = vmul.f32 %v4273, %v4399
        %v4434 = vmul.f32 %v4274, %v4401
        %v4435 = vmul.f32 %v4275, %v4403
        %v4436 = vsub.f32 1.0, %v4404
        %v4437 = vsub.f32 1.0, %v4405
        %v4438 = vsub.f32 1.0, %v4406
        %v4439 = vsub.f32 1.0, %v4407
        %v4440 = vsub.f32 1.0, %v4408
        %v4441 = vsub.f32 1.0, %v4409
        %v4442 = vsub.f32 1.0, %v4410
        %v4443 = vsub.f32 1.0, %v4411
        %v4444 = vsub.f32 1.0, %v4412
        %v4445 = vsub.f32 1.0, %v4413
        %v4446 = vsub.f32 1.0, %v4414
        %v4447 = vsub.f32 1.0, %v4415
        %v4448 = vsub.f32 1.0, %v4416
        %v4449 = vsub.f32 1.0, %v4417
        %v4450 = vsub.f32 1.0, %v4418
        %v4451 = vsub.f32 1.0, %v4419
        %v4452 = vsub.f32 1.0, %v4420
        %v4453 = vsub.f32 1.0, %v4421
        %v4454 = vsub.f32 1.0, %v4422
        %v4455 = vsub.f32 1.0, %v4423
        %v4456 = vsub.f32 1.0, %v4424
        %v4457 = vsub.f32 1.0, %v4425
        %v4458 = vsub.f32 1.0, %v4426
        %v4459 = vsub.f32 1.0, %v4427
        %v4460 = vsub.f32 1.0, %v4428
        %v4461 = vsub.f32 1.0, %v4429
        %v4462 = vsub.f32 1.0, %v4430
        %v4463 = vsub.f32 1.0, %v4431
        %v4464 = vsub.f32 1.0, %v4432
        %v4465 = vsub.f32 1.0, %v4433
        %v4466 = vsub.f32 1.0, %v4434
        %v4467 = vsub.f32 1.0, %v4435
        %vm4468 = vcmp.ge.f32.partialorder %v3796, 0.0
        %vm4469 = vcmp.ge.f32.partialorder %v3797, 0.0
        %vm4470 = vcmp.ge.f32.partialorder %v3798, 0.0
        %vm4471 = vcmp.ge.f32.partialorder %v3799, 0.0
        %vm4472 = vcmp.ge.f32.partialorder %v3800, 0.0
        %vm4473 = vcmp.ge.f32.partialorder %v3801, 0.0
        %vm4474 = vcmp.ge.f32.partialorder %v3802, 0.0
        %vm4475 = vcmp.ge.f32.partialorder %v3803, 0.0
        %vm4476 = vcmp.ge.f32.partialorder %v3804, 0.0
        %vm4477 = vcmp.ge.f32.partialorder %v3805, 0.0
        %vm4478 = vcmp.ge.f32.partialorder %v3806, 0.0
        %vm4479 = vcmp.ge.f32.partialorder %v3807, 0.0
        %vm4480 = vcmp.ge.f32.partialorder %v3808, 0.0
        %vm4481 = vcmp.ge.f32.partialorder %v3809, 0.0
        %vm4482 = vcmp.ge.f32.partialorder %v3810, 0.0
        %vm4483 = vcmp.ge.f32.partialorder %v3811, 0.0
        %vm4484 = vcmp.ge.f32.partialorder %v3812, 0.0
        %vm4485 = vcmp.ge.f32.partialorder %v3813, 0.0
        %vm4486 = vcmp.ge.f32.partialorder %v3814, 0.0
        %vm4487 = vcmp.ge.f32.partialorder %v3815, 0.0
        %vm4488 = vcmp.ge.f32.partialorder %v3816, 0.0
        %vm4489 = vcmp.ge.f32.partialorder %v3817, 0.0
        %vm4490 = vcmp.ge.f32.partialorder %v3818, 0.0
        %vm4491 = vcmp.ge.f32.partialorder %v3819, 0.0
        %vm4492 = vcmp.ge.f32.partialorder %v3820, 0.0
        %vm4493 = vcmp.ge.f32.partialorder %v3821, 0.0
        %vm4494 = vcmp.ge.f32.partialorder %v3822, 0.0
        %vm4495 = vcmp.ge.f32.partialorder %v3823, 0.0
        %vm4496 = vcmp.ge.f32.partialorder %v3824, 0.0
        %vm4497 = vcmp.ge.f32.partialorder %v3825, 0.0
        %vm4498 = vcmp.ge.f32.partialorder %v3826, 0.0
        %vm4499 = vcmp.ge.f32.partialorder %v3827, 0.0
        %v4500 = vsub.f32 0.0, %v4436
        %v4501 = vsub.f32 0.0, %v4437
        %v4502 = vsub.f32 0.0, %v4438
        %v4503 = vsub.f32 0.0, %v4439
        %v4504 = vsub.f32 0.0, %v4440
        %v4505 = vsub.f32 0.0, %v4441
        %v4506 = vsub.f32 0.0, %v4442
        %v4507 = vsub.f32 0.0, %v4443
        %v4508 = vsub.f32 0.0, %v4444
        %v4509 = vsub.f32 0.0, %v4445
        %v4510 = vsub.f32 0.0, %v4446
        %v4511 = vsub.f32 0.0, %v4447
        %v4512 = vsub.f32 0.0, %v4448
        %v4513 = vsub.f32 0.0, %v4449
        %v4514 = vsub.f32 0.0, %v4450
        %v4515 = vsub.f32 0.0, %v4451
        %v4516 = vsub.f32 0.0, %v4452
        %v4517 = vsub.f32 0.0, %v4453
        %v4518 = vsub.f32 0.0, %v4454
        %v4519 = vsub.f32 0.0, %v4455
        %v4520 = vsub.f32 0.0, %v4456
        %v4521 = vsub.f32 0.0, %v4457
        %v4522 = vsub.f32 0.0, %v4458
        %v4523 = vsub.f32 0.0, %v4459
        %v4524 = vsub.f32 0.0, %v4460
        %v4525 = vsub.f32 0.0, %v4461
        %v4526 = vsub.f32 0.0, %v4462
        %v4527 = vsub.f32 0.0, %v4463
        %v4528 = vsub.f32 0.0, %v4464
        %v4529 = vsub.f32 0.0, %v4465
        %v4530 = vsub.f32 0.0, %v4466
        %v4531 = vsub.f32 0.0, %v4467
        %v4532 = vsel %vm4468, %v4436, %v4500
        %v4533 = vsel %vm4469, %v4437, %v4501
        %v4534 = vsel %vm4470, %v4438, %v4502
        %v4535 = vsel %vm4471, %v4439, %v4503
        %v4536 = vsel %vm4472, %v4440, %v4504
        %v4537 = vsel %vm4473, %v4441, %v4505
        %v4538 = vsel %vm4474, %v4442, %v4506
        %v4539 = vsel %vm4475, %v4443, %v4507
        %v4540 = vsel %vm4476, %v4444, %v4508
        %v4541 = vsel %vm4477, %v4445, %v4509
        %v4542 = vsel %vm4478, %v4446, %v4510
        %v4543 = vsel %vm4479, %v4447, %v4511
        %v4544 = vsel %vm4480, %v4448, %v4512
        %v4545 = vsel %vm4481, %v4449, %v4513
        %v4546 = vsel %vm4482, %v4450, %v4514
        %v4547 = vsel %vm4483, %v4451, %v4515
        %v4548 = vsel %vm4484, %v4452, %v4516
        %v4549 = vsel %vm4485, %v4453, %v4517
        %v4550 = vsel %vm4486, %v4454, %v4518
        %v4551 = vsel %vm4487, %v4455, %v4519
        %v4552 = vsel %vm4488, %v4456, %v4520
        %v4553 = vsel %vm4489, %v4457, %v4521
        %v4554 = vsel %vm4490, %v4458, %v4522
        %v4555 = vsel %vm4491, %v4459, %v4523
        %v4556 = vsel %vm4492, %v4460, %v4524
        %v4557 = vsel %vm4493, %v4461, %v4525
        %v4558 = vsel %vm4494, %v4462, %v4526
        %v4559 = vsel %vm4495, %v4463, %v4527
        %v4560 = vsel %vm4496, %v4464, %v4528
        %v4561 = vsel %vm4497, %v4465, %v4529
        %v4562 = vsel %vm4498, %v4466, %v4530
        %v4563 = vsel %vm4499, %v4467, %v4531
        %v4564 = vadd.f32 %v4532, 1.0
        %v4565 = vadd.f32 %v4533, 1.0
        %v4566 = vadd.f32 %v4534, 1.0
        %v4567 = vadd.f32 %v4535, 1.0
        %v4568 = vadd.f32 %v4536, 1.0
        %v4569 = vadd.f32 %v4537, 1.0
        %v4570 = vadd.f32 %v4538, 1.0
        %v4571 = vadd.f32 %v4539, 1.0
        %v4572 = vadd.f32 %v4540, 1.0
        %v4573 = vadd.f32 %v4541, 1.0
        %v4574 = vadd.f32 %v4542, 1.0
        %v4575 = vadd.f32 %v4543, 1.0
        %v4576 = vadd.f32 %v4544, 1.0
        %v4577 = vadd.f32 %v4545, 1.0
        %v4578 = vadd.f32 %v4546, 1.0
        %v4579 = vadd.f32 %v4547, 1.0
        %v4580 = vadd.f32 %v4548, 1.0
        %v4581 = vadd.f32 %v4549, 1.0
        %v4582 = vadd.f32 %v4550, 1.0
        %v4583 = vadd.f32 %v4551, 1.0
        %v4584 = vadd.f32 %v4552, 1.0
        %v4585 = vadd.f32 %v4553, 1.0
        %v4586 = vadd.f32 %v4554, 1.0
        %v4587 = vadd.f32 %v4555, 1.0
        %v4588 = vadd.f32 %v4556, 1.0
        %v4589 = vadd.f32 %v4557, 1.0
        %v4590 = vadd.f32 %v4558, 1.0
        %v4591 = vadd.f32 %v4559, 1.0
        %v4592 = vadd.f32 %v4560, 1.0
        %v4593 = vadd.f32 %v4561, 1.0
        %v4594 = vadd.f32 %v4562, 1.0
        %v4595 = vadd.f32 %v4563, 1.0
        %v4596 = vmul.f32 %v3764, %v4564
        %v4597 = vmul.f32 %v3765, %v4565
        %v4598 = vmul.f32 %v3766, %v4566
        %v4599 = vmul.f32 %v3767, %v4567
        %v4600 = vmul.f32 %v3768, %v4568
        %v4601 = vmul.f32 %v3769, %v4569
        %v4602 = vmul.f32 %v3770, %v4570
        %v4603 = vmul.f32 %v3771, %v4571
        %v4604 = vmul.f32 %v3772, %v4572
        %v4605 = vmul.f32 %v3773, %v4573
        %v4606 = vmul.f32 %v3774, %v4574
        %v4607 = vmul.f32 %v3775, %v4575
        %v4608 = vmul.f32 %v3776, %v4576
        %v4609 = vmul.f32 %v3777, %v4577
        %v4610 = vmul.f32 %v3778, %v4578
        %v4611 = vmul.f32 %v3779, %v4579
        %v4612 = vmul.f32 %v3780, %v4580
        %v4613 = vmul.f32 %v3781, %v4581
        %v4614 = vmul.f32 %v3782, %v4582
        %v4615 = vmul.f32 %v3783, %v4583
        %v4616 = vmul.f32 %v3784, %v4584
        %v4617 = vmul.f32 %v3785, %v4585
        %v4618 = vmul.f32 %v3786, %v4586
        %v4619 = vmul.f32 %v3787, %v4587
        %v4620 = vmul.f32 %v3788, %v4588
        %v4621 = vmul.f32 %v3789, %v4589
        %v4622 = vmul.f32 %v3790, %v4590
        %v4623 = vmul.f32 %v3791, %v4591
        %v4624 = vmul.f32 %v3792, %v4592
        %v4625 = vmul.f32 %v3793, %v4593
        %v4626 = vmul.f32 %v3794, %v4594
        %v4627 = vmul.f32 %v3795, %v4595
        %v4628 = vpack.c.bf16 %v4600, %v4596
        %v4629 = vpack.c.bf16 %v4601, %v4597
        %v4630 = vpack.c.bf16 %v4602, %v4598
        %v4631 = vpack.c.bf16 %v4603, %v4599
        %v4632 = vpack.c.bf16 %v4608, %v4604
        %v4633 = vpack.c.bf16 %v4609, %v4605
        %v4634 = vpack.c.bf16 %v4610, %v4606
        %v4635 = vpack.c.bf16 %v4611, %v4607
        %v4636 = vpack.c.bf16 %v4616, %v4612
        %v4637 = vpack.c.bf16 %v4617, %v4613
        %v4638 = vpack.c.bf16 %v4618, %v4614
        %v4639 = vpack.c.bf16 %v4619, %v4615
        %v4640 = vpack.c.bf16 %v4624, %v4620
        %v4641 = vpack.c.bf16 %v4625, %v4621
        %v4642 = vpack.c.bf16 %v4626, %v4622
        %v4643 = vpack.c.bf16 %v4627, %v4623
        %v4644 = vld [vmem:[#allocation20] sm:$0xf]
        %v4645 = vld [vmem:[#allocation20 + $0x4] sm:$0xf]
        %v4646 = vld [vmem:[#allocation20 + $0x8] sm:$0xf]
        %v4647 = vld [vmem:[#allocation20 + $0xc] sm:$0xf]
        %v4648 = vld [vmem:[#allocation20 + $0x10] sm:$0xf]
        %v4649 = vld [vmem:[#allocation20 + $0x14] sm:$0xf]
        %v4650 = vld [vmem:[#allocation20 + $0x18] sm:$0xf]
        %v4651 = vld [vmem:[#allocation20 + $0x1c] sm:$0xf]
        %v4652 = vld [vmem:[#allocation20 + $0x20] sm:$0xf]
        %v4653 = vld [vmem:[#allocation20 + $0x24] sm:$0xf]
        %v4654 = vld [vmem:[#allocation20 + $0x28] sm:$0xf]
        %v4655 = vld [vmem:[#allocation20 + $0x2c] sm:$0xf]
        %v4656 = vld [vmem:[#allocation20 + $0x30] sm:$0xf]
        %v4657 = vld [vmem:[#allocation20 + $0x34] sm:$0xf]
        %v4658 = vld [vmem:[#allocation20 + $0x38] sm:$0xf]
        %v4659 = vld [vmem:[#allocation20 + $0x3c] sm:$0xf]
        %v4660 = vld [vmem:[#allocation20 + $0x40] sm:$0xf]
        %v4661 = vld [vmem:[#allocation20 + $0x44] sm:$0xf]
        %v4662 = vld [vmem:[#allocation20 + $0x48] sm:$0xf]
        %v4663 = vld [vmem:[#allocation20 + $0x4c] sm:$0xf]
        %v4664 = vld [vmem:[#allocation20 + $0x50] sm:$0xf]
        %v4665 = vld [vmem:[#allocation20 + $0x54] sm:$0xf]
        %v4666 = vld [vmem:[#allocation20 + $0x58] sm:$0xf]
        %v4667 = vld [vmem:[#allocation20 + $0x5c] sm:$0xf]
        %v4668 = vld [vmem:[#allocation20 + $0x60] sm:$0xf]
        %v4669 = vld [vmem:[#allocation20 + $0x64] sm:$0xf]
        %v4670 = vld [vmem:[#allocation20 + $0x68] sm:$0xf]
        %v4671 = vld [vmem:[#allocation20 + $0x6c] sm:$0xf]
        %v4672 = vld [vmem:[#allocation20 + $0x70] sm:$0xf]
        %v4673 = vld [vmem:[#allocation20 + $0x74] sm:$0xf]
        %v4674 = vld [vmem:[#allocation20 + $0x78] sm:$0xf]
        %v4675 = vld [vmem:[#allocation20 + $0x7c] sm:$0xf]
        %v4676 = vld [vmem:[#allocation20 + $0x80] sm:$0xf]
        %v4677 = vld [vmem:[#allocation20 + $0x84] sm:$0xf]
        %v4678 = vld [vmem:[#allocation20 + $0x88] sm:$0xf]
        %v4679 = vld [vmem:[#allocation20 + $0x8c] sm:$0xf]
        %v4680 = vld [vmem:[#allocation20 + $0x90] sm:$0xf]
        %v4681 = vld [vmem:[#allocation20 + $0x94] sm:$0xf]
        %v4682 = vld [vmem:[#allocation20 + $0x98] sm:$0xf]
        %v4683 = vld [vmem:[#allocation20 + $0x9c] sm:$0xf]
        %v4684 = vld [vmem:[#allocation20 + $0xa0] sm:$0xf]
        %v4685 = vld [vmem:[#allocation20 + $0xa4] sm:$0xf]
        %v4686 = vld [vmem:[#allocation20 + $0xa8] sm:$0xf]
        %v4687 = vld [vmem:[#allocation20 + $0xac] sm:$0xf]
        %v4688 = vld [vmem:[#allocation20 + $0xb0] sm:$0xf]
        %v4689 = vld [vmem:[#allocation20 + $0xb4] sm:$0xf]
        %v4690 = vld [vmem:[#allocation20 + $0xb8] sm:$0xf]
        %v4691 = vld [vmem:[#allocation20 + $0xbc] sm:$0xf]
        %v4692 = vld [vmem:[#allocation20 + $0xc0] sm:$0xf]
        %v4693 = vld [vmem:[#allocation20 + $0xc4] sm:$0xf]
        %v4694 = vld [vmem:[#allocation20 + $0xc8] sm:$0xf]
        %v4695 = vld [vmem:[#allocation20 + $0xcc] sm:$0xf]
        %v4696 = vld [vmem:[#allocation20 + $0xd0] sm:$0xf]
        %v4697 = vld [vmem:[#allocation20 + $0xd4] sm:$0xf]
        %v4698 = vld [vmem:[#allocation20 + $0xd8] sm:$0xf]
        %v4699 = vld [vmem:[#allocation20 + $0xdc] sm:$0xf]
        %v4700 = vld [vmem:[#allocation20 + $0xe0] sm:$0xf]
        %v4701 = vld [vmem:[#allocation20 + $0xe4] sm:$0xf]
        %v4702 = vld [vmem:[#allocation20 + $0xe8] sm:$0xf]
        %v4703 = vld [vmem:[#allocation20 + $0xec] sm:$0xf]
        %v4704 = vld [vmem:[#allocation20 + $0xf0] sm:$0xf]
        %v4705 = vld [vmem:[#allocation20 + $0xf4] sm:$0xf]
        %v4706 = vld [vmem:[#allocation20 + $0xf8] sm:$0xf]
        %v4707 = vld [vmem:[#allocation20 + $0xfc] sm:$0xf]
        %v4708 = vld [vmem:[#allocation22] sm:$0x1]
        %v4710 = vlaneseq
        %v4711 = vshrl.u32 %v4710, 7
        %v4712 = vsub.s32 0, %v4711
        %v4713 = vrot.slane %v4708, %v4712
        %v4779 = vunpack.c.l.b16 %v4644
        %v4780 = vunpack.c.l.b16 %v4645
        %v4781 = vunpack.c.l.b16 %v4646
        %v4782 = vunpack.c.l.b16 %v4647
        %v4783 = vunpack.c.l.b16 %v4648
        %v4784 = vunpack.c.l.b16 %v4649
        %v4785 = vunpack.c.l.b16 %v4650
        %v4786 = vunpack.c.l.b16 %v4651
        %v4787 = vunpack.c.l.b16 %v4652
        %v4788 = vunpack.c.l.b16 %v4653
        %v4789 = vunpack.c.l.b16 %v4654
        %v4790 = vunpack.c.l.b16 %v4655
        %v4791 = vunpack.c.l.b16 %v4656
        %v4792 = vunpack.c.l.b16 %v4657
        %v4793 = vunpack.c.l.b16 %v4658
        %v4794 = vunpack.c.l.b16 %v4659
        %v4795 = vunpack.c.l.b16 %v4660
        %v4796 = vunpack.c.l.b16 %v4661
        %v4797 = vunpack.c.l.b16 %v4662
        %v4798 = vunpack.c.l.b16 %v4663
        %v4799 = vunpack.c.l.b16 %v4664
        %v4800 = vunpack.c.l.b16 %v4665
        %v4801 = vunpack.c.l.b16 %v4666
        %v4802 = vunpack.c.l.b16 %v4667
        %v4803 = vunpack.c.l.b16 %v4668
        %v4804 = vunpack.c.l.b16 %v4669
        %v4805 = vunpack.c.l.b16 %v4670
        %v4806 = vunpack.c.l.b16 %v4671
        %v4807 = vunpack.c.l.b16 %v4672
        %v4808 = vunpack.c.l.b16 %v4673
        %v4809 = vunpack.c.l.b16 %v4674
        %v4810 = vunpack.c.l.b16 %v4675
        %v4811 = vunpack.c.l.b16 %v4676
        %v4812 = vunpack.c.l.b16 %v4677
        %v4813 = vunpack.c.l.b16 %v4678
        %v4814 = vunpack.c.l.b16 %v4679
        %v4815 = vunpack.c.l.b16 %v4680
        %v4816 = vunpack.c.l.b16 %v4681
        %v4817 = vunpack.c.l.b16 %v4682
        %v4818 = vunpack.c.l.b16 %v4683
        %v4819 = vunpack.c.l.b16 %v4684
        %v4820 = vunpack.c.l.b16 %v4685
        %v4821 = vunpack.c.l.b16 %v4686
        %v4822 = vunpack.c.l.b16 %v4687
        %v4823 = vunpack.c.l.b16 %v4688
        %v4824 = vunpack.c.l.b16 %v4689
        %v4825 = vunpack.c.l.b16 %v4690
        %v4826 = vunpack.c.l.b16 %v4691
        %v4827 = vunpack.c.l.b16 %v4692
        %v4828 = vunpack.c.l.b16 %v4693
        %v4829 = vunpack.c.l.b16 %v4694
        %v4830 = vunpack.c.l.b16 %v4695
        %v4831 = vunpack.c.l.b16 %v4696
        %v4832 = vunpack.c.l.b16 %v4697
        %v4833 = vunpack.c.l.b16 %v4698
        %v4834 = vunpack.c.l.b16 %v4699
        %v4835 = vunpack.c.l.b16 %v4700
        %v4836 = vunpack.c.l.b16 %v4701
        %v4837 = vunpack.c.l.b16 %v4702
        %v4838 = vunpack.c.l.b16 %v4703
        %v4839 = vunpack.c.l.b16 %v4704
        %v4840 = vunpack.c.l.b16 %v4705
        %v4841 = vunpack.c.l.b16 %v4706
        %v4842 = vunpack.c.l.b16 %v4707
        %v4843 = vpack.c.b16 %v4780, %v4779
        %v4844 = vpack.c.b16 %v4782, %v4781
        %v4845 = vpack.c.b16 %v4784, %v4783
        %v4846 = vpack.c.b16 %v4786, %v4785
        %v4847 = vpack.c.b16 %v4788, %v4787
        %v4848 = vpack.c.b16 %v4790, %v4789
        %v4849 = vpack.c.b16 %v4792, %v4791
        %v4850 = vpack.c.b16 %v4794, %v4793
        %v4851 = vpack.c.b16 %v4796, %v4795
        %v4852 = vpack.c.b16 %v4798, %v4797
        %v4853 = vpack.c.b16 %v4800, %v4799
        %v4854 = vpack.c.b16 %v4802, %v4801
        %v4855 = vpack.c.b16 %v4804, %v4803
        %v4856 = vpack.c.b16 %v4806, %v4805
        %v4857 = vpack.c.b16 %v4808, %v4807
        %v4858 = vpack.c.b16 %v4810, %v4809
        %v4859 = vpack.c.b16 %v4812, %v4811
        %v4860 = vpack.c.b16 %v4814, %v4813
        %v4861 = vpack.c.b16 %v4816, %v4815
        %v4862 = vpack.c.b16 %v4818, %v4817
        %v4863 = vpack.c.b16 %v4820, %v4819
        %v4864 = vpack.c.b16 %v4822, %v4821
        %v4865 = vpack.c.b16 %v4824, %v4823
        %v4866 = vpack.c.b16 %v4826, %v4825
        %v4867 = vpack.c.b16 %v4828, %v4827
        %v4868 = vpack.c.b16 %v4830, %v4829
        %v4869 = vpack.c.b16 %v4832, %v4831
        %v4870 = vpack.c.b16 %v4834, %v4833
        %v4871 = vpack.c.b16 %v4836, %v4835
        %v4872 = vpack.c.b16 %v4838, %v4837
        %v4873 = vpack.c.b16 %v4840, %v4839
        %v4874 = vpack.c.b16 %v4842, %v4841
        %4907 = vmatprep.subr.bf16.mxu0 0
        %4908 = vmatpush1.bf16.msra.mxu0 %v4843
        %4909 = vmatprep.subr.bf16.mxu0 0
        %4910 = vmatpush1.bf16.msra.mxu0 %v4844
        %4911 = vmatprep.subr.bf16.mxu0 0
        %4912 = vmatpush1.bf16.msra.mxu0 %v4845
        %4913 = vmatprep.subr.bf16.mxu0 0
        %4914 = vmatpush1.bf16.msra.mxu0 %v4846
        %4915 = vmatprep.subr.bf16.mxu0 0
        %4916 = vmatpush1.bf16.msra.mxu0 %v4847
        %4917 = vmatprep.subr.bf16.mxu0 0
        %4918 = vmatpush1.bf16.msra.mxu0 %v4848
        %4919 = vmatprep.subr.bf16.mxu0 0
        %4920 = vmatpush1.bf16.msra.mxu0 %v4849
        %4921 = vmatprep.subr.bf16.mxu0 0
        %4922 = vmatpush1.bf16.msra.mxu0 %v4850
        %4923 = vmatprep.subr.bf16.mxu0 0
        %4924 = vmatpush1.bf16.msra.mxu0 %v4851
        %4925 = vmatprep.subr.bf16.mxu0 0
        %4926 = vmatpush1.bf16.msra.mxu0 %v4852
        %4927 = vmatprep.subr.bf16.mxu0 0
        %4928 = vmatpush1.bf16.msra.mxu0 %v4853
        %4929 = vmatprep.subr.bf16.mxu0 0
        %4930 = vmatpush1.bf16.msra.mxu0 %v4854
        %4931 = vmatprep.subr.bf16.mxu0 0
        %4932 = vmatpush1.bf16.msra.mxu0 %v4855
        %4933 = vmatprep.subr.bf16.mxu0 0
        %4934 = vmatpush1.bf16.msra.mxu0 %v4856
        %4935 = vmatprep.subr.bf16.mxu0 0
        %4936 = vmatpush1.bf16.msra.mxu0 %v4857
        %4937 = vmatprep.subr.bf16.mxu0 0
        %4938 = vmatpush1.bf16.msra.mxu0 %v4858
        %4939 = vmatprep.mubr.bf16.mxu0 %v4629
        %4940 = vmatmul.mubr.bf16.gmra.mrb[0].mxu0 %v4628
        %v4941 = vpop.f32.mrb[0].mxu0
        %v4942 = vadd.f32 %v4713, %v4941
        %v4943 = vpop.f32.mrb[0].mxu0
        %v4944 = vpop.f32.mrb[0].mxu0
        %v4945 = vadd.f32 %v4713, %v4944
        %v4946 = vpop.f32.mrb[0].mxu0
        %4947 = vmatprep.mubr.bf16.mxu0 %v4633
        %4948 = vmatmul.mubr.bf16.gmra.mrb[0].mxu0 %v4632
        %v4949 = vpop.f32.mrb[0].mxu0
        %v4950 = vadd.f32 %v4713, %v4949
        %v4951 = vpop.f32.mrb[0].mxu0
        %v4952 = vpop.f32.mrb[0].mxu0
        %v4953 = vadd.f32 %v4713, %v4952
        %v4954 = vpop.f32.mrb[0].mxu0
        %4955 = vmatprep.mubr.bf16.mxu0 %v4637
        %4956 = vmatmul.mubr.bf16.gmra.mrb[0].mxu0 %v4636
        %v4957 = vpop.f32.mrb[0].mxu0
        %v4958 = vadd.f32 %v4713, %v4957
        %v4959 = vpop.f32.mrb[0].mxu0
        %v4960 = vpop.f32.mrb[0].mxu0
        %v4961 = vadd.f32 %v4713, %v4960
        %v4962 = vpop.f32.mrb[0].mxu0
        %4963 = vmatprep.mubr.bf16.mxu0 %v4641
        %4964 = vmatmul.mubr.bf16.gmra.mrb[0].mxu0 %v4640
        %v4965 = vpop.f32.mrb[0].mxu0
        %v4966 = vadd.f32 %v4713, %v4965
        %v4967 = vpop.f32.mrb[0].mxu0
        %v4968 = vpop.f32.mrb[0].mxu0
        %v4969 = vadd.f32 %v4713, %v4968
        %v4970 = vpop.f32.mrb[0].mxu0
        %4971 = vdwg.mxu0
        %4972 = vmatprep.subr.bf16.mxu0 0
        %4973 = vmatpush1.bf16.msra.mxu0 %v4859
        %4974 = vmatprep.subr.bf16.mxu0 0
        %4975 = vmatpush1.bf16.msra.mxu0 %v4860
        %4976 = vmatprep.subr.bf16.mxu0 0
        %4977 = vmatpush1.bf16.msra.mxu0 %v4861
        %4978 = vmatprep.subr.bf16.mxu0 0
        %4979 = vmatpush1.bf16.msra.mxu0 %v4862
        %4980 = vmatprep.subr.bf16.mxu0 0
        %4981 = vmatpush1.bf16.msra.mxu0 %v4863
        %4982 = vmatprep.subr.bf16.mxu0 0
        %4983 = vmatpush1.bf16.msra.mxu0 %v4864
        %4984 = vmatprep.subr.bf16.mxu0 0
        %4985 = vmatpush1.bf16.msra.mxu0 %v4865
        %4986 = vmatprep.subr.bf16.mxu0 0
        %4987 = vmatpush1.bf16.msra.mxu0 %v4866
        %4988 = vmatprep.subr.bf16.mxu0 0
        %4989 = vmatpush1.bf16.msra.mxu0 %v4867
        %4990 = vmatprep.subr.bf16.mxu0 0
        %4991 = vmatpush1.bf16.msra.mxu0 %v4868
        %4992 = vmatprep.subr.bf16.mxu0 0
        %4993 = vmatpush1.bf16.msra.mxu0 %v4869
        %4994 = vmatprep.subr.bf16.mxu0 0
        %4995 = vmatpush1.bf16.msra.mxu0 %v4870
        %4996 = vmatprep.subr.bf16.mxu0 0
        %4997 = vmatpush1.bf16.msra.mxu0 %v4871
        %4998 = vmatprep.subr.bf16.mxu0 0
        %4999 = vmatpush1.bf16.msra.mxu0 %v4872
        %5000 = vmatprep.subr.bf16.mxu0 0
        %5001 = vmatpush1.bf16.msra.mxu0 %v4873
        %5002 = vmatprep.subr.bf16.mxu0 0
        %5003 = vmatpush1.bf16.msra.mxu0 %v4874
        %5004 = vmatprep.mubr.bf16.mxu0 %v4631
        %5005 = vmatmul.mubr.bf16.gmra.mrb[0].mxu0 %v4630
        %v5006 = vpop.f32.mrb[0].mxu0
        %v5007 = vadd.f32 %v4942, %v5006
        %v5008 = vpop.f32.mrb[0].mxu0
        %v5009 = vpop.f32.mrb[0].mxu0
        %v5010 = vadd.f32 %v4945, %v5009
        %v5011 = vpop.f32.mrb[0].mxu0
        %5012 = vmatprep.mubr.bf16.mxu0 %v4635
        %5013 = vmatmul.mubr.bf16.gmra.mrb[0].mxu0 %v4634
        %v5014 = vpop.f32.mrb[0].mxu0
        %v5015 = vadd.f32 %v4950, %v5014
        %v5016 = vpop.f32.mrb[0].mxu0
        %v5017 = vpop.f32.mrb[0].mxu0
        %v5018 = vadd.f32 %v4953, %v5017
        %v5019 = vpop.f32.mrb[0].mxu0
        %5020 = vmatprep.mubr.bf16.mxu0 %v4639
        %5021 = vmatmul.mubr.bf16.gmra.mrb[0].mxu0 %v4638
        %v5022 = vpop.f32.mrb[0].mxu0
        %v5023 = vadd.f32 %v4958, %v5022
        %v5024 = vpop.f32.mrb[0].mxu0
        %v5025 = vpop.f32.mrb[0].mxu0
        %v5026 = vadd.f32 %v4961, %v5025
        %v5027 = vpop.f32.mrb[0].mxu0
        %5028 = vmatprep.mubr.bf16.mxu0 %v4643
        %5029 = vmatmul.mubr.bf16.gmra.mrb[0].mxu0 %v4642
        %v5030 = vpop.f32.mrb[0].mxu0
        %v5031 = vadd.f32 %v4966, %v5030
        %v5032 = vpop.f32.mrb[0].mxu0
        %v5033 = vpop.f32.mrb[0].mxu0
        %v5034 = vadd.f32 %v4969, %v5033
        %v5035 = vpop.f32.mrb[0].mxu0
        %5036 = vdwg.mxu0
        %v5037 = vadd.f32 %v3274, %v5007
        %v5038 = vadd.f32 %v3275, %v5010
        %v5039 = vadd.f32 %v3276, %v5015
        %v5040 = vadd.f32 %v3277, %v5018
        %v5041 = vadd.f32 %v3278, %v5023
        %v5042 = vadd.f32 %v3279, %v5026
        %v5043 = vadd.f32 %v3280, %v5031
        %v5044 = vadd.f32 %v3281, %v5034
        %5045 = vst [vmem:[%s617] sm:$0xff] %v5037
        %5046 = vst [vmem:[%s617 + $0x8] sm:$0xff] %v5038
        %5047 = vst [vmem:[%s617 + $0x10] sm:$0xff] %v5039
        %5048 = vst [vmem:[%s617 + $0x18] sm:$0xff] %v5040
        %5049 = vst [vmem:[%s617 + $0x20] sm:$0xff] %v5041
        %5050 = vst [vmem:[%s617 + $0x28] sm:$0xff] %v5042
        %5051 = vst [vmem:[%s617 + $0x30] sm:$0xff] %v5043
        %5052 = vst [vmem:[%s617 + $0x38] sm:$0xff] %v5044
        %s5053 = sand.u32 %s322, 1
        %s5054 = scalar_lea.sflag [#allocation4], %s5053
        %s5055 = sand.u32 %s322, 1
        %s5056 = smul.addr %s5055, 64
        %s5057 = scalar_lea.vmem [#allocation23], %s5056
        // Predicated region
        $region125: #{tpu_custom_call.1} parent=71 // pred_check
          %p5058 = pneg %p332
        $region126: #{tpu_custom_call.1} parent=71 // pred_check_branch
          %5060 = sbr.rel (%p5058) target = $region128
        $region127: #{tpu_custom_call.1} parent=71 // pred_region
          %s5061 = smul.u32 4, %s36
          %s5063 = ssub.s32 1024, 1024
          %5064 = vsyncadd %s5054, %s5063
          %s5065 = smul.addr %s5061, 2
          %s5066 = smul.addr %s5065, 128
          %s5067 = scalar_lea.hbm %s13, %s5066
          %s5068 = sshll.u32 %s5057, 4
          %s5069 = int_to_ptr.vmem [resolvable:$true] %s5068
          %5074 = dma.vmem_to_hbm [thread:$0]  %s5069, 1024, %s5067, %s5054, 128, 128, 8
        $region128: #{tpu_custom_call.1} parent=71 // pred_fallthru
          _
      $region72: #{tpu_custom_call.1} parent=5 // pred_fallthru
        _
      %p5075 = scmp.le.s32.totalorder 2, %s31
      // Predicated region
      $region129: #{tpu_custom_call.1} parent=5 // pred_check
        %p5076 = pneg %p5075
      $region130: #{tpu_custom_call.1} parent=5 // pred_check_branch
        %5078 = sbr.rel (%p5076) target = $region132
      $region131: #{tpu_custom_call.1} parent=5 // pred_region
        %s5079 = ssub.s32 %s31, 2
        // Predicated region
        $region133: #{tpu_custom_call.1} parent=131 // pred_check
          %p5080 = pneg %p338
        $region134: #{tpu_custom_call.1} parent=131 // pred_check_branch
          %5082 = sbr.rel (%p5080) target = $region136
        $region135: #{tpu_custom_call.1} parent=131 // pred_region
          %s5083 = sand.u32 %s323, 1
          %s5084 = scalar_lea.sflag [#allocation4], %s5083
          %s5085 = sand.u32 %s323, 1
          %s5086 = smul.addr %s5085, 64
          %s5087 = scalar_lea.vmem [#allocation23], %s5086
          %5088 = dma.done %s5084, 1024
        $region136: #{tpu_custom_call.1} parent=131 // pred_fallthru
          _
      $region132: #{tpu_custom_call.1} parent=5 // pred_fallthru
        _
    $region6: #{tpu_custom_call.1} parent=1 // loop_footer
      %s35 = sadd.s32 1, %s31
    $region7: #{tpu_custom_call.1} parent=1 // loop_footer_branch
      %30 = sbr.rel target = $region3
    $region8: #{tpu_custom_call.1} parent=1 // loop_exit
      _
    %5089 = vsyncpa [#allocation3], 1
    %s5090 = scalar_lea.sflag [#allocation3], 1
    %5091 = vsyncpa %s5090, 1
    %5092 = vsyncpa [#allocation6], 1
    %5093 = vsyncpa [#allocation9], 1
    %5094 = vsyncpa [#allocation12], 1
    %5095 = vsyncpa [#allocation15], 1
    %5096 = vsyncpa [#allocation18], 1
    %5097 = vsyncpa [#allocation21], 1
    %5098 = vsyncpa [#allocation4], 1
    %s5099 = scalar_lea.sflag [#allocation4], 1
    %5100 = vsyncpa %s5099, 1

</llo_original>
